<compile_context>
chip_gen: v6e
topology: v6e:2x2x1
jax: 0.10.0
libtpu: 0.0.40
codegen_flags: <defaults>
</compile_context>

<pallas_src>
import jax
import jax.numpy as jnp
from jax.experimental import pallas as pl
from jax.experimental.pallas import tpu as pltpu


def _gru_ff_kernel(x_ref,                                  # (B, T, F)
                   wir_ref, wiz_ref, win_ref,              # (F, H) each
                   whr_ref, whz_ref, whn_ref,              # (H, H) each
                   br_ref, bz_ref, bni_ref, bnh_ref,       # (1, H) each
                   w1_ref, b1_ref, w2_ref, b2_ref,         # (H,FFH),(1,FFH),(FFH,O),(1,O)
                   out_ref,                                # (B, T, O)
                   h_all_ref):                             # VMEM scratch (B, T, H)
    B, T, F = x_ref.shape
    H = whr_ref.shape[0]
    f32 = jnp.float32

    # ---- Phase 1 (non-recurrent): input projections for ALL timesteps at once.
    x2d = x_ref[...].reshape(B * T, F).astype(f32)         # row index = b*T + t
    gi_r = (jnp.dot(x2d, wir_ref[...].astype(f32), preferred_element_type=f32)
            + br_ref[...]).reshape(B, T, H)                # bias = b_ir + b_hr (fused)
    gi_z = (jnp.dot(x2d, wiz_ref[...].astype(f32), preferred_element_type=f32)
            + bz_ref[...]).reshape(B, T, H)                # bias = b_iz + b_hz (fused)
    gi_n = (jnp.dot(x2d, win_ref[...].astype(f32), preferred_element_type=f32)
            + bni_ref[...]).reshape(B, T, H)               # bias = b_in only

    whr = whr_ref[...].astype(f32)
    whz = whz_ref[...].astype(f32)
    whn = whn_ref[...].astype(f32)
    b_hn = jnp.broadcast_to(bnh_ref[...], (B, H))          # broadcast hoisted out of loop

    # ---- Phase 2: the recurrence. Only h @ W_h{r,z,n} + gate elementwise remain in
    # the serial chain. Statically unrolled (T small & fixed) -> no grid overhead.
    h = jnp.zeros((B, H), f32)
    for t in range(T):
        gh_r = jnp.dot(h, whr, preferred_element_type=f32)
        gh_z = jnp.dot(h, whz, preferred_element_type=f32)
        gh_n = jnp.dot(h, whn, preferred_element_type=f32) + b_hn
        r = jax.nn.sigmoid(gi_r[:, t, :] + gh_r)
        z = jax.nn.sigmoid(gi_z[:, t, :] + gh_z)
        n = jnp.tanh(gi_n[:, t, :] + r * gh_n)
        h = n + z * (h - n)                                # == (1-z)*n + z*h
        h_all_ref[:, t:t + 1, :] = h.reshape(B, 1, H)

    # ---- Phase 3 (non-recurrent): FF head as two batched matmuls over (B*T, H),
    # written to the output once as a single slab.
    hflat = h_all_ref[...].reshape(B * T, H)
    a = jnp.maximum(
        jnp.dot(hflat, w1_ref[...].astype(f32), preferred_element_type=f32) + b1_ref[...],
        0.0)
    o = jnp.tanh(
        jnp.dot(a, w2_ref[...].astype(f32), preferred_element_type=f32) + b2_ref[...])
    out_ref[...] = o.reshape(B, T, -1).astype(out_ref.dtype)


def gru_ff_forward(x, params, *, last_only=False):
    """x: (B, T, featSize) batch_first, like the PyTorch module."""
    B, T, F = x.shape
    H = params["w_hr_t"].shape[0]
    O = params["w2_t"].shape[1]

    # Fuse b_ih + b_hh for the r and z gates only (legal); keep b_in / b_hn separate.
    b_r = (params["b_ir"] + params["b_hr"]).astype(jnp.float32)
    b_z = (params["b_iz"] + params["b_hz"]).astype(jnp.float32)

    vmem = lambda: pl.BlockSpec(memory_space=pltpu.MemorySpace.VMEM)

    out = pl.pallas_call(
        _gru_ff_kernel,
        out_shape=jax.ShapeDtypeStruct((B, T, O), jnp.float32),
        in_specs=[vmem() for _ in range(15)],
        out_specs=vmem(),
        scratch_shapes=[pltpu.VMEM((B, T, H), jnp.float32)],
    )(x.astype(jnp.float32),
      params["w_ir_t"], params["w_iz_t"], params["w_in_t"],
      params["w_hr_t"], params["w_hz_t"], params["w_hn_t"],
      b_r, b_z, params["b_in"], params["b_hn"],
      params["w1_t"], params["b1"], params["w2_t"], params["b2"])

    if last_only:
        out = out[:, -1, :]        # (B, O), matches lastOnly=True in the module
    return out


def init_params(key, feat_size, hidden_size, ff_hidden_size, output_size):
    """Deterministic init mirroring PyTorch's U(-1/sqrt(fan), 1/sqrt(fan)),
    with per-gate GRU weights stored pre-transposed for x @ W^T."""
    H, F, FFH, O = hidden_size, feat_size, ff_hidden_size, output_size
    ks = jax.random.split(key, 16)
    s_gru = 1.0 / jnp.sqrt(H)
    s_l1 = 1.0 / jnp.sqrt(H)
    s_l2 = 1.0 / jnp.sqrt(FFH)
    u = lambda k, shp, s: jax.random.uniform(k, shp, jnp.float32, -s, s)
    return {
        "w_ir_t": u(ks[0], (F, H), s_gru),
        "w_iz_t": u(ks[1], (F, H), s_gru),
        "w_in_t": u(ks[2], (F, H), s_gru),
        "w_hr_t": u(ks[3], (H, H), s_gru),
        "w_hz_t": u(ks[4], (H, H), s_gru),
        "w_hn_t": u(ks[5], (H, H), s_gru),
        "b_ir":   u(ks[6], (1, H), s_gru),
        "b_iz":   u(ks[7], (1, H), s_gru),
        "b_in":   u(ks[8], (1, H), s_gru),
        "b_hr":   u(ks[9], (1, H), s_gru),
        "b_hz":   u(ks[10], (1, H), s_gru),
        "b_hn":   u(ks[11], (1, H), s_gru),
        "w1_t":   u(ks[12], (H, FFH), s_l1),
        "b1":     u(ks[13], (1, FFH), s_l1),
        "w2_t":   u(ks[14], (FFH, O), s_l2),
        "b2":     u(ks[15], (1, O), s_l2),
    }


def _reference_forward(x, params):
    """Pure-JAX reference of the same GRU + FF math (PyTorch GRU semantics)."""
    B, T, F = x.shape
    H = params["w_hr_t"].shape[0]
    h = jnp.zeros((B, H), jnp.float32)
    outs = []
    for t in range(T):
        xt = x[:, t, :]
        r = jax.nn.sigmoid(xt @ params["w_ir_t"] + params["b_ir"]
                           + h @ params["w_hr_t"] + params["b_hr"])
        z = jax.nn.sigmoid(xt @ params["w_iz_t"] + params["b_iz"]
                           + h @ params["w_hz_t"] + params["b_hz"])
        n = jnp.tanh(xt @ params["w_in_t"] + params["b_in"]
                     + r * (h @ params["w_hn_t"] + params["b_hn"]))
        h = (1.0 - z) * n + z * h
        a = jnp.maximum(h @ params["w1_t"] + params["b1"], 0.0)
        outs.append(jnp.tanh(a @ params["w2_t"] + params["b2"]))
    return jnp.stack(outs, axis=1)


if __name__ == "__main__":
    # Small shapes consistent with the module: batch=2, seq=8, featSize=8,
    # hidden_size=32, FF_hidden_size=16, outputSize=1, num_layers=1.
    B, T, F = 2, 8, 8
    H, FFH, O = 32, 16, 1

    key = jax.random.PRNGKey(0)
    k_x, k_p = jax.random.split(key)
    x = jax.random.normal(k_x, (B, T, F), jnp.float32)
    params = init_params(k_p, F, H, FFH, O)

    out = jax.block_until_ready(gru_ff_forward(x, params, last_only=False))
    assert out.shape == (B, T, O), out.shape

    ref = _reference_forward(x, params)
    assert jnp.allclose(out, ref, atol=1e-4, rtol=1e-4), float(jnp.max(jnp.abs(out - ref)))

    out_last = jax.block_until_ready(gru_ff_forward(x, params, last_only=True))
    assert out_last.shape == (B, O), out_last.shape
    assert jnp.allclose(out_last, ref[:, -1, :], atol=1e-4, rtol=1e-4)

    print("KERNEL_OK")
</pallas_src>

<mosaic_0001>
module attributes {stable_mosaic.version = 11 : i64} {
  func.func @_gru_ff_kernel(%arg0: memref<2x8x8xf32, #tpu.memory_space<vmem>>, %arg1: memref<8x32xf32, #tpu.memory_space<vmem>>, %arg2: memref<8x32xf32, #tpu.memory_space<vmem>>, %arg3: memref<8x32xf32, #tpu.memory_space<vmem>>, %arg4: memref<32x32xf32, #tpu.memory_space<vmem>>, %arg5: memref<32x32xf32, #tpu.memory_space<vmem>>, %arg6: memref<32x32xf32, #tpu.memory_space<vmem>>, %arg7: memref<1x32xf32, #tpu.memory_space<vmem>>, %arg8: memref<1x32xf32, #tpu.memory_space<vmem>>, %arg9: memref<1x32xf32, #tpu.memory_space<vmem>>, %arg10: memref<1x32xf32, #tpu.memory_space<vmem>>, %arg11: memref<32x16xf32, #tpu.memory_space<vmem>>, %arg12: memref<1x16xf32, #tpu.memory_space<vmem>>, %arg13: memref<16x1xf32, #tpu.memory_space<vmem>>, %arg14: memref<1x1xf32, #tpu.memory_space<vmem>>, %arg15: memref<2x8x1xf32, #tpu.memory_space<vmem>>, %arg16: memref<2x8x32xf32, #tpu.memory_space<vmem>>) attributes {dimension_semantics = [], scalar_prefetch = 0 : i64, scratch_operands = 1 : i64, tpu.core_type = #tpu.core_type<tc>} {
    %c0 = arith.constant 0 : index
    %c0_0 = arith.constant 0 : index
    %c0_1 = arith.constant 0 : index
    %0 = vector.load %arg0[%c0, %c0_0, %c0_1] : memref<2x8x8xf32, #tpu.memory_space<vmem>>, vector<2x8x8xf32>
    %1 = vector.shape_cast %0 : vector<2x8x8xf32> to vector<16x8xf32>
    %c0_2 = arith.constant 0 : index
    %c0_3 = arith.constant 0 : index
    %2 = vector.load %arg1[%c0_2, %c0_3] : memref<8x32xf32, #tpu.memory_space<vmem>>, vector<8x32xf32>
    %cst = arith.constant dense<0.000000e+00> : vector<16x32xf32>
    %3 = tpu.matmul %1, %2, %cst {dimension_numbers = #tpu.dot_dimension_numbers<[1], [0], [0], [1], [0, 0, 1, 1], [], []>} : vector<16x8xf32>, vector<8x32xf32>, vector<16x32xf32> -> vector<16x32xf32>
    %c0_4 = arith.constant 0 : index
    %c0_5 = arith.constant 0 : index
    %4 = vector.load %arg7[%c0_4, %c0_5] : memref<1x32xf32, #tpu.memory_space<vmem>>, vector<1x32xf32>
    %5 = vector.broadcast %4 : vector<1x32xf32> to vector<16x32xf32>
    %6 = arith.addf %3, %5 : vector<16x32xf32>
    %7 = vector.shape_cast %6 : vector<16x32xf32> to vector<2x8x32xf32>
    %c0_6 = arith.constant 0 : index
    %c0_7 = arith.constant 0 : index
    %8 = vector.load %arg2[%c0_6, %c0_7] : memref<8x32xf32, #tpu.memory_space<vmem>>, vector<8x32xf32>
    %cst_8 = arith.constant dense<0.000000e+00> : vector<16x32xf32>
    %9 = tpu.matmul %1, %8, %cst_8 {dimension_numbers = #tpu.dot_dimension_numbers<[1], [0], [0], [1], [0, 0, 1, 1], [], []>} : vector<16x8xf32>, vector<8x32xf32>, vector<16x32xf32> -> vector<16x32xf32>
    %c0_9 = arith.constant 0 : index
    %c0_10 = arith.constant 0 : index
    %10 = vector.load %arg8[%c0_9, %c0_10] : memref<1x32xf32, #tpu.memory_space<vmem>>, vector<1x32xf32>
    %11 = vector.broadcast %10 : vector<1x32xf32> to vector<16x32xf32>
    %12 = arith.addf %9, %11 : vector<16x32xf32>
    %13 = vector.shape_cast %12 : vector<16x32xf32> to vector<2x8x32xf32>
    %c0_11 = arith.constant 0 : index
    %c0_12 = arith.constant 0 : index
    %14 = vector.load %arg3[%c0_11, %c0_12] : memref<8x32xf32, #tpu.memory_space<vmem>>, vector<8x32xf32>
    %cst_13 = arith.constant dense<0.000000e+00> : vector<16x32xf32>
    %15 = tpu.matmul %1, %14, %cst_13 {dimension_numbers = #tpu.dot_dimension_numbers<[1], [0], [0], [1], [0, 0, 1, 1], [], []>} : vector<16x8xf32>, vector<8x32xf32>, vector<16x32xf32> -> vector<16x32xf32>
    %c0_14 = arith.constant 0 : index
    %c0_15 = arith.constant 0 : index
    %16 = vector.load %arg9[%c0_14, %c0_15] : memref<1x32xf32, #tpu.memory_space<vmem>>, vector<1x32xf32>
    %17 = vector.broadcast %16 : vector<1x32xf32> to vector<16x32xf32>
    %18 = arith.addf %15, %17 : vector<16x32xf32>
    %19 = vector.shape_cast %18 : vector<16x32xf32> to vector<2x8x32xf32>
    %c0_16 = arith.constant 0 : index
    %c0_17 = arith.constant 0 : index
    %20 = vector.load %arg4[%c0_16, %c0_17] : memref<32x32xf32, #tpu.memory_space<vmem>>, vector<32x32xf32>
    %c0_18 = arith.constant 0 : index
    %c0_19 = arith.constant 0 : index
    %21 = vector.load %arg5[%c0_18, %c0_19] : memref<32x32xf32, #tpu.memory_space<vmem>>, vector<32x32xf32>
    %c0_20 = arith.constant 0 : index
    %c0_21 = arith.constant 0 : index
    %22 = vector.load %arg6[%c0_20, %c0_21] : memref<32x32xf32, #tpu.memory_space<vmem>>, vector<32x32xf32>
    %c0_22 = arith.constant 0 : index
    %c0_23 = arith.constant 0 : index
    %23 = vector.load %arg10[%c0_22, %c0_23] : memref<1x32xf32, #tpu.memory_space<vmem>>, vector<1x32xf32>
    %24 = vector.shape_cast %23 : vector<1x32xf32> to vector<1x32xf32>
    %25 = vector.broadcast %24 : vector<1x32xf32> to vector<2x32xf32>
    %cst_24 = arith.constant 0.000000e+00 : f32
    %26 = vector.broadcast %cst_24 : f32 to vector<2x32xf32>
    %cst_25 = arith.constant dense<0.000000e+00> : vector<2x32xf32>
    %27 = tpu.matmul %26, %20, %cst_25 {dimension_numbers = #tpu.dot_dimension_numbers<[1], [0], [0], [1], [0, 0, 1, 1], [], []>} : vector<2x32xf32>, vector<32x32xf32>, vector<2x32xf32> -> vector<2x32xf32>
    %cst_26 = arith.constant dense<0.000000e+00> : vector<2x32xf32>
    %28 = tpu.matmul %26, %21, %cst_26 {dimension_numbers = #tpu.dot_dimension_numbers<[1], [0], [0], [1], [0, 0, 1, 1], [], []>} : vector<2x32xf32>, vector<32x32xf32>, vector<2x32xf32> -> vector<2x32xf32>
    %cst_27 = arith.constant dense<0.000000e+00> : vector<2x32xf32>
    %29 = tpu.matmul %26, %22, %cst_27 {dimension_numbers = #tpu.dot_dimension_numbers<[1], [0], [0], [1], [0, 0, 1, 1], [], []>} : vector<2x32xf32>, vector<32x32xf32>, vector<2x32xf32> -> vector<2x32xf32>
    %30 = arith.addf %29, %25 : vector<2x32xf32>
    %31 = vector.extract_strided_slice %7 {offsets = [0, 0, 0], sizes = [2, 1, 32], strides = [1, 1, 1]} : vector<2x8x32xf32> to vector<2x1x32xf32>
    %32 = vector.shape_cast %31 : vector<2x1x32xf32> to vector<2x32xf32>
    %33 = arith.addf %32, %27 : vector<2x32xf32>
    %34 = arith.negf %33 : vector<2x32xf32>
    %35 = math.exp %34 : vector<2x32xf32>
    %cst_28 = arith.constant 1.000000e+00 : f32
    %36 = vector.broadcast %cst_28 : f32 to vector<2x32xf32>
    %37 = arith.addf %36, %35 : vector<2x32xf32>
    %38 = arith.divf %36, %37 : vector<2x32xf32>
    %39 = vector.extract_strided_slice %13 {offsets = [0, 0, 0], sizes = [2, 1, 32], strides = [1, 1, 1]} : vector<2x8x32xf32> to vector<2x1x32xf32>
    %40 = vector.shape_cast %39 : vector<2x1x32xf32> to vector<2x32xf32>
    %41 = arith.addf %40, %28 : vector<2x32xf32>
    %42 = arith.negf %41 : vector<2x32xf32>
    %43 = math.exp %42 : vector<2x32xf32>
    %cst_29 = arith.constant 1.000000e+00 : f32
    %44 = vector.broadcast %cst_29 : f32 to vector<2x32xf32>
    %45 = arith.addf %44, %43 : vector<2x32xf32>
    %46 = arith.divf %44, %45 : vector<2x32xf32>
    %47 = vector.extract_strided_slice %19 {offsets = [0, 0, 0], sizes = [2, 1, 32], strides = [1, 1, 1]} : vector<2x8x32xf32> to vector<2x1x32xf32>
    %48 = vector.shape_cast %47 : vector<2x1x32xf32> to vector<2x32xf32>
    %49 = arith.mulf %38, %30 : vector<2x32xf32>
    %50 = arith.addf %48, %49 : vector<2x32xf32>
    %51 = math.tanh %50 : vector<2x32xf32>
    %52 = arith.subf %26, %51 : vector<2x32xf32>
    %53 = arith.mulf %46, %52 : vector<2x32xf32>
    %54 = arith.addf %51, %53 : vector<2x32xf32>
    %55 = vector.shape_cast %54 : vector<2x32xf32> to vector<2x1x32xf32>
    %c0_30 = arith.constant 0 : index
    %c0_31 = arith.constant 0 : index
    %c0_32 = arith.constant 0 : index
    %56 = vector.load %arg16[%c0_30, %c0_31, %c0_32] : memref<2x8x32xf32, #tpu.memory_space<vmem>>, vector<2x1x32xf32>
    tpu.vector_store %arg16[%c0_30, %c0_31, %c0_32], %55 {strides = array<i32>} : memref<2x8x32xf32, #tpu.memory_space<vmem>>, vector<2x1x32xf32>,
    %cst_33 = arith.constant dense<0.000000e+00> : vector<2x32xf32>
    %57 = tpu.matmul %54, %20, %cst_33 {dimension_numbers = #tpu.dot_dimension_numbers<[1], [0], [0], [1], [0, 0, 1, 1], [], []>} : vector<2x32xf32>, vector<32x32xf32>, vector<2x32xf32> -> vector<2x32xf32>
    %cst_34 = arith.constant dense<0.000000e+00> : vector<2x32xf32>
    %58 = tpu.matmul %54, %21, %cst_34 {dimension_numbers = #tpu.dot_dimension_numbers<[1], [0], [0], [1], [0, 0, 1, 1], [], []>} : vector<2x32xf32>, vector<32x32xf32>, vector<2x32xf32> -> vector<2x32xf32>
    %cst_35 = arith.constant dense<0.000000e+00> : vector<2x32xf32>
    %59 = tpu.matmul %54, %22, %cst_35 {dimension_numbers = #tpu.dot_dimension_numbers<[1], [0], [0], [1], [0, 0, 1, 1], [], []>} : vector<2x32xf32>, vector<32x32xf32>, vector<2x32xf32> -> vector<2x32xf32>
    %60 = arith.addf %59, %25 : vector<2x32xf32>
    %61 = vector.extract_strided_slice %7 {offsets = [0, 1, 0], sizes = [2, 1, 32], strides = [1, 1, 1]} : vector<2x8x32xf32> to vector<2x1x32xf32>
    %62 = vector.shape_cast %61 : vector<2x1x32xf32> to vector<2x32xf32>
    %63 = arith.addf %62, %57 : vector<2x32xf32>
    %64 = arith.negf %63 : vector<2x32xf32>
    %65 = math.exp %64 : vector<2x32xf32>
    %cst_36 = arith.constant 1.000000e+00 : f32
    %66 = vector.broadcast %cst_36 : f32 to vector<2x32xf32>
    %67 = arith.addf %66, %65 : vector<2x32xf32>
    %68 = arith.divf %66, %67 : vector<2x32xf32>
    %69 = vector.extract_strided_slice %13 {offsets = [0, 1, 0], sizes = [2, 1, 32], strides = [1, 1, 1]} : vector<2x8x32xf32> to vector<2x1x32xf32>
    %70 = vector.shape_cast %69 : vector<2x1x32xf32> to vector<2x32xf32>
    %71 = arith.addf %70, %58 : vector<2x32xf32>
    %72 = arith.negf %71 : vector<2x32xf32>
    %73 = math.exp %72 : vector<2x32xf32>
    %cst_37 = arith.constant 1.000000e+00 : f32
    %74 = vector.broadcast %cst_37 : f32 to vector<2x32xf32>
    %75 = arith.addf %74, %73 : vector<2x32xf32>
    %76 = arith.divf %74, %75 : vector<2x32xf32>
    %77 = vector.extract_strided_slice %19 {offsets = [0, 1, 0], sizes = [2, 1, 32], strides = [1, 1, 1]} : vector<2x8x32xf32> to vector<2x1x32xf32>
    %78 = vector.shape_cast %77 : vector<2x1x32xf32> to vector<2x32xf32>
    %79 = arith.mulf %68, %60 : vector<2x32xf32>
    %80 = arith.addf %78, %79 : vector<2x32xf32>
    %81 = math.tanh %80 : vector<2x32xf32>
    %82 = arith.subf %54, %81 : vector<2x32xf32>
    %83 = arith.mulf %76, %82 : vector<2x32xf32>
    %84 = arith.addf %81, %83 : vector<2x32xf32>
    %85 = vector.shape_cast %84 : vector<2x32xf32> to vector<2x1x32xf32>
    %c0_38 = arith.constant 0 : index
    %c1 = arith.constant 1 : index
    %c0_39 = arith.constant 0 : index
    %86 = vector.load %arg16[%c0_38, %c1, %c0_39] : memref<2x8x32xf32, #tpu.memory_space<vmem>>, vector<2x1x32xf32>
    tpu.vector_store %arg16[%c0_38, %c1, %c0_39], %85 {strides = array<i32>} : memref<2x8x32xf32, #tpu.memory_space<vmem>>, vector<2x1x32xf32>,
    %cst_40 = arith.constant dense<0.000000e+00> : vector<2x32xf32>
    %87 = tpu.matmul %84, %20, %cst_40 {dimension_numbers = #tpu.dot_dimension_numbers<[1], [0], [0], [1], [0, 0, 1, 1], [], []>} : vector<2x32xf32>, vector<32x32xf32>, vector<2x32xf32> -> vector<2x32xf32>
    %cst_41 = arith.constant dense<0.000000e+00> : vector<2x32xf32>
    %88 = tpu.matmul %84, %21, %cst_41 {dimension_numbers = #tpu.dot_dimension_numbers<[1], [0], [0], [1], [0, 0, 1, 1], [], []>} : vector<2x32xf32>, vector<32x32xf32>, vector<2x32xf32> -> vector<2x32xf32>
    %cst_42 = arith.constant dense<0.000000e+00> : vector<2x32xf32>
    %89 = tpu.matmul %84, %22, %cst_42 {dimension_numbers = #tpu.dot_dimension_numbers<[1], [0], [0], [1], [0, 0, 1, 1], [], []>} : vector<2x32xf32>, vector<32x32xf32>, vector<2x32xf32> -> vector<2x32xf32>
    %90 = arith.addf %89, %25 : vector<2x32xf32>
    %91 = vector.extract_strided_slice %7 {offsets = [0, 2, 0], sizes = [2, 1, 32], strides = [1, 1, 1]} : vector<2x8x32xf32> to vector<2x1x32xf32>
    %92 = vector.shape_cast %91 : vector<2x1x32xf32> to vector<2x32xf32>
    %93 = arith.addf %92, %87 : vector<2x32xf32>
    %94 = arith.negf %93 : vector<2x32xf32>
    %95 = math.exp %94 : vector<2x32xf32>
    %cst_43 = arith.constant 1.000000e+00 : f32
    %96 = vector.broadcast %cst_43 : f32 to vector<2x32xf32>
    %97 = arith.addf %96, %95 : vector<2x32xf32>
    %98 = arith.divf %96, %97 : vector<2x32xf32>
    %99 = vector.extract_strided_slice %13 {offsets = [0, 2, 0], sizes = [2, 1, 32], strides = [1, 1, 1]} : vector<2x8x32xf32> to vector<2x1x32xf32>
    %100 = vector.shape_cast %99 : vector<2x1x32xf32> to vector<2x32xf32>
    %101 = arith.addf %100, %88 : vector<2x32xf32>
    %102 = arith.negf %101 : vector<2x32xf32>
    %103 = math.exp %102 : vector<2x32xf32>
    %cst_44 = arith.constant 1.000000e+00 : f32
    %104 = vector.broadcast %cst_44 : f32 to vector<2x32xf32>
    %105 = arith.addf %104, %103 : vector<2x32xf32>
    %106 = arith.divf %104, %105 : vector<2x32xf32>
    %107 = vector.extract_strided_slice %19 {offsets = [0, 2, 0], sizes = [2, 1, 32], strides = [1, 1, 1]} : vector<2x8x32xf32> to vector<2x1x32xf32>
    %108 = vector.shape_cast %107 : vector<2x1x32xf32> to vector<2x32xf32>
    %109 = arith.mulf %98, %90 : vector<2x32xf32>
    %110 = arith.addf %108, %109 : vector<2x32xf32>
    %111 = math.tanh %110 : vector<2x32xf32>
    %112 = arith.subf %84, %111 : vector<2x32xf32>
    %113 = arith.mulf %106, %112 : vector<2x32xf32>
    %114 = arith.addf %111, %113 : vector<2x32xf32>
    %115 = vector.shape_cast %114 : vector<2x32xf32> to vector<2x1x32xf32>
    %c0_45 = arith.constant 0 : index
    %c2 = arith.constant 2 : index
    %c0_46 = arith.constant 0 : index
    %116 = vector.load %arg16[%c0_45, %c2, %c0_46] : memref<2x8x32xf32, #tpu.memory_space<vmem>>, vector<2x1x32xf32>
    tpu.vector_store %arg16[%c0_45, %c2, %c0_46], %115 {strides = array<i32>} : memref<2x8x32xf32, #tpu.memory_space<vmem>>, vector<2x1x32xf32>,
    %cst_47 = arith.constant dense<0.000000e+00> : vector<2x32xf32>
    %117 = tpu.matmul %114, %20, %cst_47 {dimension_numbers = #tpu.dot_dimension_numbers<[1], [0], [0], [1], [0, 0, 1, 1], [], []>} : vector<2x32xf32>, vector<32x32xf32>, vector<2x32xf32> -> vector<2x32xf32>
    %cst_48 = arith.constant dense<0.000000e+00> : vector<2x32xf32>
    %118 = tpu.matmul %114, %21, %cst_48 {dimension_numbers = #tpu.dot_dimension_numbers<[1], [0], [0], [1], [0, 0, 1, 1], [], []>} : vector<2x32xf32>, vector<32x32xf32>, vector<2x32xf32> -> vector<2x32xf32>
    %cst_49 = arith.constant dense<0.000000e+00> : vector<2x32xf32>
    %119 = tpu.matmul %114, %22, %cst_49 {dimension_numbers = #tpu.dot_dimension_numbers<[1], [0], [0], [1], [0, 0, 1, 1], [], []>} : vector<2x32xf32>, vector<32x32xf32>, vector<2x32xf32> -> vector<2x32xf32>
    %120 = arith.addf %119, %25 : vector<2x32xf32>
    %121 = vector.extract_strided_slice %7 {offsets = [0, 3, 0], sizes = [2, 1, 32], strides = [1, 1, 1]} : vector<2x8x32xf32> to vector<2x1x32xf32>
    %122 = vector.shape_cast %121 : vector<2x1x32xf32> to vector<2x32xf32>
    %123 = arith.addf %122, %117 : vector<2x32xf32>
    %124 = arith.negf %123 : vector<2x32xf32>
    %125 = math.exp %124 : vector<2x32xf32>
    %cst_50 = arith.constant 1.000000e+00 : f32
    %126 = vector.broadcast %cst_50 : f32 to vector<2x32xf32>
    %127 = arith.addf %126, %125 : vector<2x32xf32>
    %128 = arith.divf %126, %127 : vector<2x32xf32>
    %129 = vector.extract_strided_slice %13 {offsets = [0, 3, 0], sizes = [2, 1, 32], strides = [1, 1, 1]} : vector<2x8x32xf32> to vector<2x1x32xf32>
    %130 = vector.shape_cast %129 : vector<2x1x32xf32> to vector<2x32xf32>
    %131 = arith.addf %130, %118 : vector<2x32xf32>
    %132 = arith.negf %131 : vector<2x32xf32>
    %133 = math.exp %132 : vector<2x32xf32>
    %cst_51 = arith.constant 1.000000e+00 : f32
    %134 = vector.broadcast %cst_51 : f32 to vector<2x32xf32>
    %135 = arith.addf %134, %133 : vector<2x32xf32>
    %136 = arith.divf %134, %135 : vector<2x32xf32>
    %137 = vector.extract_strided_slice %19 {offsets = [0, 3, 0], sizes = [2, 1, 32], strides = [1, 1, 1]} : vector<2x8x32xf32> to vector<2x1x32xf32>
    %138 = vector.shape_cast %137 : vector<2x1x32xf32> to vector<2x32xf32>
    %139 = arith.mulf %128, %120 : vector<2x32xf32>
    %140 = arith.addf %138, %139 : vector<2x32xf32>
    %141 = math.tanh %140 : vector<2x32xf32>
    %142 = arith.subf %114, %141 : vector<2x32xf32>
    %143 = arith.mulf %136, %142 : vector<2x32xf32>
    %144 = arith.addf %141, %143 : vector<2x32xf32>
    %145 = vector.shape_cast %144 : vector<2x32xf32> to vector<2x1x32xf32>
    %c0_52 = arith.constant 0 : index
    %c3 = arith.constant 3 : index
    %c0_53 = arith.constant 0 : index
    %146 = vector.load %arg16[%c0_52, %c3, %c0_53] : memref<2x8x32xf32, #tpu.memory_space<vmem>>, vector<2x1x32xf32>
    tpu.vector_store %arg16[%c0_52, %c3, %c0_53], %145 {strides = array<i32>} : memref<2x8x32xf32, #tpu.memory_space<vmem>>, vector<2x1x32xf32>,
    %cst_54 = arith.constant dense<0.000000e+00> : vector<2x32xf32>
    %147 = tpu.matmul %144, %20, %cst_54 {dimension_numbers = #tpu.dot_dimension_numbers<[1], [0], [0], [1], [0, 0, 1, 1], [], []>} : vector<2x32xf32>, vector<32x32xf32>, vector<2x32xf32> -> vector<2x32xf32>
    %cst_55 = arith.constant dense<0.000000e+00> : vector<2x32xf32>
    %148 = tpu.matmul %144, %21, %cst_55 {dimension_numbers = #tpu.dot_dimension_numbers<[1], [0], [0], [1], [0, 0, 1, 1], [], []>} : vector<2x32xf32>, vector<32x32xf32>, vector<2x32xf32> -> vector<2x32xf32>
    %cst_56 = arith.constant dense<0.000000e+00> : vector<2x32xf32>
    %149 = tpu.matmul %144, %22, %cst_56 {dimension_numbers = #tpu.dot_dimension_numbers<[1], [0], [0], [1], [0, 0, 1, 1], [], []>} : vector<2x32xf32>, vector<32x32xf32>, vector<2x32xf32> -> vector<2x32xf32>
    %150 = arith.addf %149, %25 : vector<2x32xf32>
    %151 = vector.extract_strided_slice %7 {offsets = [0, 4, 0], sizes = [2, 1, 32], strides = [1, 1, 1]} : vector<2x8x32xf32> to vector<2x1x32xf32>
    %152 = vector.shape_cast %151 : vector<2x1x32xf32> to vector<2x32xf32>
    %153 = arith.addf %152, %147 : vector<2x32xf32>
    %154 = arith.negf %153 : vector<2x32xf32>
    %155 = math.exp %154 : vector<2x32xf32>
    %cst_57 = arith.constant 1.000000e+00 : f32
    %156 = vector.broadcast %cst_57 : f32 to vector<2x32xf32>
    %157 = arith.addf %156, %155 : vector<2x32xf32>
    %158 = arith.divf %156, %157 : vector<2x32xf32>
    %159 = vector.extract_strided_slice %13 {offsets = [0, 4, 0], sizes = [2, 1, 32], strides = [1, 1, 1]} : vector<2x8x32xf32> to vector<2x1x32xf32>
    %160 = vector.shape_cast %159 : vector<2x1x32xf32> to vector<2x32xf32>
    %161 = arith.addf %160, %148 : vector<2x32xf32>
    %162 = arith.negf %161 : vector<2x32xf32>
    %163 = math.exp %162 : vector<2x32xf32>
    %cst_58 = arith.constant 1.000000e+00 : f32
    %164 = vector.broadcast %cst_58 : f32 to vector<2x32xf32>
    %165 = arith.addf %164, %163 : vector<2x32xf32>
    %166 = arith.divf %164, %165 : vector<2x32xf32>
    %167 = vector.extract_strided_slice %19 {offsets = [0, 4, 0], sizes = [2, 1, 32], strides = [1, 1, 1]} : vector<2x8x32xf32> to vector<2x1x32xf32>
    %168 = vector.shape_cast %167 : vector<2x1x32xf32> to vector<2x32xf32>
    %169 = arith.mulf %158, %150 : vector<2x32xf32>
    %170 = arith.addf %168, %169 : vector<2x32xf32>
    %171 = math.tanh %170 : vector<2x32xf32>
    %172 = arith.subf %144, %171 : vector<2x32xf32>
    %173 = arith.mulf %166, %172 : vector<2x32xf32>
    %174 = arith.addf %171, %173 : vector<2x32xf32>
    %175 = vector.shape_cast %174 : vector<2x32xf32> to vector<2x1x32xf32>
    %c0_59 = arith.constant 0 : index
    %c4 = arith.constant 4 : index
    %c0_60 = arith.constant 0 : index
    %176 = vector.load %arg16[%c0_59, %c4, %c0_60] : memref<2x8x32xf32, #tpu.memory_space<vmem>>, vector<2x1x32xf32>
    tpu.vector_store %arg16[%c0_59, %c4, %c0_60], %175 {strides = array<i32>} : memref<2x8x32xf32, #tpu.memory_space<vmem>>, vector<2x1x32xf32>,
    %cst_61 = arith.constant dense<0.000000e+00> : vector<2x32xf32>
    %177 = tpu.matmul %174, %20, %cst_61 {dimension_numbers = #tpu.dot_dimension_numbers<[1], [0], [0], [1], [0, 0, 1, 1], [], []>} : vector<2x32xf32>, vector<32x32xf32>, vector<2x32xf32> -> vector<2x32xf32>
    %cst_62 = arith.constant dense<0.000000e+00> : vector<2x32xf32>
    %178 = tpu.matmul %174, %21, %cst_62 {dimension_numbers = #tpu.dot_dimension_numbers<[1], [0], [0], [1], [0, 0, 1, 1], [], []>} : vector<2x32xf32>, vector<32x32xf32>, vector<2x32xf32> -> vector<2x32xf32>
    %cst_63 = arith.constant dense<0.000000e+00> : vector<2x32xf32>
    %179 = tpu.matmul %174, %22, %cst_63 {dimension_numbers = #tpu.dot_dimension_numbers<[1], [0], [0], [1], [0, 0, 1, 1], [], []>} : vector<2x32xf32>, vector<32x32xf32>, vector<2x32xf32> -> vector<2x32xf32>
    %180 = arith.addf %179, %25 : vector<2x32xf32>
    %181 = vector.extract_strided_slice %7 {offsets = [0, 5, 0], sizes = [2, 1, 32], strides = [1, 1, 1]} : vector<2x8x32xf32> to vector<2x1x32xf32>
    %182 = vector.shape_cast %181 : vector<2x1x32xf32> to vector<2x32xf32>
    %183 = arith.addf %182, %177 : vector<2x32xf32>
    %184 = arith.negf %183 : vector<2x32xf32>
    %185 = math.exp %184 : vector<2x32xf32>
    %cst_64 = arith.constant 1.000000e+00 : f32
    %186 = vector.broadcast %cst_64 : f32 to vector<2x32xf32>
    %187 = arith.addf %186, %185 : vector<2x32xf32>
    %188 = arith.divf %186, %187 : vector<2x32xf32>
    %189 = vector.extract_strided_slice %13 {offsets = [0, 5, 0], sizes = [2, 1, 32], strides = [1, 1, 1]} : vector<2x8x32xf32> to vector<2x1x32xf32>
    %190 = vector.shape_cast %189 : vector<2x1x32xf32> to vector<2x32xf32>
    %191 = arith.addf %190, %178 : vector<2x32xf32>
    %192 = arith.negf %191 : vector<2x32xf32>
    %193 = math.exp %192 : vector<2x32xf32>
    %cst_65 = arith.constant 1.000000e+00 : f32
    %194 = vector.broadcast %cst_65 : f32 to vector<2x32xf32>
    %195 = arith.addf %194, %193 : vector<2x32xf32>
    %196 = arith.divf %194, %195 : vector<2x32xf32>
    %197 = vector.extract_strided_slice %19 {offsets = [0, 5, 0], sizes = [2, 1, 32], strides = [1, 1, 1]} : vector<2x8x32xf32> to vector<2x1x32xf32>
    %198 = vector.shape_cast %197 : vector<2x1x32xf32> to vector<2x32xf32>
    %199 = arith.mulf %188, %180 : vector<2x32xf32>
    %200 = arith.addf %198, %199 : vector<2x32xf32>
    %201 = math.tanh %200 : vector<2x32xf32>
    %202 = arith.subf %174, %201 : vector<2x32xf32>
    %203 = arith.mulf %196, %202 : vector<2x32xf32>
    %204 = arith.addf %201, %203 : vector<2x32xf32>
    %205 = vector.shape_cast %204 : vector<2x32xf32> to vector<2x1x32xf32>
    %c0_66 = arith.constant 0 : index
    %c5 = arith.constant 5 : index
    %c0_67 = arith.constant 0 : index
    %206 = vector.load %arg16[%c0_66, %c5, %c0_67] : memref<2x8x32xf32, #tpu.memory_space<vmem>>, vector<2x1x32xf32>
    tpu.vector_store %arg16[%c0_66, %c5, %c0_67], %205 {strides = array<i32>} : memref<2x8x32xf32, #tpu.memory_space<vmem>>, vector<2x1x32xf32>,
    %cst_68 = arith.constant dense<0.000000e+00> : vector<2x32xf32>
    %207 = tpu.matmul %204, %20, %cst_68 {dimension_numbers = #tpu.dot_dimension_numbers<[1], [0], [0], [1], [0, 0, 1, 1], [], []>} : vector<2x32xf32>, vector<32x32xf32>, vector<2x32xf32> -> vector<2x32xf32>
    %cst_69 = arith.constant dense<0.000000e+00> : vector<2x32xf32>
    %208 = tpu.matmul %204, %21, %cst_69 {dimension_numbers = #tpu.dot_dimension_numbers<[1], [0], [0], [1], [0, 0, 1, 1], [], []>} : vector<2x32xf32>, vector<32x32xf32>, vector<2x32xf32> -> vector<2x32xf32>
    %cst_70 = arith.constant dense<0.000000e+00> : vector<2x32xf32>
    %209 = tpu.matmul %204, %22, %cst_70 {dimension_numbers = #tpu.dot_dimension_numbers<[1], [0], [0], [1], [0, 0, 1, 1], [], []>} : vector<2x32xf32>, vector<32x32xf32>, vector<2x32xf32> -> vector<2x32xf32>
    %210 = arith.addf %209, %25 : vector<2x32xf32>
    %211 = vector.extract_strided_slice %7 {offsets = [0, 6, 0], sizes = [2, 1, 32], strides = [1, 1, 1]} : vector<2x8x32xf32> to vector<2x1x32xf32>
    %212 = vector.shape_cast %211 : vector<2x1x32xf32> to vector<2x32xf32>
    %213 = arith.addf %212, %207 : vector<2x32xf32>
    %214 = arith.negf %213 : vector<2x32xf32>
    %215 = math.exp %214 : vector<2x32xf32>
    %cst_71 = arith.constant 1.000000e+00 : f32
    %216 = vector.broadcast %cst_71 : f32 to vector<2x32xf32>
    %217 = arith.addf %216, %215 : vector<2x32xf32>
    %218 = arith.divf %216, %217 : vector<2x32xf32>
    %219 = vector.extract_strided_slice %13 {offsets = [0, 6, 0], sizes = [2, 1, 32], strides = [1, 1, 1]} : vector<2x8x32xf32> to vector<2x1x32xf32>
    %220 = vector.shape_cast %219 : vector<2x1x32xf32> to vector<2x32xf32>
    %221 = arith.addf %220, %208 : vector<2x32xf32>
    %222 = arith.negf %221 : vector<2x32xf32>
    %223 = math.exp %222 : vector<2x32xf32>
    %cst_72 = arith.constant 1.000000e+00 : f32
    %224 = vector.broadcast %cst_72 : f32 to vector<2x32xf32>
    %225 = arith.addf %224, %223 : vector<2x32xf32>
    %226 = arith.divf %224, %225 : vector<2x32xf32>
    %227 = vector.extract_strided_slice %19 {offsets = [0, 6, 0], sizes = [2, 1, 32], strides = [1, 1, 1]} : vector<2x8x32xf32> to vector<2x1x32xf32>
    %228 = vector.shape_cast %227 : vector<2x1x32xf32> to vector<2x32xf32>
    %229 = arith.mulf %218, %210 : vector<2x32xf32>
    %230 = arith.addf %228, %229 : vector<2x32xf32>
    %231 = math.tanh %230 : vector<2x32xf32>
    %232 = arith.subf %204, %231 : vector<2x32xf32>
    %233 = arith.mulf %226, %232 : vector<2x32xf32>
    %234 = arith.addf %231, %233 : vector<2x32xf32>
    %235 = vector.shape_cast %234 : vector<2x32xf32> to vector<2x1x32xf32>
    %c0_73 = arith.constant 0 : index
    %c6 = arith.constant 6 : index
    %c0_74 = arith.constant 0 : index
    %236 = vector.load %arg16[%c0_73, %c6, %c0_74] : memref<2x8x32xf32, #tpu.memory_space<vmem>>, vector<2x1x32xf32>
    tpu.vector_store %arg16[%c0_73, %c6, %c0_74], %235 {strides = array<i32>} : memref<2x8x32xf32, #tpu.memory_space<vmem>>, vector<2x1x32xf32>,
    %cst_75 = arith.constant dense<0.000000e+00> : vector<2x32xf32>
    %237 = tpu.matmul %234, %20, %cst_75 {dimension_numbers = #tpu.dot_dimension_numbers<[1], [0], [0], [1], [0, 0, 1, 1], [], []>} : vector<2x32xf32>, vector<32x32xf32>, vector<2x32xf32> -> vector<2x32xf32>
    %cst_76 = arith.constant dense<0.000000e+00> : vector<2x32xf32>
    %238 = tpu.matmul %234, %21, %cst_76 {dimension_numbers = #tpu.dot_dimension_numbers<[1], [0], [0], [1], [0, 0, 1, 1], [], []>} : vector<2x32xf32>, vector<32x32xf32>, vector<2x32xf32> -> vector<2x32xf32>
    %cst_77 = arith.constant dense<0.000000e+00> : vector<2x32xf32>
    %239 = tpu.matmul %234, %22, %cst_77 {dimension_numbers = #tpu.dot_dimension_numbers<[1], [0], [0], [1], [0, 0, 1, 1], [], []>} : vector<2x32xf32>, vector<32x32xf32>, vector<2x32xf32> -> vector<2x32xf32>
    %240 = arith.addf %239, %25 : vector<2x32xf32>
    %241 = vector.extract_strided_slice %7 {offsets = [0, 7, 0], sizes = [2, 1, 32], strides = [1, 1, 1]} : vector<2x8x32xf32> to vector<2x1x32xf32>
    %242 = vector.shape_cast %241 : vector<2x1x32xf32> to vector<2x32xf32>
    %243 = arith.addf %242, %237 : vector<2x32xf32>
    %244 = arith.negf %243 : vector<2x32xf32>
    %245 = math.exp %244 : vector<2x32xf32>
    %cst_78 = arith.constant 1.000000e+00 : f32
    %246 = vector.broadcast %cst_78 : f32 to vector<2x32xf32>
    %247 = arith.addf %246, %245 : vector<2x32xf32>
    %248 = arith.divf %246, %247 : vector<2x32xf32>
    %249 = vector.extract_strided_slice %13 {offsets = [0, 7, 0], sizes = [2, 1, 32], strides = [1, 1, 1]} : vector<2x8x32xf32> to vector<2x1x32xf32>
    %250 = vector.shape_cast %249 : vector<2x1x32xf32> to vector<2x32xf32>
    %251 = arith.addf %250, %238 : vector<2x32xf32>
    %252 = arith.negf %251 : vector<2x32xf32>
    %253 = math.exp %252 : vector<2x32xf32>
    %cst_79 = arith.constant 1.000000e+00 : f32
    %254 = vector.broadcast %cst_79 : f32 to vector<2x32xf32>
    %255 = arith.addf %254, %253 : vector<2x32xf32>
    %256 = arith.divf %254, %255 : vector<2x32xf32>
    %257 = vector.extract_strided_slice %19 {offsets = [0, 7, 0], sizes = [2, 1, 32], strides = [1, 1, 1]} : vector<2x8x32xf32> to vector<2x1x32xf32>
    %258 = vector.shape_cast %257 : vector<2x1x32xf32> to vector<2x32xf32>
    %259 = arith.mulf %248, %240 : vector<2x32xf32>
    %260 = arith.addf %258, %259 : vector<2x32xf32>
    %261 = math.tanh %260 : vector<2x32xf32>
    %262 = arith.subf %234, %261 : vector<2x32xf32>
    %263 = arith.mulf %256, %262 : vector<2x32xf32>
    %264 = arith.addf %261, %263 : vector<2x32xf32>
    %265 = vector.shape_cast %264 : vector<2x32xf32> to vector<2x1x32xf32>
    %c0_80 = arith.constant 0 : index
    %c7 = arith.constant 7 : index
    %c0_81 = arith.constant 0 : index
    %266 = vector.load %arg16[%c0_80, %c7, %c0_81] : memref<2x8x32xf32, #tpu.memory_space<vmem>>, vector<2x1x32xf32>
    tpu.vector_store %arg16[%c0_80, %c7, %c0_81], %265 {strides = array<i32>} : memref<2x8x32xf32, #tpu.memory_space<vmem>>, vector<2x1x32xf32>,
    %c0_82 = arith.constant 0 : index
    %c0_83 = arith.constant 0 : index
    %c0_84 = arith.constant 0 : index
    %267 = vector.load %arg16[%c0_82, %c0_83, %c0_84] : memref<2x8x32xf32, #tpu.memory_space<vmem>>, vector<2x8x32xf32>
    %268 = vector.shape_cast %267 : vector<2x8x32xf32> to vector<16x32xf32>
    %c0_85 = arith.constant 0 : index
    %c0_86 = arith.constant 0 : index
    %269 = vector.load %arg11[%c0_85, %c0_86] : memref<32x16xf32, #tpu.memory_space<vmem>>, vector<32x16xf32>
    %cst_87 = arith.constant dense<0.000000e+00> : vector<16x16xf32>
    %270 = tpu.matmul %268, %269, %cst_87 {dimension_numbers = #tpu.dot_dimension_numbers<[1], [0], [0], [1], [0, 0, 1, 1], [], []>} : vector<16x32xf32>, vector<32x16xf32>, vector<16x16xf32> -> vector<16x16xf32>
    %c0_88 = arith.constant 0 : index
    %c0_89 = arith.constant 0 : index
    %271 = vector.load %arg12[%c0_88, %c0_89] : memref<1x16xf32, #tpu.memory_space<vmem>>, vector<1x16xf32>
    %272 = vector.broadcast %271 : vector<1x16xf32> to vector<16x16xf32>
    %273 = arith.addf %270, %272 : vector<16x16xf32>
    %cst_90 = arith.constant 0.000000e+00 : f32
    %274 = vector.broadcast %cst_90 : f32 to vector<16x16xf32>
    %275 = arith.maximumf %273, %274 : vector<16x16xf32>
    %c0_91 = arith.constant 0 : index
    %c0_92 = arith.constant 0 : index
    %276 = vector.load %arg13[%c0_91, %c0_92] : memref<16x1xf32, #tpu.memory_space<vmem>>, vector<16x1xf32>
    %cst_93 = arith.constant dense<0.000000e+00> : vector<16x1xf32>
    %277 = tpu.matmul %275, %276, %cst_93 {dimension_numbers = #tpu.dot_dimension_numbers<[1], [0], [0], [1], [0, 0, 1, 1], [], []>} : vector<16x16xf32>, vector<16x1xf32>, vector<16x1xf32> -> vector<16x1xf32>
    %c0_94 = arith.constant 0 : index
    %c0_95 = arith.constant 0 : index
    %278 = vector.load %arg14[%c0_94, %c0_95] : memref<1x1xf32, #tpu.memory_space<vmem>>, vector<1x1xf32>
    %279 = vector.broadcast %278 : vector<1x1xf32> to vector<16x1xf32>
    %280 = arith.addf %277, %279 : vector<16x1xf32>
    %281 = math.tanh %280 : vector<16x1xf32>
    %282 = vector.shape_cast %281 : vector<16x1xf32> to vector<2x8x1xf32>
    %c0_96 = arith.constant 0 : index
    %c0_97 = arith.constant 0 : index
    %c0_98 = arith.constant 0 : index
    %283 = vector.load %arg15[%c0_96, %c0_97, %c0_98] : memref<2x8x1xf32, #tpu.memory_space<vmem>>, vector<2x8x1xf32>
    tpu.vector_store %arg15[%c0_96, %c0_97, %c0_98], %282 {strides = array<i32>} : memref<2x8x1xf32, #tpu.memory_space<vmem>>, vector<2x8x1xf32>,
    return
  }
}

</mosaic_0001>

<llo_original>
// kernel: tpu_custom_call.1
$region0: #{tpu_custom_call.1}
  #allocation0 [shape = 'u32[]', space=smem, size = 0x4, offset = 0x4, fixed_abs, tag = 'smem constant byte address 0x4 - core index']
  #allocation1 [shape = 'u32[144,128]{1,0:T(1,128)}', space=vmem, size = 0x12000, scoped, tag = 'internal scratch']
  #allocation2 [shape = 'f32[2,8,32]{2,1,0:T(8,128)}', space=vmem, size = 0x2000, scoped, tag = 'scratch operand']
  #allocation3 [shape = 'f32[1,1]{1,0:T(1,128)S(1)}', space=vmem, size = 0x200, scoped, tag = 'scoped memory for tpu_custom_call.1']
  %s0 = inlined_call_operand.hbm [shape: f32[2,8,8], index: 0, kind: input, shape index: {}]
  %s1 = inlined_call_operand.hbm [shape: f32[8,32], index: 1, kind: input, shape index: {}]
  %s2 = inlined_call_operand.hbm [shape: f32[8,32], index: 2, kind: input, shape index: {}]
  %s3 = inlined_call_operand.hbm [shape: f32[8,32], index: 3, kind: input, shape index: {}]
  %s4 = inlined_call_operand.vmem [shape: f32[32,32], index: 4, kind: input, shape index: {}]
  %s5 = inlined_call_operand.vmem [shape: f32[32,32], index: 5, kind: input, shape index: {}]
  %s6 = inlined_call_operand.hbm [shape: f32[32,32], index: 6, kind: input, shape index: {}]
  %s7 = inlined_call_operand.vmem [shape: f32[1,32], index: 7, kind: input, shape index: {}]
  %s8 = inlined_call_operand.hbm [shape: f32[1,32], index: 8, kind: input, shape index: {}]
  %s9 = inlined_call_operand.vmem [shape: f32[1,32], index: 9, kind: input, shape index: {}]
  %s10 = inlined_call_operand.vmem [shape: f32[1,32], index: 10, kind: input, shape index: {}]
  %s11 = inlined_call_operand.vmem [shape: f32[32,16], index: 11, kind: input, shape index: {}]
  %s12 = inlined_call_operand.vmem [shape: f32[1,16], index: 12, kind: input, shape index: {}]
  %s13 = inlined_call_operand.vmem [shape: f32[16,1], index: 13, kind: input, shape index: {}]
  %s14 = inlined_call_operand.<no memory space> [shape: f32[1,1], index: 14, kind: input, shape index: {}]
  %s15 = inlined_call_operand.vmem [shape: f32[2,8,1], index: 15, kind: output, shape index: {}]
  %s16 = sld [smem:[#allocation0]]
  $region94: #{tpu_custom_call.1} parent=0
    _
  %s18 = ssub.s32 1, %s16
  %s19 = scalar_select 0, %s18, %s16
  %v20 = vstv %s14
  %21 = vst [vmem:[#allocation3] sm:$0x1] %v20
  $region1: #{tpu_custom_call.1} parent=0
    #allocation4 [shape = 'u8[8192]{0}', space=vmem, size = 0x2000, scoped, tag = 'input window, operand 0, single buffered']
    #allocation5 [shape = 's32[1]{0}', space=sflag, size = 0x4, scoped, tag = 'scoped memory for tpu_custom_call.1']
    #allocation6 [shape = 'u8[4096]{0}', space=vmem, size = 0x1000, scoped, tag = 'input window, operand 1, single buffered']
    #allocation7 [shape = 's32[1]{0}', space=sflag, size = 0x4, scoped, tag = 'scoped memory for tpu_custom_call.1']
    #allocation8 [shape = 'u8[4096]{0}', space=vmem, size = 0x1000, scoped, tag = 'input window, operand 2, single buffered']
    #allocation9 [shape = 'u8[4096]{0}', space=vmem, size = 0x1000, scoped, tag = 'input window, operand 3, single buffered']
    #allocation10 [shape = 's32[1]{0}', space=sflag, size = 0x4, scoped, tag = 'scoped memory for tpu_custom_call.1']
    #allocation11 [shape = 'u8[16384]{0}', space=vmem, size = 0x4000, scoped, tag = 'input window, operand 6, single buffered']
    #allocation12 [shape = 'u8[512]{0}', space=vmem, size = 0x400, scoped, tag = 'input window, operand 8, single buffered']
    #allocation13 [shape = 's32[1]{0}', space=sflag, size = 0x4, scoped, tag = 'scoped memory for tpu_custom_call.1']
    %22 = vsyncpa [#allocation5], 0
    %23 = vsyncpa [#allocation7], 0
    %24 = vsyncpa [#allocation10], 0
    %25 = vsyncpa [#allocation13], 0
    // Predicated region
    $region2: #{tpu_custom_call.1} parent=1 // pred_check
      _
    $region3: #{tpu_custom_call.1} parent=1 // pred_check_branch
      %27 = sbr.rel (0) target = $region5
    $region4: #{tpu_custom_call.1} parent=1 // pred_region
      %s29 = ssub.s32 256, 256
      %30 = vsyncadd [#allocation5], %s29
      %s31 = sshll.u32 [#allocation4], 4
      %s32 = int_to_ptr.vmem [resolvable:$true] %s31
      %37 = dma.hbm_to_vmem [thread:$0]  %s0, 256, %s32, [#allocation5], 128, 128, 8
    $region5: #{tpu_custom_call.1} parent=1 // pred_fallthru
      _
    // Predicated region
    $region6: #{tpu_custom_call.1} parent=1 // pred_check
      _
    $region7: #{tpu_custom_call.1} parent=1 // pred_check_branch
      %39 = sbr.rel (0) target = $region9
    $region8: #{tpu_custom_call.1} parent=1 // pred_region
      %s41 = ssub.s32 128, 128
      %42 = vsyncadd [#allocation7], %s41
      %s44 = sshll.u32 [#allocation6], 4
      %s45 = int_to_ptr.vmem [resolvable:$true] %s44
      %47 = dma.hbm_to_vmem [thread:$0]  %s1, 128, %s45, [#allocation7]
    $region9: #{tpu_custom_call.1} parent=1 // pred_fallthru
      _
    // Predicated region
    $region10: #{tpu_custom_call.1} parent=1 // pred_check
      _
    $region11: #{tpu_custom_call.1} parent=1 // pred_check_branch
      %49 = sbr.rel (0) target = $region13
    $region12: #{tpu_custom_call.1} parent=1 // pred_region
      %s51 = ssub.s32 128, 128
      %52 = vsyncadd [#allocation7], %s51
      %s54 = sshll.u32 [#allocation8], 4
      %s55 = int_to_ptr.vmem [resolvable:$true] %s54
      %57 = dma.hbm_to_vmem [thread:$0]  %s2, 128, %s55, [#allocation7]
    $region13: #{tpu_custom_call.1} parent=1 // pred_fallthru
      _
    // Predicated region
    $region14: #{tpu_custom_call.1} parent=1 // pred_check
      _
    $region15: #{tpu_custom_call.1} parent=1 // pred_check_branch
      %59 = sbr.rel (0) target = $region17
    $region16: #{tpu_custom_call.1} parent=1 // pred_region
      %s61 = ssub.s32 128, 128
      %62 = vsyncadd [#allocation10], %s61
      %s64 = sshll.u32 [#allocation9], 4
      %s65 = int_to_ptr.vmem [resolvable:$true] %s64
      %67 = dma.hbm_to_vmem [thread:$0]  %s3, 128, %s65, [#allocation10]
    $region17: #{tpu_custom_call.1} parent=1 // pred_fallthru
      _
    // Predicated region
    $region18: #{tpu_custom_call.1} parent=1 // pred_check
      _
    $region19: #{tpu_custom_call.1} parent=1 // pred_check_branch
      %69 = sbr.rel (0) target = $region21
    $region20: #{tpu_custom_call.1} parent=1 // pred_region
      _
    $region21: #{tpu_custom_call.1} parent=1 // pred_fallthru
      _
    // Predicated region
    $region22: #{tpu_custom_call.1} parent=1 // pred_check
      _
    $region23: #{tpu_custom_call.1} parent=1 // pred_check_branch
      %71 = sbr.rel (0) target = $region25
    $region24: #{tpu_custom_call.1} parent=1 // pred_region
      _
    $region25: #{tpu_custom_call.1} parent=1 // pred_fallthru
      _
    // Predicated region
    $region26: #{tpu_custom_call.1} parent=1 // pred_check
      _
    $region27: #{tpu_custom_call.1} parent=1 // pred_check_branch
      %73 = sbr.rel (0) target = $region29
    $region28: #{tpu_custom_call.1} parent=1 // pred_region
      %s75 = ssub.s32 512, 512
      %76 = vsyncadd [#allocation10], %s75
      %s77 = sshll.u32 [#allocation11], 4
      %s78 = int_to_ptr.vmem [resolvable:$true] %s77
      %83 = dma.hbm_to_vmem [thread:$0]  %s6, 512, %s78, [#allocation10], 128, 128, 8
    $region29: #{tpu_custom_call.1} parent=1 // pred_fallthru
      _
    // Predicated region
    $region30: #{tpu_custom_call.1} parent=1 // pred_check
      _
    $region31: #{tpu_custom_call.1} parent=1 // pred_check_branch
      %85 = sbr.rel (0) target = $region33
    $region32: #{tpu_custom_call.1} parent=1 // pred_region
      _
    $region33: #{tpu_custom_call.1} parent=1 // pred_fallthru
      _
    // Predicated region
    $region34: #{tpu_custom_call.1} parent=1 // pred_check
      _
    $region35: #{tpu_custom_call.1} parent=1 // pred_check_branch
      %87 = sbr.rel (0) target = $region37
    $region36: #{tpu_custom_call.1} parent=1 // pred_region
      %s89 = ssub.s32 16, 16
      %90 = vsyncadd [#allocation13], %s89
      %s92 = sshll.u32 [#allocation12], 4
      %s93 = int_to_ptr.vmem [resolvable:$true] %s92
      %95 = dma.hbm_to_vmem [thread:$0]  %s8, 16, %s93, [#allocation13]
    $region37: #{tpu_custom_call.1} parent=1 // pred_fallthru
      _
    // Predicated region
    $region38: #{tpu_custom_call.1} parent=1 // pred_check
      _
    $region39: #{tpu_custom_call.1} parent=1 // pred_check_branch
      %97 = sbr.rel (0) target = $region41
    $region40: #{tpu_custom_call.1} parent=1 // pred_region
      _
    $region41: #{tpu_custom_call.1} parent=1 // pred_fallthru
      _
    // Predicated region
    $region42: #{tpu_custom_call.1} parent=1 // pred_check
      _
    $region43: #{tpu_custom_call.1} parent=1 // pred_check_branch
      %99 = sbr.rel (0) target = $region45
    $region44: #{tpu_custom_call.1} parent=1 // pred_region
      _
    $region45: #{tpu_custom_call.1} parent=1 // pred_fallthru
      _
    // Predicated region
    $region46: #{tpu_custom_call.1} parent=1 // pred_check
      _
    $region47: #{tpu_custom_call.1} parent=1 // pred_check_branch
      %101 = sbr.rel (0) target = $region49
    $region48: #{tpu_custom_call.1} parent=1 // pred_region
      _
    $region49: #{tpu_custom_call.1} parent=1 // pred_fallthru
      _
    // Predicated region
    $region50: #{tpu_custom_call.1} parent=1 // pred_check
      _
    $region51: #{tpu_custom_call.1} parent=1 // pred_check_branch
      %103 = sbr.rel (0) target = $region53
    $region52: #{tpu_custom_call.1} parent=1 // pred_region
      _
    $region53: #{tpu_custom_call.1} parent=1 // pred_fallthru
      _
    // Predicated region
    $region54: #{tpu_custom_call.1} parent=1 // pred_check
      _
    $region55: #{tpu_custom_call.1} parent=1 // pred_check_branch
      %105 = sbr.rel (0) target = $region57
    $region56: #{tpu_custom_call.1} parent=1 // pred_region
      _
    $region57: #{tpu_custom_call.1} parent=1 // pred_fallthru
      _
    // Predicated region
    $region58: #{tpu_custom_call.1} parent=1 // pred_check
      _
    $region59: #{tpu_custom_call.1} parent=1 // pred_check_branch
      %107 = sbr.rel (0) target = $region61
    $region60: #{tpu_custom_call.1} parent=1 // pred_region
      _
    $region61: #{tpu_custom_call.1} parent=1 // pred_fallthru
      _
    // Predicated region
    $region62: #{tpu_custom_call.1} parent=1 // pred_check
      _
    $region63: #{tpu_custom_call.1} parent=1 // pred_check_branch
      %109 = sbr.rel (0) target = $region65
    $region64: #{tpu_custom_call.1} parent=1 // pred_region
      %110 = dma.done [#allocation5], 256
    $region65: #{tpu_custom_call.1} parent=1 // pred_fallthru
      _
    // Predicated region
    $region66: #{tpu_custom_call.1} parent=1 // pred_check
      _
    $region67: #{tpu_custom_call.1} parent=1 // pred_check_branch
      %112 = sbr.rel (0) target = $region69
    $region68: #{tpu_custom_call.1} parent=1 // pred_region
      %113 = dma.done [#allocation7], 128
    $region69: #{tpu_custom_call.1} parent=1 // pred_fallthru
      _
    // Predicated region
    $region70: #{tpu_custom_call.1} parent=1 // pred_check
      _
    $region71: #{tpu_custom_call.1} parent=1 // pred_check_branch
      %115 = sbr.rel (0) target = $region73
    $region72: #{tpu_custom_call.1} parent=1 // pred_region
      %116 = dma.done [#allocation7], 128
    $region73: #{tpu_custom_call.1} parent=1 // pred_fallthru
      _
    // Predicated region
    $region74: #{tpu_custom_call.1} parent=1 // pred_check
      _
    $region75: #{tpu_custom_call.1} parent=1 // pred_check_branch
      %118 = sbr.rel (0) target = $region77
    $region76: #{tpu_custom_call.1} parent=1 // pred_region
      %119 = dma.done [#allocation10], 128
    $region77: #{tpu_custom_call.1} parent=1 // pred_fallthru
      _
    // Predicated region
    $region78: #{tpu_custom_call.1} parent=1 // pred_check
      _
    $region79: #{tpu_custom_call.1} parent=1 // pred_check_branch
      %121 = sbr.rel (0) target = $region81
    $region80: #{tpu_custom_call.1} parent=1 // pred_region
      %122 = dma.done [#allocation10], 512
    $region81: #{tpu_custom_call.1} parent=1 // pred_fallthru
      _
    // Predicated region
    $region82: #{tpu_custom_call.1} parent=1 // pred_check
      _
    $region83: #{tpu_custom_call.1} parent=1 // pred_check_branch
      %124 = sbr.rel (0) target = $region85
    $region84: #{tpu_custom_call.1} parent=1 // pred_region
      %125 = dma.done [#allocation13], 16
    $region85: #{tpu_custom_call.1} parent=1 // pred_fallthru
      _
    %v126 = vld [vmem:[#allocation4] sm:$0xff]
    %v127 = vld [vmem:[#allocation4 + $0x8] sm:$0xff]
    %v128 = vld [vmem:[#allocation6] sm:$0xff]
    %v129 = vld [vmem:[%s7] sm:$0x1]
    %v131 = vlaneseq
    %v132 = vshrl.u32 %v131, 7
    %v133 = vsub.s32 0, %v132
    %v134 = vrot.slane %v129, %v133
    %vm136 = vcmask 64512
    %v138 = vsel %vm136, %v126, 0
    %v141 = vsel %vm136, %v127, 0
    %143 = vmatprep.subr.mxu0 0.0
    %144 = vmatpush1.msra.mxu0 0.0
    %145 = vmatprep.subr.mxu0 0.0
    %146 = vmatpush1.msra.mxu0 0.0
    %147 = vmatprep.subr.mxu0 0.0
    %148 = vmatpush1.msra.mxu0 0.0
    %149 = vmatprep.subr.mxu0 0.0
    %150 = vmatpush1.msra.mxu0 0.0
    %151 = vmatprep.subr.mxu0 0.0
    %152 = vmatpush1.msra.mxu0 0.0
    %153 = vmatprep.subr.mxu0 0.0
    %154 = vmatpush1.msra.mxu0 0.0
    %155 = vmatprep.subr.mxu0 0.0
    %156 = vmatpush1.msra.mxu0 0.0
    %157 = vmatprep.subr.mxu0 0.0
    %158 = vmatpush1.msra.mxu0 0.0
    %159 = vmatprep.subr.mxu0 0.0
    %160 = vmatpush1.msra.mxu0 0.0
    %161 = vmatprep.subr.mxu0 0.0
    %162 = vmatpush1.msra.mxu0 0.0
    %163 = vmatprep.subr.mxu0 0.0
    %164 = vmatpush1.msra.mxu0 0.0
    %165 = vmatprep.subr.mxu0 0.0
    %166 = vmatpush1.msra.mxu0 0.0
    %167 = vmatprep.subr.mxu0 0.0
    %168 = vmatpush1.msra.mxu0 0.0
    %169 = vmatprep.subr.mxu0 0.0
    %170 = vmatpush1.msra.mxu0 0.0
    %171 = vmatprep.subr.mxu0 0.0
    %172 = vmatpush1.msra.mxu0 0.0
    %173 = vmatprep.subr.mxu0 0.0
    %174 = vmatpush1.msra.mxu0 %v128
    %175 = vmatprep.subr.mxu0 0.0
    %176 = vmatpush2.msra.mxu0 0.0
    %177 = vmatprep.subr.mxu0 0.0
    %178 = vmatpush2.msra.mxu0 0.0
    %179 = vmatprep.subr.mxu0 0.0
    %180 = vmatpush2.msra.mxu0 0.0
    %181 = vmatprep.subr.mxu0 0.0
    %182 = vmatpush2.msra.mxu0 0.0
    %183 = vmatprep.subr.mxu0 0.0
    %184 = vmatpush2.msra.mxu0 0.0
    %185 = vmatprep.subr.mxu0 0.0
    %186 = vmatpush2.msra.mxu0 0.0
    %187 = vmatprep.subr.mxu0 0.0
    %188 = vmatpush2.msra.mxu0 0.0
    %189 = vmatprep.subr.mxu0 0.0
    %190 = vmatpush2.msra.mxu0 0.0
    %191 = vmatprep.subr.mxu0 0.0
    %192 = vmatpush2.msra.mxu0 0.0
    %193 = vmatprep.subr.mxu0 0.0
    %194 = vmatpush2.msra.mxu0 0.0
    %195 = vmatprep.subr.mxu0 0.0
    %196 = vmatpush2.msra.mxu0 0.0
    %197 = vmatprep.subr.mxu0 0.0
    %198 = vmatpush2.msra.mxu0 0.0
    %199 = vmatprep.subr.mxu0 0.0
    %200 = vmatpush2.msra.mxu0 0.0
    %201 = vmatprep.subr.mxu0 0.0
    %202 = vmatpush2.msra.mxu0 0.0
    %203 = vmatprep.subr.mxu0 0.0
    %204 = vmatpush2.msra.mxu0 0.0
    %205 = vmatprep.subr.mxu0 0.0
    %206 = vmatpush2.msra.mxu0 0.0
    %207 = vmatprep.mubr.f32.mxu0 0.0
    %208 = vmatmul.mubr.f32.gmra.mxu0 %v138
    %v209 = vpop.f32.mrf.mxu0
    %v210 = vadd.f32 %v134, %v209
    %v211 = vpop.f32.mrf.mxu0
    %212 = vmatprep.mubr.f32.mxu0 0.0
    %213 = vmatmul.mubr.f32.gmra.mxu0 %v141
    %v214 = vpop.f32.mrf.mxu0
    %v215 = vadd.f32 %v134, %v214
    %v216 = vpop.f32.mrf.mxu0
    %217 = vdwg.mxu0
    %v218 = vld [vmem:[#allocation8] sm:$0xff]
    %v219 = vld [vmem:[#allocation12] sm:$0x1]
    %v221 = vlaneseq
    %v222 = vshrl.u32 %v221, 7
    %v223 = vsub.s32 0, %v222
    %v224 = vrot.slane %v219, %v223
    %226 = vmatprep.subr.mxu0 0.0
    %227 = vmatpush1.msra.mxu0 0.0
    %228 = vmatprep.subr.mxu0 0.0
    %229 = vmatpush1.msra.mxu0 0.0
    %230 = vmatprep.subr.mxu0 0.0
    %231 = vmatpush1.msra.mxu0 0.0
    %232 = vmatprep.subr.mxu0 0.0
    %233 = vmatpush1.msra.mxu0 0.0
    %234 = vmatprep.subr.mxu0 0.0
    %235 = vmatpush1.msra.mxu0 0.0
    %236 = vmatprep.subr.mxu0 0.0
    %237 = vmatpush1.msra.mxu0 0.0
    %238 = vmatprep.subr.mxu0 0.0
    %239 = vmatpush1.msra.mxu0 0.0
    %240 = vmatprep.subr.mxu0 0.0
    %241 = vmatpush1.msra.mxu0 0.0
    %242 = vmatprep.subr.mxu0 0.0
    %243 = vmatpush1.msra.mxu0 0.0
    %244 = vmatprep.subr.mxu0 0.0
    %245 = vmatpush1.msra.mxu0 0.0
    %246 = vmatprep.subr.mxu0 0.0
    %247 = vmatpush1.msra.mxu0 0.0
    %248 = vmatprep.subr.mxu0 0.0
    %249 = vmatpush1.msra.mxu0 0.0
    %250 = vmatprep.subr.mxu0 0.0
    %251 = vmatpush1.msra.mxu0 0.0
    %252 = vmatprep.subr.mxu0 0.0
    %253 = vmatpush1.msra.mxu0 0.0
    %254 = vmatprep.subr.mxu0 0.0
    %255 = vmatpush1.msra.mxu0 0.0
    %256 = vmatprep.subr.mxu0 0.0
    %257 = vmatpush1.msra.mxu0 %v218
    %258 = vmatprep.subr.mxu0 0.0
    %259 = vmatpush2.msra.mxu0 0.0
    %260 = vmatprep.subr.mxu0 0.0
    %261 = vmatpush2.msra.mxu0 0.0
    %262 = vmatprep.subr.mxu0 0.0
    %263 = vmatpush2.msra.mxu0 0.0
    %264 = vmatprep.subr.mxu0 0.0
    %265 = vmatpush2.msra.mxu0 0.0
    %266 = vmatprep.subr.mxu0 0.0
    %267 = vmatpush2.msra.mxu0 0.0
    %268 = vmatprep.subr.mxu0 0.0
    %269 = vmatpush2.msra.mxu0 0.0
    %270 = vmatprep.subr.mxu0 0.0
    %271 = vmatpush2.msra.mxu0 0.0
    %272 = vmatprep.subr.mxu0 0.0
    %273 = vmatpush2.msra.mxu0 0.0
    %274 = vmatprep.subr.mxu0 0.0
    %275 = vmatpush2.msra.mxu0 0.0
    %276 = vmatprep.subr.mxu0 0.0
    %277 = vmatpush2.msra.mxu0 0.0
    %278 = vmatprep.subr.mxu0 0.0
    %279 = vmatpush2.msra.mxu0 0.0
    %280 = vmatprep.subr.mxu0 0.0
    %281 = vmatpush2.msra.mxu0 0.0
    %282 = vmatprep.subr.mxu0 0.0
    %283 = vmatpush2.msra.mxu0 0.0
    %284 = vmatprep.subr.mxu0 0.0
    %285 = vmatpush2.msra.mxu0 0.0
    %286 = vmatprep.subr.mxu0 0.0
    %287 = vmatpush2.msra.mxu0 0.0
    %288 = vmatprep.subr.mxu0 0.0
    %289 = vmatpush2.msra.mxu0 0.0
    %290 = vmatprep.mubr.f32.mxu0 0.0
    %291 = vmatmul.mubr.f32.gmra.mxu0 %v138
    %v292 = vpop.f32.mrf.mxu0
    %v293 = vadd.f32 %v224, %v292
    %v294 = vpop.f32.mrf.mxu0
    %295 = vmatprep.mubr.f32.mxu0 0.0
    %296 = vmatmul.mubr.f32.gmra.mxu0 %v141
    %v297 = vpop.f32.mrf.mxu0
    %v298 = vadd.f32 %v224, %v297
    %v299 = vpop.f32.mrf.mxu0
    %300 = vdwg.mxu0
    %v301 = vld [vmem:[#allocation9] sm:$0xff]
    %v302 = vld [vmem:[%s9] sm:$0x1]
    %v304 = vlaneseq
    %v305 = vshrl.u32 %v304, 7
    %v306 = vsub.s32 0, %v305
    %v307 = vrot.slane %v302, %v306
    %309 = vmatprep.subr.mxu0 0.0
    %310 = vmatpush1.msra.mxu0 0.0
    %311 = vmatprep.subr.mxu0 0.0
    %312 = vmatpush1.msra.mxu0 0.0
    %313 = vmatprep.subr.mxu0 0.0
    %314 = vmatpush1.msra.mxu0 0.0
    %315 = vmatprep.subr.mxu0 0.0
    %316 = vmatpush1.msra.mxu0 0.0
    %317 = vmatprep.subr.mxu0 0.0
    %318 = vmatpush1.msra.mxu0 0.0
    %319 = vmatprep.subr.mxu0 0.0
    %320 = vmatpush1.msra.mxu0 0.0
    %321 = vmatprep.subr.mxu0 0.0
    %322 = vmatpush1.msra.mxu0 0.0
    %323 = vmatprep.subr.mxu0 0.0
    %324 = vmatpush1.msra.mxu0 0.0
    %325 = vmatprep.subr.mxu0 0.0
    %326 = vmatpush1.msra.mxu0 0.0
    %327 = vmatprep.subr.mxu0 0.0
    %328 = vmatpush1.msra.mxu0 0.0
    %329 = vmatprep.subr.mxu0 0.0
    %330 = vmatpush1.msra.mxu0 0.0
    %331 = vmatprep.subr.mxu0 0.0
    %332 = vmatpush1.msra.mxu0 0.0
    %333 = vmatprep.subr.mxu0 0.0
    %334 = vmatpush1.msra.mxu0 0.0
    %335 = vmatprep.subr.mxu0 0.0
    %336 = vmatpush1.msra.mxu0 0.0
    %337 = vmatprep.subr.mxu0 0.0
    %338 = vmatpush1.msra.mxu0 0.0
    %339 = vmatprep.subr.mxu0 0.0
    %340 = vmatpush1.msra.mxu0 %v301
    %341 = vmatprep.subr.mxu0 0.0
    %342 = vmatpush2.msra.mxu0 0.0
    %343 = vmatprep.subr.mxu0 0.0
    %344 = vmatpush2.msra.mxu0 0.0
    %345 = vmatprep.subr.mxu0 0.0
    %346 = vmatpush2.msra.mxu0 0.0
    %347 = vmatprep.subr.mxu0 0.0
    %348 = vmatpush2.msra.mxu0 0.0
    %349 = vmatprep.subr.mxu0 0.0
    %350 = vmatpush2.msra.mxu0 0.0
    %351 = vmatprep.subr.mxu0 0.0
    %352 = vmatpush2.msra.mxu0 0.0
    %353 = vmatprep.subr.mxu0 0.0
    %354 = vmatpush2.msra.mxu0 0.0
    %355 = vmatprep.subr.mxu0 0.0
    %356 = vmatpush2.msra.mxu0 0.0
    %357 = vmatprep.subr.mxu0 0.0
    %358 = vmatpush2.msra.mxu0 0.0
    %359 = vmatprep.subr.mxu0 0.0
    %360 = vmatpush2.msra.mxu0 0.0
    %361 = vmatprep.subr.mxu0 0.0
    %362 = vmatpush2.msra.mxu0 0.0
    %363 = vmatprep.subr.mxu0 0.0
    %364 = vmatpush2.msra.mxu0 0.0
    %365 = vmatprep.subr.mxu0 0.0
    %366 = vmatpush2.msra.mxu0 0.0
    %367 = vmatprep.subr.mxu0 0.0
    %368 = vmatpush2.msra.mxu0 0.0
    %369 = vmatprep.subr.mxu0 0.0
    %370 = vmatpush2.msra.mxu0 0.0
    %371 = vmatprep.subr.mxu0 0.0
    %372 = vmatpush2.msra.mxu0 0.0
    %373 = vmatprep.mubr.f32.mxu0 0.0
    %374 = vmatmul.mubr.f32.gmra.mxu0 %v138
    %v375 = vpop.f32.mrf.mxu0
    %v376 = vadd.f32 %v307, %v375
    %v377 = vpop.f32.mrf.mxu0
    %378 = vmatprep.mubr.f32.mxu0 0.0
    %379 = vmatmul.mubr.f32.gmra.mxu0 %v141
    %v380 = vpop.f32.mrf.mxu0
    %v381 = vadd.f32 %v307, %v380
    %v382 = vpop.f32.mrf.mxu0
    %383 = vdwg.mxu0
    %v384 = vld [vmem:[%s4] sm:$0xff]
    %v385 = vld [vmem:[%s4 + $0x8] sm:$0xff]
    %v386 = vld [vmem:[%s4 + $0x10] sm:$0xff]
    %v387 = vld [vmem:[%s4 + $0x18] sm:$0xff]
    %v388 = vld [vmem:[%s5] sm:$0xff]
    %v389 = vld [vmem:[%s5 + $0x8] sm:$0xff]
    %v390 = vld [vmem:[%s5 + $0x10] sm:$0xff]
    %v391 = vld [vmem:[%s5 + $0x18] sm:$0xff]
    %v392 = vld [vmem:[#allocation11] sm:$0xff]
    %v393 = vld [vmem:[#allocation11 + $0x8] sm:$0xff]
    %v394 = vld [vmem:[#allocation11 + $0x10] sm:$0xff]
    %v395 = vld [vmem:[#allocation11 + $0x18] sm:$0xff]
    %v396 = vld [vmem:[%s10] sm:$0x1]
    %v398 = vlaneseq
    %v399 = vshrl.u32 %v398, 7
    %v400 = vsub.s32 0, %v399
    %v401 = vrot.slane %v396, %v400
    %vm403 = vcmask 261120
    %v405 = vsel %vm403, 0.0, 0
    %407 = vmatprep.subr.mxu0 0.0
    %408 = vmatpush1.msra.mxu0 0.0
    %409 = vmatprep.subr.mxu0 0.0
    %410 = vmatpush1.msra.mxu0 0.0
    %411 = vmatprep.subr.mxu0 0.0
    %412 = vmatpush1.msra.mxu0 0.0
    %413 = vmatprep.subr.mxu0 0.0
    %414 = vmatpush1.msra.mxu0 0.0
    %415 = vmatprep.subr.mxu0 0.0
    %416 = vmatpush1.msra.mxu0 0.0
    %417 = vmatprep.subr.mxu0 0.0
    %418 = vmatpush1.msra.mxu0 0.0
    %419 = vmatprep.subr.mxu0 0.0
    %420 = vmatpush1.msra.mxu0 0.0
    %421 = vmatprep.subr.mxu0 0.0
    %422 = vmatpush1.msra.mxu0 0.0
    %423 = vmatprep.subr.mxu0 0.0
    %424 = vmatpush1.msra.mxu0 0.0
    %425 = vmatprep.subr.mxu0 0.0
    %426 = vmatpush1.msra.mxu0 0.0
    %427 = vmatprep.subr.mxu0 0.0
    %428 = vmatpush1.msra.mxu0 0.0
    %429 = vmatprep.subr.mxu0 0.0
    %430 = vmatpush1.msra.mxu0 0.0
    %431 = vmatprep.subr.mxu0 0.0
    %432 = vmatpush1.msra.mxu0 %v387
    %433 = vmatprep.subr.mxu0 0.0
    %434 = vmatpush1.msra.mxu0 %v386
    %435 = vmatprep.subr.mxu0 0.0
    %436 = vmatpush1.msra.mxu0 %v385
    %437 = vmatprep.subr.mxu0 0.0
    %438 = vmatpush1.msra.mxu0 %v384
    %439 = vmatprep.subr.mxu0 0.0
    %440 = vmatpush2.msra.mxu0 0.0
    %441 = vmatprep.subr.mxu0 0.0
    %442 = vmatpush2.msra.mxu0 0.0
    %443 = vmatprep.subr.mxu0 0.0
    %444 = vmatpush2.msra.mxu0 0.0
    %445 = vmatprep.subr.mxu0 0.0
    %446 = vmatpush2.msra.mxu0 0.0
    %447 = vmatprep.subr.mxu0 0.0
    %448 = vmatpush2.msra.mxu0 0.0
    %449 = vmatprep.subr.mxu0 0.0
    %450 = vmatpush2.msra.mxu0 0.0
    %451 = vmatprep.subr.mxu0 0.0
    %452 = vmatpush2.msra.mxu0 0.0
    %453 = vmatprep.subr.mxu0 0.0
    %454 = vmatpush2.msra.mxu0 0.0
    %455 = vmatprep.subr.mxu0 0.0
    %456 = vmatpush2.msra.mxu0 0.0
    %457 = vmatprep.subr.mxu0 0.0
    %458 = vmatpush2.msra.mxu0 0.0
    %459 = vmatprep.subr.mxu0 0.0
    %460 = vmatpush2.msra.mxu0 0.0
    %461 = vmatprep.subr.mxu0 0.0
    %462 = vmatpush2.msra.mxu0 0.0
    %463 = vmatprep.subr.mxu0 0.0
    %464 = vmatpush2.msra.mxu0 0.0
    %465 = vmatprep.subr.mxu0 0.0
    %466 = vmatpush2.msra.mxu0 0.0
    %467 = vmatprep.subr.mxu0 0.0
    %468 = vmatpush2.msra.mxu0 0.0
    %469 = vmatprep.subr.mxu0 0.0
    %470 = vmatpush2.msra.mxu0 0.0
    %471 = vmatprep.mubr.f32.mxu0 0.0
    %472 = vmatmul.mubr.f32.gmra.mxu0 %v405
    %v473 = vpop.f32.mrf.mxu0
    %v474 = vadd.f32 0.0, %v473
    %v475 = vpop.f32.mrf.mxu0
    %476 = vdwg.mxu0
    %477 = vmatprep.subr.mxu0 0.0
    %478 = vmatpush1.msra.mxu0 0.0
    %479 = vmatprep.subr.mxu0 0.0
    %480 = vmatpush1.msra.mxu0 0.0
    %481 = vmatprep.subr.mxu0 0.0
    %482 = vmatpush1.msra.mxu0 0.0
    %483 = vmatprep.subr.mxu0 0.0
    %484 = vmatpush1.msra.mxu0 0.0
    %485 = vmatprep.subr.mxu0 0.0
    %486 = vmatpush1.msra.mxu0 0.0
    %487 = vmatprep.subr.mxu0 0.0
    %488 = vmatpush1.msra.mxu0 0.0
    %489 = vmatprep.subr.mxu0 0.0
    %490 = vmatpush1.msra.mxu0 0.0
    %491 = vmatprep.subr.mxu0 0.0
    %492 = vmatpush1.msra.mxu0 0.0
    %493 = vmatprep.subr.mxu0 0.0
    %494 = vmatpush1.msra.mxu0 0.0
    %495 = vmatprep.subr.mxu0 0.0
    %496 = vmatpush1.msra.mxu0 0.0
    %497 = vmatprep.subr.mxu0 0.0
    %498 = vmatpush1.msra.mxu0 0.0
    %499 = vmatprep.subr.mxu0 0.0
    %500 = vmatpush1.msra.mxu0 0.0
    %501 = vmatprep.subr.mxu0 0.0
    %502 = vmatpush1.msra.mxu0 %v391
    %503 = vmatprep.subr.mxu0 0.0
    %504 = vmatpush1.msra.mxu0 %v390
    %505 = vmatprep.subr.mxu0 0.0
    %506 = vmatpush1.msra.mxu0 %v389
    %507 = vmatprep.subr.mxu0 0.0
    %508 = vmatpush1.msra.mxu0 %v388
    %509 = vmatprep.subr.mxu0 0.0
    %510 = vmatpush2.msra.mxu0 0.0
    %511 = vmatprep.subr.mxu0 0.0
    %512 = vmatpush2.msra.mxu0 0.0
    %513 = vmatprep.subr.mxu0 0.0
    %514 = vmatpush2.msra.mxu0 0.0
    %515 = vmatprep.subr.mxu0 0.0
    %516 = vmatpush2.msra.mxu0 0.0
    %517 = vmatprep.subr.mxu0 0.0
    %518 = vmatpush2.msra.mxu0 0.0
    %519 = vmatprep.subr.mxu0 0.0
    %520 = vmatpush2.msra.mxu0 0.0
    %521 = vmatprep.subr.mxu0 0.0
    %522 = vmatpush2.msra.mxu0 0.0
    %523 = vmatprep.subr.mxu0 0.0
    %524 = vmatpush2.msra.mxu0 0.0
    %525 = vmatprep.subr.mxu0 0.0
    %526 = vmatpush2.msra.mxu0 0.0
    %527 = vmatprep.subr.mxu0 0.0
    %528 = vmatpush2.msra.mxu0 0.0
    %529 = vmatprep.subr.mxu0 0.0
    %530 = vmatpush2.msra.mxu0 0.0
    %531 = vmatprep.subr.mxu0 0.0
    %532 = vmatpush2.msra.mxu0 0.0
    %533 = vmatprep.subr.mxu0 0.0
    %534 = vmatpush2.msra.mxu0 0.0
    %535 = vmatprep.subr.mxu0 0.0
    %536 = vmatpush2.msra.mxu0 0.0
    %537 = vmatprep.subr.mxu0 0.0
    %538 = vmatpush2.msra.mxu0 0.0
    %539 = vmatprep.subr.mxu0 0.0
    %540 = vmatpush2.msra.mxu0 0.0
    %541 = vmatprep.mubr.f32.mxu0 0.0
    %542 = vmatmul.mubr.f32.gmra.mxu0 %v405
    %v543 = vpop.f32.mrf.mxu0
    %v544 = vadd.f32 0.0, %v543
    %v545 = vpop.f32.mrf.mxu0
    %546 = vdwg.mxu0
    %547 = vmatprep.subr.mxu0 0.0
    %548 = vmatpush1.msra.mxu0 0.0
    %549 = vmatprep.subr.mxu0 0.0
    %550 = vmatpush1.msra.mxu0 0.0
    %551 = vmatprep.subr.mxu0 0.0
    %552 = vmatpush1.msra.mxu0 0.0
    %553 = vmatprep.subr.mxu0 0.0
    %554 = vmatpush1.msra.mxu0 0.0
    %555 = vmatprep.subr.mxu0 0.0
    %556 = vmatpush1.msra.mxu0 0.0
    %557 = vmatprep.subr.mxu0 0.0
    %558 = vmatpush1.msra.mxu0 0.0
    %559 = vmatprep.subr.mxu0 0.0
    %560 = vmatpush1.msra.mxu0 0.0
    %561 = vmatprep.subr.mxu0 0.0
    %562 = vmatpush1.msra.mxu0 0.0
    %563 = vmatprep.subr.mxu0 0.0
    %564 = vmatpush1.msra.mxu0 0.0
    %565 = vmatprep.subr.mxu0 0.0
    %566 = vmatpush1.msra.mxu0 0.0
    %567 = vmatprep.subr.mxu0 0.0
    %568 = vmatpush1.msra.mxu0 0.0
    %569 = vmatprep.subr.mxu0 0.0
    %570 = vmatpush1.msra.mxu0 0.0
    %571 = vmatprep.subr.mxu0 0.0
    %572 = vmatpush1.msra.mxu0 %v395
    %573 = vmatprep.subr.mxu0 0.0
    %574 = vmatpush1.msra.mxu0 %v394
    %575 = vmatprep.subr.mxu0 0.0
    %576 = vmatpush1.msra.mxu0 %v393
    %577 = vmatprep.subr.mxu0 0.0
    %578 = vmatpush1.msra.mxu0 %v392
    %579 = vmatprep.subr.mxu0 0.0
    %580 = vmatpush2.msra.mxu0 0.0
    %581 = vmatprep.subr.mxu0 0.0
    %582 = vmatpush2.msra.mxu0 0.0
    %583 = vmatprep.subr.mxu0 0.0
    %584 = vmatpush2.msra.mxu0 0.0
    %585 = vmatprep.subr.mxu0 0.0
    %586 = vmatpush2.msra.mxu0 0.0
    %587 = vmatprep.subr.mxu0 0.0
    %588 = vmatpush2.msra.mxu0 0.0
    %589 = vmatprep.subr.mxu0 0.0
    %590 = vmatpush2.msra.mxu0 0.0
    %591 = vmatprep.subr.mxu0 0.0
    %592 = vmatpush2.msra.mxu0 0.0
    %593 = vmatprep.subr.mxu0 0.0
    %594 = vmatpush2.msra.mxu0 0.0
    %595 = vmatprep.subr.mxu0 0.0
    %596 = vmatpush2.msra.mxu0 0.0
    %597 = vmatprep.subr.mxu0 0.0
    %598 = vmatpush2.msra.mxu0 0.0
    %599 = vmatprep.subr.mxu0 0.0
    %600 = vmatpush2.msra.mxu0 0.0
    %601 = vmatprep.subr.mxu0 0.0
    %602 = vmatpush2.msra.mxu0 0.0
    %603 = vmatprep.subr.mxu0 0.0
    %604 = vmatpush2.msra.mxu0 0.0
    %605 = vmatprep.subr.mxu0 0.0
    %606 = vmatpush2.msra.mxu0 0.0
    %607 = vmatprep.subr.mxu0 0.0
    %608 = vmatpush2.msra.mxu0 0.0
    %609 = vmatprep.subr.mxu0 0.0
    %610 = vmatpush2.msra.mxu0 0.0
    %611 = vmatprep.mubr.f32.mxu0 0.0
    %612 = vmatmul.mubr.f32.gmra.mxu0 %v405
    %v613 = vpop.f32.mrf.mxu0
    %v614 = vadd.f32 %v401, %v613
    %v615 = vpop.f32.mrf.mxu0
    %616 = vdwg.mxu0
    %v618 = vrot.slane %v474, 1
    %v621 = vadd.f32 %v210, %v474
    %v622 = vadd.f32 %v215, %v618
    %v623 = vxor.u32 %v621, 2147483648
    %v624 = vxor.u32 %v622, 2147483648
    %v625 = vmul.f32 %v623, 1.442695
    %v626 = vpow.pop %v625
    %v627 = vmul.f32 %v624, 1.442695
    %v628 = vpow.pop %v627
    %v629 = vadd.f32 %v626, 1.0
    %v630 = vadd.f32 %v628, 1.0
    %v631 = vrcp.pop %v629
    %v632 = vmul.f32 1.0, %v631
    %v633 = vrcp.pop %v630
    %v634 = vmul.f32 1.0, %v633
    %v636 = vrot.slane %v544, 1
    %v639 = vadd.f32 %v293, %v544
    %v640 = vadd.f32 %v298, %v636
    %v641 = vxor.u32 %v639, 2147483648
    %v642 = vxor.u32 %v640, 2147483648
    %v643 = vmul.f32 %v641, 1.442695
    %v644 = vpow.pop %v643
    %v645 = vmul.f32 %v642, 1.442695
    %v646 = vpow.pop %v645
    %v647 = vadd.f32 %v644, 1.0
    %v648 = vadd.f32 %v646, 1.0
    %v649 = vrcp.pop %v647
    %v650 = vmul.f32 1.0, %v649
    %v651 = vrcp.pop %v648
    %v652 = vmul.f32 1.0, %v651
    %v654 = vrot.slane %v614, 1
    %v657 = vmul.f32 %v632, %v614
    %v658 = vmul.f32 %v634, %v654
    %v659 = vadd.f32 %v376, %v657
    %v660 = vadd.f32 %v381, %v658
    %v661 = vtanh.pop %v659
    %v662 = vtanh.pop %v660
    %v663 = vsub.f32 0.0, %v661
    %v664 = vsub.f32 0.0, %v662
    %v665 = vmul.f32 %v650, %v663
    %v666 = vmul.f32 %v652, %v664
    %v667 = vadd.f32 %v661, %v665
    %v668 = vadd.f32 %v662, %v666
    %vm669 = vcmask 253952
    %670 = vst.msk [vmem:[#allocation2] sm:$0x1] %vm669, %v667
    %671 = vst.msk [vmem:[#allocation2 + $0x8] sm:$0x1] %vm669, %v668
    %v674 = vrot.slane %v668, 7
    %vm675 = vcmask 1041409
    %v676 = vsel %vm675, %v674, %v667
    %v677 = vsel %vm403, %v676, 0
    %679 = vmatprep.subr.mxu0 0.0
    %680 = vmatpush1.msra.mxu0 0.0
    %681 = vmatprep.subr.mxu0 0.0
    %682 = vmatpush1.msra.mxu0 0.0
    %683 = vmatprep.subr.mxu0 0.0
    %684 = vmatpush1.msra.mxu0 0.0
    %685 = vmatprep.subr.mxu0 0.0
    %686 = vmatpush1.msra.mxu0 0.0
    %687 = vmatprep.subr.mxu0 0.0
    %688 = vmatpush1.msra.mxu0 0.0
    %689 = vmatprep.subr.mxu0 0.0
    %690 = vmatpush1.msra.mxu0 0.0
    %691 = vmatprep.subr.mxu0 0.0
    %692 = vmatpush1.msra.mxu0 0.0
    %693 = vmatprep.subr.mxu0 0.0
    %694 = vmatpush1.msra.mxu0 0.0
    %695 = vmatprep.subr.mxu0 0.0
    %696 = vmatpush1.msra.mxu0 0.0
    %697 = vmatprep.subr.mxu0 0.0
    %698 = vmatpush1.msra.mxu0 0.0
    %699 = vmatprep.subr.mxu0 0.0
    %700 = vmatpush1.msra.mxu0 0.0
    %701 = vmatprep.subr.mxu0 0.0
    %702 = vmatpush1.msra.mxu0 0.0
    %703 = vmatprep.subr.mxu0 0.0
    %704 = vmatpush1.msra.mxu0 %v387
    %705 = vmatprep.subr.mxu0 0.0
    %706 = vmatpush1.msra.mxu0 %v386
    %707 = vmatprep.subr.mxu0 0.0
    %708 = vmatpush1.msra.mxu0 %v385
    %709 = vmatprep.subr.mxu0 0.0
    %710 = vmatpush1.msra.mxu0 %v384
    %711 = vmatprep.subr.mxu0 0.0
    %712 = vmatpush2.msra.mxu0 0.0
    %713 = vmatprep.subr.mxu0 0.0
    %714 = vmatpush2.msra.mxu0 0.0
    %715 = vmatprep.subr.mxu0 0.0
    %716 = vmatpush2.msra.mxu0 0.0
    %717 = vmatprep.subr.mxu0 0.0
    %718 = vmatpush2.msra.mxu0 0.0
    %719 = vmatprep.subr.mxu0 0.0
    %720 = vmatpush2.msra.mxu0 0.0
    %721 = vmatprep.subr.mxu0 0.0
    %722 = vmatpush2.msra.mxu0 0.0
    %723 = vmatprep.subr.mxu0 0.0
    %724 = vmatpush2.msra.mxu0 0.0
    %725 = vmatprep.subr.mxu0 0.0
    %726 = vmatpush2.msra.mxu0 0.0
    %727 = vmatprep.subr.mxu0 0.0
    %728 = vmatpush2.msra.mxu0 0.0
    %729 = vmatprep.subr.mxu0 0.0
    %730 = vmatpush2.msra.mxu0 0.0
    %731 = vmatprep.subr.mxu0 0.0
    %732 = vmatpush2.msra.mxu0 0.0
    %733 = vmatprep.subr.mxu0 0.0
    %734 = vmatpush2.msra.mxu0 0.0
    %735 = vmatprep.subr.mxu0 0.0
    %736 = vmatpush2.msra.mxu0 0.0
    %737 = vmatprep.subr.mxu0 0.0
    %738 = vmatpush2.msra.mxu0 0.0
    %739 = vmatprep.subr.mxu0 0.0
    %740 = vmatpush2.msra.mxu0 0.0
    %741 = vmatprep.subr.mxu0 0.0
    %742 = vmatpush2.msra.mxu0 0.0
    %743 = vmatprep.mubr.f32.mxu0 0.0
    %744 = vmatmul.mubr.f32.gmra.mxu0 %v677
    %v745 = vpop.f32.mrf.mxu0
    %v746 = vadd.f32 0.0, %v745
    %v747 = vpop.f32.mrf.mxu0
    %748 = vdwg.mxu0
    %749 = vmatprep.subr.mxu0 0.0
    %750 = vmatpush1.msra.mxu0 0.0
    %751 = vmatprep.subr.mxu0 0.0
    %752 = vmatpush1.msra.mxu0 0.0
    %753 = vmatprep.subr.mxu0 0.0
    %754 = vmatpush1.msra.mxu0 0.0
    %755 = vmatprep.subr.mxu0 0.0
    %756 = vmatpush1.msra.mxu0 0.0
    %757 = vmatprep.subr.mxu0 0.0
    %758 = vmatpush1.msra.mxu0 0.0
    %759 = vmatprep.subr.mxu0 0.0
    %760 = vmatpush1.msra.mxu0 0.0
    %761 = vmatprep.subr.mxu0 0.0
    %762 = vmatpush1.msra.mxu0 0.0
    %763 = vmatprep.subr.mxu0 0.0
    %764 = vmatpush1.msra.mxu0 0.0
    %765 = vmatprep.subr.mxu0 0.0
    %766 = vmatpush1.msra.mxu0 0.0
    %767 = vmatprep.subr.mxu0 0.0
    %768 = vmatpush1.msra.mxu0 0.0
    %769 = vmatprep.subr.mxu0 0.0
    %770 = vmatpush1.msra.mxu0 0.0
    %771 = vmatprep.subr.mxu0 0.0
    %772 = vmatpush1.msra.mxu0 0.0
    %773 = vmatprep.subr.mxu0 0.0
    %774 = vmatpush1.msra.mxu0 %v391
    %775 = vmatprep.subr.mxu0 0.0
    %776 = vmatpush1.msra.mxu0 %v390
    %777 = vmatprep.subr.mxu0 0.0
    %778 = vmatpush1.msra.mxu0 %v389
    %779 = vmatprep.subr.mxu0 0.0
    %780 = vmatpush1.msra.mxu0 %v388
    %781 = vmatprep.subr.mxu0 0.0
    %782 = vmatpush2.msra.mxu0 0.0
    %783 = vmatprep.subr.mxu0 0.0
    %784 = vmatpush2.msra.mxu0 0.0
    %785 = vmatprep.subr.mxu0 0.0
    %786 = vmatpush2.msra.mxu0 0.0
    %787 = vmatprep.subr.mxu0 0.0
    %788 = vmatpush2.msra.mxu0 0.0
    %789 = vmatprep.subr.mxu0 0.0
    %790 = vmatpush2.msra.mxu0 0.0
    %791 = vmatprep.subr.mxu0 0.0
    %792 = vmatpush2.msra.mxu0 0.0
    %793 = vmatprep.subr.mxu0 0.0
    %794 = vmatpush2.msra.mxu0 0.0
    %795 = vmatprep.subr.mxu0 0.0
    %796 = vmatpush2.msra.mxu0 0.0
    %797 = vmatprep.subr.mxu0 0.0
    %798 = vmatpush2.msra.mxu0 0.0
    %799 = vmatprep.subr.mxu0 0.0
    %800 = vmatpush2.msra.mxu0 0.0
    %801 = vmatprep.subr.mxu0 0.0
    %802 = vmatpush2.msra.mxu0 0.0
    %803 = vmatprep.subr.mxu0 0.0
    %804 = vmatpush2.msra.mxu0 0.0
    %805 = vmatprep.subr.mxu0 0.0
    %806 = vmatpush2.msra.mxu0 0.0
    %807 = vmatprep.subr.mxu0 0.0
    %808 = vmatpush2.msra.mxu0 0.0
    %809 = vmatprep.subr.mxu0 0.0
    %810 = vmatpush2.msra.mxu0 0.0
    %811 = vmatprep.subr.mxu0 0.0
    %812 = vmatpush2.msra.mxu0 0.0
    %813 = vmatprep.mubr.f32.mxu0 0.0
    %814 = vmatmul.mubr.f32.gmra.mxu0 %v677
    %v815 = vpop.f32.mrf.mxu0
    %v816 = vadd.f32 0.0, %v815
    %v817 = vpop.f32.mrf.mxu0
    %818 = vdwg.mxu0
    %819 = vmatprep.subr.mxu0 0.0
    %820 = vmatpush1.msra.mxu0 0.0
    %821 = vmatprep.subr.mxu0 0.0
    %822 = vmatpush1.msra.mxu0 0.0
    %823 = vmatprep.subr.mxu0 0.0
    %824 = vmatpush1.msra.mxu0 0.0
    %825 = vmatprep.subr.mxu0 0.0
    %826 = vmatpush1.msra.mxu0 0.0
    %827 = vmatprep.subr.mxu0 0.0
    %828 = vmatpush1.msra.mxu0 0.0
    %829 = vmatprep.subr.mxu0 0.0
    %830 = vmatpush1.msra.mxu0 0.0
    %831 = vmatprep.subr.mxu0 0.0
    %832 = vmatpush1.msra.mxu0 0.0
    %833 = vmatprep.subr.mxu0 0.0
    %834 = vmatpush1.msra.mxu0 0.0
    %835 = vmatprep.subr.mxu0 0.0
    %836 = vmatpush1.msra.mxu0 0.0
    %837 = vmatprep.subr.mxu0 0.0
    %838 = vmatpush1.msra.mxu0 0.0
    %839 = vmatprep.subr.mxu0 0.0
    %840 = vmatpush1.msra.mxu0 0.0
    %841 = vmatprep.subr.mxu0 0.0
    %842 = vmatpush1.msra.mxu0 0.0
    %843 = vmatprep.subr.mxu0 0.0
    %844 = vmatpush1.msra.mxu0 %v395
    %845 = vmatprep.subr.mxu0 0.0
    %846 = vmatpush1.msra.mxu0 %v394
    %847 = vmatprep.subr.mxu0 0.0
    %848 = vmatpush1.msra.mxu0 %v393
    %849 = vmatprep.subr.mxu0 0.0
    %850 = vmatpush1.msra.mxu0 %v392
    %851 = vmatprep.subr.mxu0 0.0
    %852 = vmatpush2.msra.mxu0 0.0
    %853 = vmatprep.subr.mxu0 0.0
    %854 = vmatpush2.msra.mxu0 0.0
    %855 = vmatprep.subr.mxu0 0.0
    %856 = vmatpush2.msra.mxu0 0.0
    %857 = vmatprep.subr.mxu0 0.0
    %858 = vmatpush2.msra.mxu0 0.0
    %859 = vmatprep.subr.mxu0 0.0
    %860 = vmatpush2.msra.mxu0 0.0
    %861 = vmatprep.subr.mxu0 0.0
    %862 = vmatpush2.msra.mxu0 0.0
    %863 = vmatprep.subr.mxu0 0.0
    %864 = vmatpush2.msra.mxu0 0.0
    %865 = vmatprep.subr.mxu0 0.0
    %866 = vmatpush2.msra.mxu0 0.0
    %867 = vmatprep.subr.mxu0 0.0
    %868 = vmatpush2.msra.mxu0 0.0
    %869 = vmatprep.subr.mxu0 0.0
    %870 = vmatpush2.msra.mxu0 0.0
    %871 = vmatprep.subr.mxu0 0.0
    %872 = vmatpush2.msra.mxu0 0.0
    %873 = vmatprep.subr.mxu0 0.0
    %874 = vmatpush2.msra.mxu0 0.0
    %875 = vmatprep.subr.mxu0 0.0
    %876 = vmatpush2.msra.mxu0 0.0
    %877 = vmatprep.subr.mxu0 0.0
    %878 = vmatpush2.msra.mxu0 0.0
    %879 = vmatprep.subr.mxu0 0.0
    %880 = vmatpush2.msra.mxu0 0.0
    %881 = vmatprep.subr.mxu0 0.0
    %882 = vmatpush2.msra.mxu0 0.0
    %883 = vmatprep.mubr.f32.mxu0 0.0
    %884 = vmatmul.mubr.f32.gmra.mxu0 %v677
    %v885 = vpop.f32.mrf.mxu0
    %v886 = vadd.f32 %v401, %v885
    %v887 = vpop.f32.mrf.mxu0
    %888 = vdwg.mxu0
    %v890 = vrot.slane %v746, 7
    %v893 = vadd.f32 %v210, %v890
    %v894 = vadd.f32 %v215, %v746
    %v895 = vxor.u32 %v893, 2147483648
    %v896 = vxor.u32 %v894, 2147483648
    %v897 = vmul.f32 %v895, 1.442695
    %v898 = vpow.pop %v897
    %v899 = vmul.f32 %v896, 1.442695
    %v900 = vpow.pop %v899
    %v901 = vadd.f32 %v898, 1.0
    %v902 = vadd.f32 %v900, 1.0
    %v903 = vrcp.pop %v901
    %v904 = vmul.f32 1.0, %v903
    %v905 = vrcp.pop %v902
    %v906 = vmul.f32 1.0, %v905
    %v908 = vrot.slane %v816, 7
    %v911 = vadd.f32 %v293, %v908
    %v912 = vadd.f32 %v298, %v816
    %v913 = vxor.u32 %v911, 2147483648
    %v914 = vxor.u32 %v912, 2147483648
    %v915 = vmul.f32 %v913, 1.442695
    %v916 = vpow.pop %v915
    %v917 = vmul.f32 %v914, 1.442695
    %v918 = vpow.pop %v917
    %v919 = vadd.f32 %v916, 1.0
    %v920 = vadd.f32 %v918, 1.0
    %v921 = vrcp.pop %v919
    %v922 = vmul.f32 1.0, %v921
    %v923 = vrcp.pop %v920
    %v924 = vmul.f32 1.0, %v923
    %v926 = vrot.slane %v886, 7
    %v929 = vmul.f32 %v904, %v926
    %v930 = vmul.f32 %v906, %v886
    %v931 = vadd.f32 %v376, %v929
    %v932 = vadd.f32 %v381, %v930
    %v933 = vtanh.pop %v931
    %v934 = vtanh.pop %v932
    %v937 = vrot.slane %v933, 1
    %v938 = vrot.slane %v934, 1
    %v941 = vsub.f32 %v667, %v937
    %v942 = vsub.f32 %v668, %v938
    %v945 = vrot.slane %v941, 7
    %v946 = vrot.slane %v942, 7
    %v949 = vmul.f32 %v922, %v945
    %v950 = vmul.f32 %v924, %v946
    %v951 = vadd.f32 %v933, %v949
    %v952 = vadd.f32 %v934, %v950
    %vm953 = vcmask 254977
    %954 = vst.msk [vmem:[#allocation2] sm:$0x2] %vm953, %v951
    %955 = vst.msk [vmem:[#allocation2 + $0x8] sm:$0x2] %vm953, %v952
    %v958 = vrot.slane %v951, 1
    %v959 = vsel %vm675, %v952, %v958
    %v960 = vsel %vm403, %v959, 0
    %962 = vmatprep.subr.mxu0 0.0
    %963 = vmatpush1.msra.mxu0 0.0
    %964 = vmatprep.subr.mxu0 0.0
    %965 = vmatpush1.msra.mxu0 0.0
    %966 = vmatprep.subr.mxu0 0.0
    %967 = vmatpush1.msra.mxu0 0.0
    %968 = vmatprep.subr.mxu0 0.0
    %969 = vmatpush1.msra.mxu0 0.0
    %970 = vmatprep.subr.mxu0 0.0
    %971 = vmatpush1.msra.mxu0 0.0
    %972 = vmatprep.subr.mxu0 0.0
    %973 = vmatpush1.msra.mxu0 0.0
    %974 = vmatprep.subr.mxu0 0.0
    %975 = vmatpush1.msra.mxu0 0.0
    %976 = vmatprep.subr.mxu0 0.0
    %977 = vmatpush1.msra.mxu0 0.0
    %978 = vmatprep.subr.mxu0 0.0
    %979 = vmatpush1.msra.mxu0 0.0
    %980 = vmatprep.subr.mxu0 0.0
    %981 = vmatpush1.msra.mxu0 0.0
    %982 = vmatprep.subr.mxu0 0.0
    %983 = vmatpush1.msra.mxu0 0.0
    %984 = vmatprep.subr.mxu0 0.0
    %985 = vmatpush1.msra.mxu0 0.0
    %986 = vmatprep.subr.mxu0 0.0
    %987 = vmatpush1.msra.mxu0 %v387
    %988 = vmatprep.subr.mxu0 0.0
    %989 = vmatpush1.msra.mxu0 %v386
    %990 = vmatprep.subr.mxu0 0.0
    %991 = vmatpush1.msra.mxu0 %v385
    %992 = vmatprep.subr.mxu0 0.0
    %993 = vmatpush1.msra.mxu0 %v384
    %994 = vmatprep.subr.mxu0 0.0
    %995 = vmatpush2.msra.mxu0 0.0
    %996 = vmatprep.subr.mxu0 0.0
    %997 = vmatpush2.msra.mxu0 0.0
    %998 = vmatprep.subr.mxu0 0.0
    %999 = vmatpush2.msra.mxu0 0.0
    %1000 = vmatprep.subr.mxu0 0.0
    %1001 = vmatpush2.msra.mxu0 0.0
    %1002 = vmatprep.subr.mxu0 0.0
    %1003 = vmatpush2.msra.mxu0 0.0
    %1004 = vmatprep.subr.mxu0 0.0
    %1005 = vmatpush2.msra.mxu0 0.0
    %1006 = vmatprep.subr.mxu0 0.0
    %1007 = vmatpush2.msra.mxu0 0.0
    %1008 = vmatprep.subr.mxu0 0.0
    %1009 = vmatpush2.msra.mxu0 0.0
    %1010 = vmatprep.subr.mxu0 0.0
    %1011 = vmatpush2.msra.mxu0 0.0
    %1012 = vmatprep.subr.mxu0 0.0
    %1013 = vmatpush2.msra.mxu0 0.0
    %1014 = vmatprep.subr.mxu0 0.0
    %1015 = vmatpush2.msra.mxu0 0.0
    %1016 = vmatprep.subr.mxu0 0.0
    %1017 = vmatpush2.msra.mxu0 0.0
    %1018 = vmatprep.subr.mxu0 0.0
    %1019 = vmatpush2.msra.mxu0 0.0
    %1020 = vmatprep.subr.mxu0 0.0
    %1021 = vmatpush2.msra.mxu0 0.0
    %1022 = vmatprep.subr.mxu0 0.0
    %1023 = vmatpush2.msra.mxu0 0.0
    %1024 = vmatprep.subr.mxu0 0.0
    %1025 = vmatpush2.msra.mxu0 0.0
    %1026 = vmatprep.mubr.f32.mxu0 0.0
    %1027 = vmatmul.mubr.f32.gmra.mxu0 %v960
    %v1028 = vpop.f32.mrf.mxu0
    %v1029 = vadd.f32 0.0, %v1028
    %v1030 = vpop.f32.mrf.mxu0
    %1031 = vdwg.mxu0
    %1032 = vmatprep.subr.mxu0 0.0
    %1033 = vmatpush1.msra.mxu0 0.0
    %1034 = vmatprep.subr.mxu0 0.0
    %1035 = vmatpush1.msra.mxu0 0.0
    %1036 = vmatprep.subr.mxu0 0.0
    %1037 = vmatpush1.msra.mxu0 0.0
    %1038 = vmatprep.subr.mxu0 0.0
    %1039 = vmatpush1.msra.mxu0 0.0
    %1040 = vmatprep.subr.mxu0 0.0
    %1041 = vmatpush1.msra.mxu0 0.0
    %1042 = vmatprep.subr.mxu0 0.0
    %1043 = vmatpush1.msra.mxu0 0.0
    %1044 = vmatprep.subr.mxu0 0.0
    %1045 = vmatpush1.msra.mxu0 0.0
    %1046 = vmatprep.subr.mxu0 0.0
    %1047 = vmatpush1.msra.mxu0 0.0
    %1048 = vmatprep.subr.mxu0 0.0
    %1049 = vmatpush1.msra.mxu0 0.0
    %1050 = vmatprep.subr.mxu0 0.0
    %1051 = vmatpush1.msra.mxu0 0.0
    %1052 = vmatprep.subr.mxu0 0.0
    %1053 = vmatpush1.msra.mxu0 0.0
    %1054 = vmatprep.subr.mxu0 0.0
    %1055 = vmatpush1.msra.mxu0 0.0
    %1056 = vmatprep.subr.mxu0 0.0
    %1057 = vmatpush1.msra.mxu0 %v391
    %1058 = vmatprep.subr.mxu0 0.0
    %1059 = vmatpush1.msra.mxu0 %v390
    %1060 = vmatprep.subr.mxu0 0.0
    %1061 = vmatpush1.msra.mxu0 %v389
    %1062 = vmatprep.subr.mxu0 0.0
    %1063 = vmatpush1.msra.mxu0 %v388
    %1064 = vmatprep.subr.mxu0 0.0
    %1065 = vmatpush2.msra.mxu0 0.0
    %1066 = vmatprep.subr.mxu0 0.0
    %1067 = vmatpush2.msra.mxu0 0.0
    %1068 = vmatprep.subr.mxu0 0.0
    %1069 = vmatpush2.msra.mxu0 0.0
    %1070 = vmatprep.subr.mxu0 0.0
    %1071 = vmatpush2.msra.mxu0 0.0
    %1072 = vmatprep.subr.mxu0 0.0
    %1073 = vmatpush2.msra.mxu0 0.0
    %1074 = vmatprep.subr.mxu0 0.0
    %1075 = vmatpush2.msra.mxu0 0.0
    %1076 = vmatprep.subr.mxu0 0.0
    %1077 = vmatpush2.msra.mxu0 0.0
    %1078 = vmatprep.subr.mxu0 0.0
    %1079 = vmatpush2.msra.mxu0 0.0
    %1080 = vmatprep.subr.mxu0 0.0
    %1081 = vmatpush2.msra.mxu0 0.0
    %1082 = vmatprep.subr.mxu0 0.0
    %1083 = vmatpush2.msra.mxu0 0.0
    %1084 = vmatprep.subr.mxu0 0.0
    %1085 = vmatpush2.msra.mxu0 0.0
    %1086 = vmatprep.subr.mxu0 0.0
    %1087 = vmatpush2.msra.mxu0 0.0
    %1088 = vmatprep.subr.mxu0 0.0
    %1089 = vmatpush2.msra.mxu0 0.0
    %1090 = vmatprep.subr.mxu0 0.0
    %1091 = vmatpush2.msra.mxu0 0.0
    %1092 = vmatprep.subr.mxu0 0.0
    %1093 = vmatpush2.msra.mxu0 0.0
    %1094 = vmatprep.subr.mxu0 0.0
    %1095 = vmatpush2.msra.mxu0 0.0
    %1096 = vmatprep.mubr.f32.mxu0 0.0
    %1097 = vmatmul.mubr.f32.gmra.mxu0 %v960
    %v1098 = vpop.f32.mrf.mxu0
    %v1099 = vadd.f32 0.0, %v1098
    %v1100 = vpop.f32.mrf.mxu0
    %1101 = vdwg.mxu0
    %1102 = vmatprep.subr.mxu0 0.0
    %1103 = vmatpush1.msra.mxu0 0.0
    %1104 = vmatprep.subr.mxu0 0.0
    %1105 = vmatpush1.msra.mxu0 0.0
    %1106 = vmatprep.subr.mxu0 0.0
    %1107 = vmatpush1.msra.mxu0 0.0
    %1108 = vmatprep.subr.mxu0 0.0
    %1109 = vmatpush1.msra.mxu0 0.0
    %1110 = vmatprep.subr.mxu0 0.0
    %1111 = vmatpush1.msra.mxu0 0.0
    %1112 = vmatprep.subr.mxu0 0.0
    %1113 = vmatpush1.msra.mxu0 0.0
    %1114 = vmatprep.subr.mxu0 0.0
    %1115 = vmatpush1.msra.mxu0 0.0
    %1116 = vmatprep.subr.mxu0 0.0
    %1117 = vmatpush1.msra.mxu0 0.0
    %1118 = vmatprep.subr.mxu0 0.0
    %1119 = vmatpush1.msra.mxu0 0.0
    %1120 = vmatprep.subr.mxu0 0.0
    %1121 = vmatpush1.msra.mxu0 0.0
    %1122 = vmatprep.subr.mxu0 0.0
    %1123 = vmatpush1.msra.mxu0 0.0
    %1124 = vmatprep.subr.mxu0 0.0
    %1125 = vmatpush1.msra.mxu0 0.0
    %1126 = vmatprep.subr.mxu0 0.0
    %1127 = vmatpush1.msra.mxu0 %v395
    %1128 = vmatprep.subr.mxu0 0.0
    %1129 = vmatpush1.msra.mxu0 %v394
    %1130 = vmatprep.subr.mxu0 0.0
    %1131 = vmatpush1.msra.mxu0 %v393
    %1132 = vmatprep.subr.mxu0 0.0
    %1133 = vmatpush1.msra.mxu0 %v392
    %1134 = vmatprep.subr.mxu0 0.0
    %1135 = vmatpush2.msra.mxu0 0.0
    %1136 = vmatprep.subr.mxu0 0.0
    %1137 = vmatpush2.msra.mxu0 0.0
    %1138 = vmatprep.subr.mxu0 0.0
    %1139 = vmatpush2.msra.mxu0 0.0
    %1140 = vmatprep.subr.mxu0 0.0
    %1141 = vmatpush2.msra.mxu0 0.0
    %1142 = vmatprep.subr.mxu0 0.0
    %1143 = vmatpush2.msra.mxu0 0.0
    %1144 = vmatprep.subr.mxu0 0.0
    %1145 = vmatpush2.msra.mxu0 0.0
    %1146 = vmatprep.subr.mxu0 0.0
    %1147 = vmatpush2.msra.mxu0 0.0
    %1148 = vmatprep.subr.mxu0 0.0
    %1149 = vmatpush2.msra.mxu0 0.0
    %1150 = vmatprep.subr.mxu0 0.0
    %1151 = vmatpush2.msra.mxu0 0.0
    %1152 = vmatprep.subr.mxu0 0.0
    %1153 = vmatpush2.msra.mxu0 0.0
    %1154 = vmatprep.subr.mxu0 0.0
    %1155 = vmatpush2.msra.mxu0 0.0
    %1156 = vmatprep.subr.mxu0 0.0
    %1157 = vmatpush2.msra.mxu0 0.0
    %1158 = vmatprep.subr.mxu0 0.0
    %1159 = vmatpush2.msra.mxu0 0.0
    %1160 = vmatprep.subr.mxu0 0.0
    %1161 = vmatpush2.msra.mxu0 0.0
    %1162 = vmatprep.subr.mxu0 0.0
    %1163 = vmatpush2.msra.mxu0 0.0
    %1164 = vmatprep.subr.mxu0 0.0
    %1165 = vmatpush2.msra.mxu0 0.0
    %1166 = vmatprep.mubr.f32.mxu0 0.0
    %1167 = vmatmul.mubr.f32.gmra.mxu0 %v960
    %v1168 = vpop.f32.mrf.mxu0
    %v1169 = vadd.f32 %v401, %v1168
    %v1170 = vpop.f32.mrf.mxu0
    %1171 = vdwg.mxu0
    %v1173 = vrot.slane %v1029, 6
    %v1174 = vrot.slane %v1029, 7
    %v1177 = vadd.f32 %v210, %v1173
    %v1178 = vadd.f32 %v215, %v1174
    %v1179 = vxor.u32 %v1177, 2147483648
    %v1180 = vxor.u32 %v1178, 2147483648
    %v1181 = vmul.f32 %v1179, 1.442695
    %v1182 = vpow.pop %v1181
    %v1183 = vmul.f32 %v1180, 1.442695
    %v1184 = vpow.pop %v1183
    %v1185 = vadd.f32 %v1182, 1.0
    %v1186 = vadd.f32 %v1184, 1.0
    %v1187 = vrcp.pop %v1185
    %v1188 = vmul.f32 1.0, %v1187
    %v1189 = vrcp.pop %v1186
    %v1190 = vmul.f32 1.0, %v1189
    %v1192 = vrot.slane %v1099, 6
    %v1193 = vrot.slane %v1099, 7
    %v1196 = vadd.f32 %v293, %v1192
    %v1197 = vadd.f32 %v298, %v1193
    %v1198 = vxor.u32 %v1196, 2147483648
    %v1199 = vxor.u32 %v1197, 2147483648
    %v1200 = vmul.f32 %v1198, 1.442695
    %v1201 = vpow.pop %v1200
    %v1202 = vmul.f32 %v1199, 1.442695
    %v1203 = vpow.pop %v1202
    %v1204 = vadd.f32 %v1201, 1.0
    %v1205 = vadd.f32 %v1203, 1.0
    %v1206 = vrcp.pop %v1204
    %v1207 = vmul.f32 1.0, %v1206
    %v1208 = vrcp.pop %v1205
    %v1209 = vmul.f32 1.0, %v1208
    %v1211 = vrot.slane %v1169, 6
    %v1212 = vrot.slane %v1169, 7
    %v1215 = vmul.f32 %v1188, %v1211
    %v1216 = vmul.f32 %v1190, %v1212
    %v1217 = vadd.f32 %v376, %v1215
    %v1218 = vadd.f32 %v381, %v1216
    %v1219 = vtanh.pop %v1217
    %v1220 = vtanh.pop %v1218
    %v1223 = vrot.slane %v1219, 1
    %v1224 = vrot.slane %v1220, 1
    %v1227 = vsub.f32 %v951, %v1223
    %v1228 = vsub.f32 %v952, %v1224
    %v1231 = vrot.slane %v1227, 7
    %v1232 = vrot.slane %v1228, 7
    %v1235 = vmul.f32 %v1207, %v1231
    %v1236 = vmul.f32 %v1209, %v1232
    %v1237 = vadd.f32 %v1219, %v1235
    %v1238 = vadd.f32 %v1220, %v1236
    %vm1239 = vcmask 256002
    %1240 = vst.msk [vmem:[#allocation2] sm:$0x4] %vm1239, %v1237
    %1241 = vst.msk [vmem:[#allocation2 + $0x8] sm:$0x4] %vm1239, %v1238
    %v1244 = vrot.slane %v1237, 2
    %v1245 = vrot.slane %v1238, 1
    %v1246 = vsel %vm675, %v1245, %v1244
    %v1247 = vsel %vm403, %v1246, 0
    %1249 = vmatprep.subr.mxu0 0.0
    %1250 = vmatpush1.msra.mxu0 0.0
    %1251 = vmatprep.subr.mxu0 0.0
    %1252 = vmatpush1.msra.mxu0 0.0
    %1253 = vmatprep.subr.mxu0 0.0
    %1254 = vmatpush1.msra.mxu0 0.0
    %1255 = vmatprep.subr.mxu0 0.0
    %1256 = vmatpush1.msra.mxu0 0.0
    %1257 = vmatprep.subr.mxu0 0.0
    %1258 = vmatpush1.msra.mxu0 0.0
    %1259 = vmatprep.subr.mxu0 0.0
    %1260 = vmatpush1.msra.mxu0 0.0
    %1261 = vmatprep.subr.mxu0 0.0
    %1262 = vmatpush1.msra.mxu0 0.0
    %1263 = vmatprep.subr.mxu0 0.0
    %1264 = vmatpush1.msra.mxu0 0.0
    %1265 = vmatprep.subr.mxu0 0.0
    %1266 = vmatpush1.msra.mxu0 0.0
    %1267 = vmatprep.subr.mxu0 0.0
    %1268 = vmatpush1.msra.mxu0 0.0
    %1269 = vmatprep.subr.mxu0 0.0
    %1270 = vmatpush1.msra.mxu0 0.0
    %1271 = vmatprep.subr.mxu0 0.0
    %1272 = vmatpush1.msra.mxu0 0.0
    %1273 = vmatprep.subr.mxu0 0.0
    %1274 = vmatpush1.msra.mxu0 %v387
    %1275 = vmatprep.subr.mxu0 0.0
    %1276 = vmatpush1.msra.mxu0 %v386
    %1277 = vmatprep.subr.mxu0 0.0
    %1278 = vmatpush1.msra.mxu0 %v385
    %1279 = vmatprep.subr.mxu0 0.0
    %1280 = vmatpush1.msra.mxu0 %v384
    %1281 = vmatprep.subr.mxu0 0.0
    %1282 = vmatpush2.msra.mxu0 0.0
    %1283 = vmatprep.subr.mxu0 0.0
    %1284 = vmatpush2.msra.mxu0 0.0
    %1285 = vmatprep.subr.mxu0 0.0
    %1286 = vmatpush2.msra.mxu0 0.0
    %1287 = vmatprep.subr.mxu0 0.0
    %1288 = vmatpush2.msra.mxu0 0.0
    %1289 = vmatprep.subr.mxu0 0.0
    %1290 = vmatpush2.msra.mxu0 0.0
    %1291 = vmatprep.subr.mxu0 0.0
    %1292 = vmatpush2.msra.mxu0 0.0
    %1293 = vmatprep.subr.mxu0 0.0
    %1294 = vmatpush2.msra.mxu0 0.0
    %1295 = vmatprep.subr.mxu0 0.0
    %1296 = vmatpush2.msra.mxu0 0.0
    %1297 = vmatprep.subr.mxu0 0.0
    %1298 = vmatpush2.msra.mxu0 0.0
    %1299 = vmatprep.subr.mxu0 0.0
    %1300 = vmatpush2.msra.mxu0 0.0
    %1301 = vmatprep.subr.mxu0 0.0
    %1302 = vmatpush2.msra.mxu0 0.0
    %1303 = vmatprep.subr.mxu0 0.0
    %1304 = vmatpush2.msra.mxu0 0.0
    %1305 = vmatprep.subr.mxu0 0.0
    %1306 = vmatpush2.msra.mxu0 0.0
    %1307 = vmatprep.subr.mxu0 0.0
    %1308 = vmatpush2.msra.mxu0 0.0
    %1309 = vmatprep.subr.mxu0 0.0
    %1310 = vmatpush2.msra.mxu0 0.0
    %1311 = vmatprep.subr.mxu0 0.0
    %1312 = vmatpush2.msra.mxu0 0.0
    %1313 = vmatprep.mubr.f32.mxu0 0.0
    %1314 = vmatmul.mubr.f32.gmra.mxu0 %v1247
    %v1315 = vpop.f32.mrf.mxu0
    %v1316 = vadd.f32 0.0, %v1315
    %v1317 = vpop.f32.mrf.mxu0
    %1318 = vdwg.mxu0
    %1319 = vmatprep.subr.mxu0 0.0
    %1320 = vmatpush1.msra.mxu0 0.0
    %1321 = vmatprep.subr.mxu0 0.0
    %1322 = vmatpush1.msra.mxu0 0.0
    %1323 = vmatprep.subr.mxu0 0.0
    %1324 = vmatpush1.msra.mxu0 0.0
    %1325 = vmatprep.subr.mxu0 0.0
    %1326 = vmatpush1.msra.mxu0 0.0
    %1327 = vmatprep.subr.mxu0 0.0
    %1328 = vmatpush1.msra.mxu0 0.0
    %1329 = vmatprep.subr.mxu0 0.0
    %1330 = vmatpush1.msra.mxu0 0.0
    %1331 = vmatprep.subr.mxu0 0.0
    %1332 = vmatpush1.msra.mxu0 0.0
    %1333 = vmatprep.subr.mxu0 0.0
    %1334 = vmatpush1.msra.mxu0 0.0
    %1335 = vmatprep.subr.mxu0 0.0
    %1336 = vmatpush1.msra.mxu0 0.0
    %1337 = vmatprep.subr.mxu0 0.0
    %1338 = vmatpush1.msra.mxu0 0.0
    %1339 = vmatprep.subr.mxu0 0.0
    %1340 = vmatpush1.msra.mxu0 0.0
    %1341 = vmatprep.subr.mxu0 0.0
    %1342 = vmatpush1.msra.mxu0 0.0
    %1343 = vmatprep.subr.mxu0 0.0
    %1344 = vmatpush1.msra.mxu0 %v391
    %1345 = vmatprep.subr.mxu0 0.0
    %1346 = vmatpush1.msra.mxu0 %v390
    %1347 = vmatprep.subr.mxu0 0.0
    %1348 = vmatpush1.msra.mxu0 %v389
    %1349 = vmatprep.subr.mxu0 0.0
    %1350 = vmatpush1.msra.mxu0 %v388
    %1351 = vmatprep.subr.mxu0 0.0
    %1352 = vmatpush2.msra.mxu0 0.0
    %1353 = vmatprep.subr.mxu0 0.0
    %1354 = vmatpush2.msra.mxu0 0.0
    %1355 = vmatprep.subr.mxu0 0.0
    %1356 = vmatpush2.msra.mxu0 0.0
    %1357 = vmatprep.subr.mxu0 0.0
    %1358 = vmatpush2.msra.mxu0 0.0
    %1359 = vmatprep.subr.mxu0 0.0
    %1360 = vmatpush2.msra.mxu0 0.0
    %1361 = vmatprep.subr.mxu0 0.0
    %1362 = vmatpush2.msra.mxu0 0.0
    %1363 = vmatprep.subr.mxu0 0.0
    %1364 = vmatpush2.msra.mxu0 0.0
    %1365 = vmatprep.subr.mxu0 0.0
    %1366 = vmatpush2.msra.mxu0 0.0
    %1367 = vmatprep.subr.mxu0 0.0
    %1368 = vmatpush2.msra.mxu0 0.0
    %1369 = vmatprep.subr.mxu0 0.0
    %1370 = vmatpush2.msra.mxu0 0.0
    %1371 = vmatprep.subr.mxu0 0.0
    %1372 = vmatpush2.msra.mxu0 0.0
    %1373 = vmatprep.subr.mxu0 0.0
    %1374 = vmatpush2.msra.mxu0 0.0
    %1375 = vmatprep.subr.mxu0 0.0
    %1376 = vmatpush2.msra.mxu0 0.0
    %1377 = vmatprep.subr.mxu0 0.0
    %1378 = vmatpush2.msra.mxu0 0.0
    %1379 = vmatprep.subr.mxu0 0.0
    %1380 = vmatpush2.msra.mxu0 0.0
    %1381 = vmatprep.subr.mxu0 0.0
    %1382 = vmatpush2.msra.mxu0 0.0
    %1383 = vmatprep.mubr.f32.mxu0 0.0
    %1384 = vmatmul.mubr.f32.gmra.mxu0 %v1247
    %v1385 = vpop.f32.mrf.mxu0
    %v1386 = vadd.f32 0.0, %v1385
    %v1387 = vpop.f32.mrf.mxu0
    %1388 = vdwg.mxu0
    %1389 = vmatprep.subr.mxu0 0.0
    %1390 = vmatpush1.msra.mxu0 0.0
    %1391 = vmatprep.subr.mxu0 0.0
    %1392 = vmatpush1.msra.mxu0 0.0
    %1393 = vmatprep.subr.mxu0 0.0
    %1394 = vmatpush1.msra.mxu0 0.0
    %1395 = vmatprep.subr.mxu0 0.0
    %1396 = vmatpush1.msra.mxu0 0.0
    %1397 = vmatprep.subr.mxu0 0.0
    %1398 = vmatpush1.msra.mxu0 0.0
    %1399 = vmatprep.subr.mxu0 0.0
    %1400 = vmatpush1.msra.mxu0 0.0
    %1401 = vmatprep.subr.mxu0 0.0
    %1402 = vmatpush1.msra.mxu0 0.0
    %1403 = vmatprep.subr.mxu0 0.0
    %1404 = vmatpush1.msra.mxu0 0.0
    %1405 = vmatprep.subr.mxu0 0.0
    %1406 = vmatpush1.msra.mxu0 0.0
    %1407 = vmatprep.subr.mxu0 0.0
    %1408 = vmatpush1.msra.mxu0 0.0
    %1409 = vmatprep.subr.mxu0 0.0
    %1410 = vmatpush1.msra.mxu0 0.0
    %1411 = vmatprep.subr.mxu0 0.0
    %1412 = vmatpush1.msra.mxu0 0.0
    %1413 = vmatprep.subr.mxu0 0.0
    %1414 = vmatpush1.msra.mxu0 %v395
    %1415 = vmatprep.subr.mxu0 0.0
    %1416 = vmatpush1.msra.mxu0 %v394
    %1417 = vmatprep.subr.mxu0 0.0
    %1418 = vmatpush1.msra.mxu0 %v393
    %1419 = vmatprep.subr.mxu0 0.0
    %1420 = vmatpush1.msra.mxu0 %v392
    %1421 = vmatprep.subr.mxu0 0.0
    %1422 = vmatpush2.msra.mxu0 0.0
    %1423 = vmatprep.subr.mxu0 0.0
    %1424 = vmatpush2.msra.mxu0 0.0
    %1425 = vmatprep.subr.mxu0 0.0
    %1426 = vmatpush2.msra.mxu0 0.0
    %1427 = vmatprep.subr.mxu0 0.0
    %1428 = vmatpush2.msra.mxu0 0.0
    %1429 = vmatprep.subr.mxu0 0.0
    %1430 = vmatpush2.msra.mxu0 0.0
    %1431 = vmatprep.subr.mxu0 0.0
    %1432 = vmatpush2.msra.mxu0 0.0
    %1433 = vmatprep.subr.mxu0 0.0
    %1434 = vmatpush2.msra.mxu0 0.0
    %1435 = vmatprep.subr.mxu0 0.0
    %1436 = vmatpush2.msra.mxu0 0.0
    %1437 = vmatprep.subr.mxu0 0.0
    %1438 = vmatpush2.msra.mxu0 0.0
    %1439 = vmatprep.subr.mxu0 0.0
    %1440 = vmatpush2.msra.mxu0 0.0
    %1441 = vmatprep.subr.mxu0 0.0
    %1442 = vmatpush2.msra.mxu0 0.0
    %1443 = vmatprep.subr.mxu0 0.0
    %1444 = vmatpush2.msra.mxu0 0.0
    %1445 = vmatprep.subr.mxu0 0.0
    %1446 = vmatpush2.msra.mxu0 0.0
    %1447 = vmatprep.subr.mxu0 0.0
    %1448 = vmatpush2.msra.mxu0 0.0
    %1449 = vmatprep.subr.mxu0 0.0
    %1450 = vmatpush2.msra.mxu0 0.0
    %1451 = vmatprep.subr.mxu0 0.0
    %1452 = vmatpush2.msra.mxu0 0.0
    %1453 = vmatprep.mubr.f32.mxu0 0.0
    %1454 = vmatmul.mubr.f32.gmra.mxu0 %v1247
    %v1455 = vpop.f32.mrf.mxu0
    %v1456 = vadd.f32 %v401, %v1455
    %v1457 = vpop.f32.mrf.mxu0
    %1458 = vdwg.mxu0
    %v1460 = vrot.slane %v1316, 5
    %v1461 = vrot.slane %v1316, 6
    %v1464 = vadd.f32 %v210, %v1460
    %v1465 = vadd.f32 %v215, %v1461
    %v1466 = vxor.u32 %v1464, 2147483648
    %v1467 = vxor.u32 %v1465, 2147483648
    %v1468 = vmul.f32 %v1466, 1.442695
    %v1469 = vpow.pop %v1468
    %v1470 = vmul.f32 %v1467, 1.442695
    %v1471 = vpow.pop %v1470
    %v1472 = vadd.f32 %v1469, 1.0
    %v1473 = vadd.f32 %v1471, 1.0
    %v1474 = vrcp.pop %v1472
    %v1475 = vmul.f32 1.0, %v1474
    %v1476 = vrcp.pop %v1473
    %v1477 = vmul.f32 1.0, %v1476
    %v1479 = vrot.slane %v1386, 5
    %v1480 = vrot.slane %v1386, 6
    %v1483 = vadd.f32 %v293, %v1479
    %v1484 = vadd.f32 %v298, %v1480
    %v1485 = vxor.u32 %v1483, 2147483648
    %v1486 = vxor.u32 %v1484, 2147483648
    %v1487 = vmul.f32 %v1485, 1.442695
    %v1488 = vpow.pop %v1487
    %v1489 = vmul.f32 %v1486, 1.442695
    %v1490 = vpow.pop %v1489
    %v1491 = vadd.f32 %v1488, 1.0
    %v1492 = vadd.f32 %v1490, 1.0
    %v1493 = vrcp.pop %v1491
    %v1494 = vmul.f32 1.0, %v1493
    %v1495 = vrcp.pop %v1492
    %v1496 = vmul.f32 1.0, %v1495
    %v1498 = vrot.slane %v1456, 5
    %v1499 = vrot.slane %v1456, 6
    %v1502 = vmul.f32 %v1475, %v1498
    %v1503 = vmul.f32 %v1477, %v1499
    %v1504 = vadd.f32 %v376, %v1502
    %v1505 = vadd.f32 %v381, %v1503
    %v1506 = vtanh.pop %v1504
    %v1507 = vtanh.pop %v1505
    %v1510 = vrot.slane %v1506, 1
    %v1511 = vrot.slane %v1507, 1
    %v1514 = vsub.f32 %v1237, %v1510
    %v1515 = vsub.f32 %v1238, %v1511
    %v1518 = vrot.slane %v1514, 7
    %v1519 = vrot.slane %v1515, 7
    %v1522 = vmul.f32 %v1494, %v1518
    %v1523 = vmul.f32 %v1496, %v1519
    %v1524 = vadd.f32 %v1506, %v1522
    %v1525 = vadd.f32 %v1507, %v1523
    %vm1526 = vcmask 257027
    %1527 = vst.msk [vmem:[#allocation2] sm:$0x8] %vm1526, %v1524
    %1528 = vst.msk [vmem:[#allocation2 + $0x8] sm:$0x8] %vm1526, %v1525
    %v1531 = vrot.slane %v1524, 3
    %v1532 = vrot.slane %v1525, 2
    %v1533 = vsel %vm675, %v1532, %v1531
    %v1534 = vsel %vm403, %v1533, 0
    %1536 = vmatprep.subr.mxu0 0.0
    %1537 = vmatpush1.msra.mxu0 0.0
    %1538 = vmatprep.subr.mxu0 0.0
    %1539 = vmatpush1.msra.mxu0 0.0
    %1540 = vmatprep.subr.mxu0 0.0
    %1541 = vmatpush1.msra.mxu0 0.0
    %1542 = vmatprep.subr.mxu0 0.0
    %1543 = vmatpush1.msra.mxu0 0.0
    %1544 = vmatprep.subr.mxu0 0.0
    %1545 = vmatpush1.msra.mxu0 0.0
    %1546 = vmatprep.subr.mxu0 0.0
    %1547 = vmatpush1.msra.mxu0 0.0
    %1548 = vmatprep.subr.mxu0 0.0
    %1549 = vmatpush1.msra.mxu0 0.0
    %1550 = vmatprep.subr.mxu0 0.0
    %1551 = vmatpush1.msra.mxu0 0.0
    %1552 = vmatprep.subr.mxu0 0.0
    %1553 = vmatpush1.msra.mxu0 0.0
    %1554 = vmatprep.subr.mxu0 0.0
    %1555 = vmatpush1.msra.mxu0 0.0
    %1556 = vmatprep.subr.mxu0 0.0
    %1557 = vmatpush1.msra.mxu0 0.0
    %1558 = vmatprep.subr.mxu0 0.0
    %1559 = vmatpush1.msra.mxu0 0.0
    %1560 = vmatprep.subr.mxu0 0.0
    %1561 = vmatpush1.msra.mxu0 %v387
    %1562 = vmatprep.subr.mxu0 0.0
    %1563 = vmatpush1.msra.mxu0 %v386
    %1564 = vmatprep.subr.mxu0 0.0
    %1565 = vmatpush1.msra.mxu0 %v385
    %1566 = vmatprep.subr.mxu0 0.0
    %1567 = vmatpush1.msra.mxu0 %v384
    %1568 = vmatprep.subr.mxu0 0.0
    %1569 = vmatpush2.msra.mxu0 0.0
    %1570 = vmatprep.subr.mxu0 0.0
    %1571 = vmatpush2.msra.mxu0 0.0
    %1572 = vmatprep.subr.mxu0 0.0
    %1573 = vmatpush2.msra.mxu0 0.0
    %1574 = vmatprep.subr.mxu0 0.0
    %1575 = vmatpush2.msra.mxu0 0.0
    %1576 = vmatprep.subr.mxu0 0.0
    %1577 = vmatpush2.msra.mxu0 0.0
    %1578 = vmatprep.subr.mxu0 0.0
    %1579 = vmatpush2.msra.mxu0 0.0
    %1580 = vmatprep.subr.mxu0 0.0
    %1581 = vmatpush2.msra.mxu0 0.0
    %1582 = vmatprep.subr.mxu0 0.0
    %1583 = vmatpush2.msra.mxu0 0.0
    %1584 = vmatprep.subr.mxu0 0.0
    %1585 = vmatpush2.msra.mxu0 0.0
    %1586 = vmatprep.subr.mxu0 0.0
    %1587 = vmatpush2.msra.mxu0 0.0
    %1588 = vmatprep.subr.mxu0 0.0
    %1589 = vmatpush2.msra.mxu0 0.0
    %1590 = vmatprep.subr.mxu0 0.0
    %1591 = vmatpush2.msra.mxu0 0.0
    %1592 = vmatprep.subr.mxu0 0.0
    %1593 = vmatpush2.msra.mxu0 0.0
    %1594 = vmatprep.subr.mxu0 0.0
    %1595 = vmatpush2.msra.mxu0 0.0
    %1596 = vmatprep.subr.mxu0 0.0
    %1597 = vmatpush2.msra.mxu0 0.0
    %1598 = vmatprep.subr.mxu0 0.0
    %1599 = vmatpush2.msra.mxu0 0.0
    %1600 = vmatprep.mubr.f32.mxu0 0.0
    %1601 = vmatmul.mubr.f32.gmra.mxu0 %v1534
    %v1602 = vpop.f32.mrf.mxu0
    %v1603 = vadd.f32 0.0, %v1602
    %v1604 = vpop.f32.mrf.mxu0
    %1605 = vdwg.mxu0
    %1606 = vmatprep.subr.mxu0 0.0
    %1607 = vmatpush1.msra.mxu0 0.0
    %1608 = vmatprep.subr.mxu0 0.0
    %1609 = vmatpush1.msra.mxu0 0.0
    %1610 = vmatprep.subr.mxu0 0.0
    %1611 = vmatpush1.msra.mxu0 0.0
    %1612 = vmatprep.subr.mxu0 0.0
    %1613 = vmatpush1.msra.mxu0 0.0
    %1614 = vmatprep.subr.mxu0 0.0
    %1615 = vmatpush1.msra.mxu0 0.0
    %1616 = vmatprep.subr.mxu0 0.0
    %1617 = vmatpush1.msra.mxu0 0.0
    %1618 = vmatprep.subr.mxu0 0.0
    %1619 = vmatpush1.msra.mxu0 0.0
    %1620 = vmatprep.subr.mxu0 0.0
    %1621 = vmatpush1.msra.mxu0 0.0
    %1622 = vmatprep.subr.mxu0 0.0
    %1623 = vmatpush1.msra.mxu0 0.0
    %1624 = vmatprep.subr.mxu0 0.0
    %1625 = vmatpush1.msra.mxu0 0.0
    %1626 = vmatprep.subr.mxu0 0.0
    %1627 = vmatpush1.msra.mxu0 0.0
    %1628 = vmatprep.subr.mxu0 0.0
    %1629 = vmatpush1.msra.mxu0 0.0
    %1630 = vmatprep.subr.mxu0 0.0
    %1631 = vmatpush1.msra.mxu0 %v391
    %1632 = vmatprep.subr.mxu0 0.0
    %1633 = vmatpush1.msra.mxu0 %v390
    %1634 = vmatprep.subr.mxu0 0.0
    %1635 = vmatpush1.msra.mxu0 %v389
    %1636 = vmatprep.subr.mxu0 0.0
    %1637 = vmatpush1.msra.mxu0 %v388
    %1638 = vmatprep.subr.mxu0 0.0
    %1639 = vmatpush2.msra.mxu0 0.0
    %1640 = vmatprep.subr.mxu0 0.0
    %1641 = vmatpush2.msra.mxu0 0.0
    %1642 = vmatprep.subr.mxu0 0.0
    %1643 = vmatpush2.msra.mxu0 0.0
    %1644 = vmatprep.subr.mxu0 0.0
    %1645 = vmatpush2.msra.mxu0 0.0
    %1646 = vmatprep.subr.mxu0 0.0
    %1647 = vmatpush2.msra.mxu0 0.0
    %1648 = vmatprep.subr.mxu0 0.0
    %1649 = vmatpush2.msra.mxu0 0.0
    %1650 = vmatprep.subr.mxu0 0.0
    %1651 = vmatpush2.msra.mxu0 0.0
    %1652 = vmatprep.subr.mxu0 0.0
    %1653 = vmatpush2.msra.mxu0 0.0
    %1654 = vmatprep.subr.mxu0 0.0
    %1655 = vmatpush2.msra.mxu0 0.0
    %1656 = vmatprep.subr.mxu0 0.0
    %1657 = vmatpush2.msra.mxu0 0.0
    %1658 = vmatprep.subr.mxu0 0.0
    %1659 = vmatpush2.msra.mxu0 0.0
    %1660 = vmatprep.subr.mxu0 0.0
    %1661 = vmatpush2.msra.mxu0 0.0
    %1662 = vmatprep.subr.mxu0 0.0
    %1663 = vmatpush2.msra.mxu0 0.0
    %1664 = vmatprep.subr.mxu0 0.0
    %1665 = vmatpush2.msra.mxu0 0.0
    %1666 = vmatprep.subr.mxu0 0.0
    %1667 = vmatpush2.msra.mxu0 0.0
    %1668 = vmatprep.subr.mxu0 0.0
    %1669 = vmatpush2.msra.mxu0 0.0
    %1670 = vmatprep.mubr.f32.mxu0 0.0
    %1671 = vmatmul.mubr.f32.gmra.mxu0 %v1534
    %v1672 = vpop.f32.mrf.mxu0
    %v1673 = vadd.f32 0.0, %v1672
    %v1674 = vpop.f32.mrf.mxu0
    %1675 = vdwg.mxu0
    %1676 = vmatprep.subr.mxu0 0.0
    %1677 = vmatpush1.msra.mxu0 0.0
    %1678 = vmatprep.subr.mxu0 0.0
    %1679 = vmatpush1.msra.mxu0 0.0
    %1680 = vmatprep.subr.mxu0 0.0
    %1681 = vmatpush1.msra.mxu0 0.0
    %1682 = vmatprep.subr.mxu0 0.0
    %1683 = vmatpush1.msra.mxu0 0.0
    %1684 = vmatprep.subr.mxu0 0.0
    %1685 = vmatpush1.msra.mxu0 0.0
    %1686 = vmatprep.subr.mxu0 0.0
    %1687 = vmatpush1.msra.mxu0 0.0
    %1688 = vmatprep.subr.mxu0 0.0
    %1689 = vmatpush1.msra.mxu0 0.0
    %1690 = vmatprep.subr.mxu0 0.0
    %1691 = vmatpush1.msra.mxu0 0.0
    %1692 = vmatprep.subr.mxu0 0.0
    %1693 = vmatpush1.msra.mxu0 0.0
    %1694 = vmatprep.subr.mxu0 0.0
    %1695 = vmatpush1.msra.mxu0 0.0
    %1696 = vmatprep.subr.mxu0 0.0
    %1697 = vmatpush1.msra.mxu0 0.0
    %1698 = vmatprep.subr.mxu0 0.0
    %1699 = vmatpush1.msra.mxu0 0.0
    %1700 = vmatprep.subr.mxu0 0.0
    %1701 = vmatpush1.msra.mxu0 %v395
    %1702 = vmatprep.subr.mxu0 0.0
    %1703 = vmatpush1.msra.mxu0 %v394
    %1704 = vmatprep.subr.mxu0 0.0
    %1705 = vmatpush1.msra.mxu0 %v393
    %1706 = vmatprep.subr.mxu0 0.0
    %1707 = vmatpush1.msra.mxu0 %v392
    %1708 = vmatprep.subr.mxu0 0.0
    %1709 = vmatpush2.msra.mxu0 0.0
    %1710 = vmatprep.subr.mxu0 0.0
    %1711 = vmatpush2.msra.mxu0 0.0
    %1712 = vmatprep.subr.mxu0 0.0
    %1713 = vmatpush2.msra.mxu0 0.0
    %1714 = vmatprep.subr.mxu0 0.0
    %1715 = vmatpush2.msra.mxu0 0.0
    %1716 = vmatprep.subr.mxu0 0.0
    %1717 = vmatpush2.msra.mxu0 0.0
    %1718 = vmatprep.subr.mxu0 0.0
    %1719 = vmatpush2.msra.mxu0 0.0
    %1720 = vmatprep.subr.mxu0 0.0
    %1721 = vmatpush2.msra.mxu0 0.0
    %1722 = vmatprep.subr.mxu0 0.0
    %1723 = vmatpush2.msra.mxu0 0.0
    %1724 = vmatprep.subr.mxu0 0.0
    %1725 = vmatpush2.msra.mxu0 0.0
    %1726 = vmatprep.subr.mxu0 0.0
    %1727 = vmatpush2.msra.mxu0 0.0
    %1728 = vmatprep.subr.mxu0 0.0
    %1729 = vmatpush2.msra.mxu0 0.0
    %1730 = vmatprep.subr.mxu0 0.0
    %1731 = vmatpush2.msra.mxu0 0.0
    %1732 = vmatprep.subr.mxu0 0.0
    %1733 = vmatpush2.msra.mxu0 0.0
    %1734 = vmatprep.subr.mxu0 0.0
    %1735 = vmatpush2.msra.mxu0 0.0
    %1736 = vmatprep.subr.mxu0 0.0
    %1737 = vmatpush2.msra.mxu0 0.0
    %1738 = vmatprep.subr.mxu0 0.0
    %1739 = vmatpush2.msra.mxu0 0.0
    %1740 = vmatprep.mubr.f32.mxu0 0.0
    %1741 = vmatmul.mubr.f32.gmra.mxu0 %v1534
    %v1742 = vpop.f32.mrf.mxu0
    %v1743 = vadd.f32 %v401, %v1742
    %v1744 = vpop.f32.mrf.mxu0
    %1745 = vdwg.mxu0
    %v1747 = vrot.slane %v1603, 4
    %v1748 = vrot.slane %v1603, 5
    %v1751 = vadd.f32 %v210, %v1747
    %v1752 = vadd.f32 %v215, %v1748
    %v1753 = vxor.u32 %v1751, 2147483648
    %v1754 = vxor.u32 %v1752, 2147483648
    %v1755 = vmul.f32 %v1753, 1.442695
    %v1756 = vpow.pop %v1755
    %v1757 = vmul.f32 %v1754, 1.442695
    %v1758 = vpow.pop %v1757
    %v1759 = vadd.f32 %v1756, 1.0
    %v1760 = vadd.f32 %v1758, 1.0
    %v1761 = vrcp.pop %v1759
    %v1762 = vmul.f32 1.0, %v1761
    %v1763 = vrcp.pop %v1760
    %v1764 = vmul.f32 1.0, %v1763
    %v1766 = vrot.slane %v1673, 4
    %v1767 = vrot.slane %v1673, 5
    %v1770 = vadd.f32 %v293, %v1766
    %v1771 = vadd.f32 %v298, %v1767
    %v1772 = vxor.u32 %v1770, 2147483648
    %v1773 = vxor.u32 %v1771, 2147483648
    %v1774 = vmul.f32 %v1772, 1.442695
    %v1775 = vpow.pop %v1774
    %v1776 = vmul.f32 %v1773, 1.442695
    %v1777 = vpow.pop %v1776
    %v1778 = vadd.f32 %v1775, 1.0
    %v1779 = vadd.f32 %v1777, 1.0
    %v1780 = vrcp.pop %v1778
    %v1781 = vmul.f32 1.0, %v1780
    %v1782 = vrcp.pop %v1779
    %v1783 = vmul.f32 1.0, %v1782
    %v1785 = vrot.slane %v1743, 4
    %v1786 = vrot.slane %v1743, 5
    %v1789 = vmul.f32 %v1762, %v1785
    %v1790 = vmul.f32 %v1764, %v1786
    %v1791 = vadd.f32 %v376, %v1789
    %v1792 = vadd.f32 %v381, %v1790
    %v1793 = vtanh.pop %v1791
    %v1794 = vtanh.pop %v1792
    %v1797 = vrot.slane %v1793, 1
    %v1798 = vrot.slane %v1794, 1
    %v1801 = vsub.f32 %v1524, %v1797
    %v1802 = vsub.f32 %v1525, %v1798
    %v1805 = vrot.slane %v1801, 7
    %v1806 = vrot.slane %v1802, 7
    %v1809 = vmul.f32 %v1781, %v1805
    %v1810 = vmul.f32 %v1783, %v1806
    %v1811 = vadd.f32 %v1793, %v1809
    %v1812 = vadd.f32 %v1794, %v1810
    %vm1813 = vcmask 258052
    %1814 = vst.msk [vmem:[#allocation2] sm:$0x10] %vm1813, %v1811
    %1815 = vst.msk [vmem:[#allocation2 + $0x8] sm:$0x10] %vm1813, %v1812
    %v1818 = vrot.slane %v1811, 4
    %v1819 = vrot.slane %v1812, 3
    %v1820 = vsel %vm675, %v1819, %v1818
    %v1821 = vsel %vm403, %v1820, 0
    %1823 = vmatprep.subr.mxu0 0.0
    %1824 = vmatpush1.msra.mxu0 0.0
    %1825 = vmatprep.subr.mxu0 0.0
    %1826 = vmatpush1.msra.mxu0 0.0
    %1827 = vmatprep.subr.mxu0 0.0
    %1828 = vmatpush1.msra.mxu0 0.0
    %1829 = vmatprep.subr.mxu0 0.0
    %1830 = vmatpush1.msra.mxu0 0.0
    %1831 = vmatprep.subr.mxu0 0.0
    %1832 = vmatpush1.msra.mxu0 0.0
    %1833 = vmatprep.subr.mxu0 0.0
    %1834 = vmatpush1.msra.mxu0 0.0
    %1835 = vmatprep.subr.mxu0 0.0
    %1836 = vmatpush1.msra.mxu0 0.0
    %1837 = vmatprep.subr.mxu0 0.0
    %1838 = vmatpush1.msra.mxu0 0.0
    %1839 = vmatprep.subr.mxu0 0.0
    %1840 = vmatpush1.msra.mxu0 0.0
    %1841 = vmatprep.subr.mxu0 0.0
    %1842 = vmatpush1.msra.mxu0 0.0
    %1843 = vmatprep.subr.mxu0 0.0
    %1844 = vmatpush1.msra.mxu0 0.0
    %1845 = vmatprep.subr.mxu0 0.0
    %1846 = vmatpush1.msra.mxu0 0.0
    %1847 = vmatprep.subr.mxu0 0.0
    %1848 = vmatpush1.msra.mxu0 %v387
    %1849 = vmatprep.subr.mxu0 0.0
    %1850 = vmatpush1.msra.mxu0 %v386
    %1851 = vmatprep.subr.mxu0 0.0
    %1852 = vmatpush1.msra.mxu0 %v385
    %1853 = vmatprep.subr.mxu0 0.0
    %1854 = vmatpush1.msra.mxu0 %v384
    %1855 = vmatprep.subr.mxu0 0.0
    %1856 = vmatpush2.msra.mxu0 0.0
    %1857 = vmatprep.subr.mxu0 0.0
    %1858 = vmatpush2.msra.mxu0 0.0
    %1859 = vmatprep.subr.mxu0 0.0
    %1860 = vmatpush2.msra.mxu0 0.0
    %1861 = vmatprep.subr.mxu0 0.0
    %1862 = vmatpush2.msra.mxu0 0.0
    %1863 = vmatprep.subr.mxu0 0.0
    %1864 = vmatpush2.msra.mxu0 0.0
    %1865 = vmatprep.subr.mxu0 0.0
    %1866 = vmatpush2.msra.mxu0 0.0
    %1867 = vmatprep.subr.mxu0 0.0
    %1868 = vmatpush2.msra.mxu0 0.0
    %1869 = vmatprep.subr.mxu0 0.0
    %1870 = vmatpush2.msra.mxu0 0.0
    %1871 = vmatprep.subr.mxu0 0.0
    %1872 = vmatpush2.msra.mxu0 0.0
    %1873 = vmatprep.subr.mxu0 0.0
    %1874 = vmatpush2.msra.mxu0 0.0
    %1875 = vmatprep.subr.mxu0 0.0
    %1876 = vmatpush2.msra.mxu0 0.0
    %1877 = vmatprep.subr.mxu0 0.0
    %1878 = vmatpush2.msra.mxu0 0.0
    %1879 = vmatprep.subr.mxu0 0.0
    %1880 = vmatpush2.msra.mxu0 0.0
    %1881 = vmatprep.subr.mxu0 0.0
    %1882 = vmatpush2.msra.mxu0 0.0
    %1883 = vmatprep.subr.mxu0 0.0
    %1884 = vmatpush2.msra.mxu0 0.0
    %1885 = vmatprep.subr.mxu0 0.0
    %1886 = vmatpush2.msra.mxu0 0.0
    %1887 = vmatprep.mubr.f32.mxu0 0.0
    %1888 = vmatmul.mubr.f32.gmra.mxu0 %v1821
    %v1889 = vpop.f32.mrf.mxu0
    %v1890 = vadd.f32 0.0, %v1889
    %v1891 = vpop.f32.mrf.mxu0
    %1892 = vdwg.mxu0
    %1893 = vmatprep.subr.mxu0 0.0
    %1894 = vmatpush1.msra.mxu0 0.0
    %1895 = vmatprep.subr.mxu0 0.0
    %1896 = vmatpush1.msra.mxu0 0.0
    %1897 = vmatprep.subr.mxu0 0.0
    %1898 = vmatpush1.msra.mxu0 0.0
    %1899 = vmatprep.subr.mxu0 0.0
    %1900 = vmatpush1.msra.mxu0 0.0
    %1901 = vmatprep.subr.mxu0 0.0
    %1902 = vmatpush1.msra.mxu0 0.0
    %1903 = vmatprep.subr.mxu0 0.0
    %1904 = vmatpush1.msra.mxu0 0.0
    %1905 = vmatprep.subr.mxu0 0.0
    %1906 = vmatpush1.msra.mxu0 0.0
    %1907 = vmatprep.subr.mxu0 0.0
    %1908 = vmatpush1.msra.mxu0 0.0
    %1909 = vmatprep.subr.mxu0 0.0
    %1910 = vmatpush1.msra.mxu0 0.0
    %1911 = vmatprep.subr.mxu0 0.0
    %1912 = vmatpush1.msra.mxu0 0.0
    %1913 = vmatprep.subr.mxu0 0.0
    %1914 = vmatpush1.msra.mxu0 0.0
    %1915 = vmatprep.subr.mxu0 0.0
    %1916 = vmatpush1.msra.mxu0 0.0
    %1917 = vmatprep.subr.mxu0 0.0
    %1918 = vmatpush1.msra.mxu0 %v391
    %1919 = vmatprep.subr.mxu0 0.0
    %1920 = vmatpush1.msra.mxu0 %v390
    %1921 = vmatprep.subr.mxu0 0.0
    %1922 = vmatpush1.msra.mxu0 %v389
    %1923 = vmatprep.subr.mxu0 0.0
    %1924 = vmatpush1.msra.mxu0 %v388
    %1925 = vmatprep.subr.mxu0 0.0
    %1926 = vmatpush2.msra.mxu0 0.0
    %1927 = vmatprep.subr.mxu0 0.0
    %1928 = vmatpush2.msra.mxu0 0.0
    %1929 = vmatprep.subr.mxu0 0.0
    %1930 = vmatpush2.msra.mxu0 0.0
    %1931 = vmatprep.subr.mxu0 0.0
    %1932 = vmatpush2.msra.mxu0 0.0
    %1933 = vmatprep.subr.mxu0 0.0
    %1934 = vmatpush2.msra.mxu0 0.0
    %1935 = vmatprep.subr.mxu0 0.0
    %1936 = vmatpush2.msra.mxu0 0.0
    %1937 = vmatprep.subr.mxu0 0.0
    %1938 = vmatpush2.msra.mxu0 0.0
    %1939 = vmatprep.subr.mxu0 0.0
    %1940 = vmatpush2.msra.mxu0 0.0
    %1941 = vmatprep.subr.mxu0 0.0
    %1942 = vmatpush2.msra.mxu0 0.0
    %1943 = vmatprep.subr.mxu0 0.0
    %1944 = vmatpush2.msra.mxu0 0.0
    %1945 = vmatprep.subr.mxu0 0.0
    %1946 = vmatpush2.msra.mxu0 0.0
    %1947 = vmatprep.subr.mxu0 0.0
    %1948 = vmatpush2.msra.mxu0 0.0
    %1949 = vmatprep.subr.mxu0 0.0
    %1950 = vmatpush2.msra.mxu0 0.0
    %1951 = vmatprep.subr.mxu0 0.0
    %1952 = vmatpush2.msra.mxu0 0.0
    %1953 = vmatprep.subr.mxu0 0.0
    %1954 = vmatpush2.msra.mxu0 0.0
    %1955 = vmatprep.subr.mxu0 0.0
    %1956 = vmatpush2.msra.mxu0 0.0
    %1957 = vmatprep.mubr.f32.mxu0 0.0
    %1958 = vmatmul.mubr.f32.gmra.mxu0 %v1821
    %v1959 = vpop.f32.mrf.mxu0
    %v1960 = vadd.f32 0.0, %v1959
    %v1961 = vpop.f32.mrf.mxu0
    %1962 = vdwg.mxu0
    %1963 = vmatprep.subr.mxu0 0.0
    %1964 = vmatpush1.msra.mxu0 0.0
    %1965 = vmatprep.subr.mxu0 0.0
    %1966 = vmatpush1.msra.mxu0 0.0
    %1967 = vmatprep.subr.mxu0 0.0
    %1968 = vmatpush1.msra.mxu0 0.0
    %1969 = vmatprep.subr.mxu0 0.0
    %1970 = vmatpush1.msra.mxu0 0.0
    %1971 = vmatprep.subr.mxu0 0.0
    %1972 = vmatpush1.msra.mxu0 0.0
    %1973 = vmatprep.subr.mxu0 0.0
    %1974 = vmatpush1.msra.mxu0 0.0
    %1975 = vmatprep.subr.mxu0 0.0
    %1976 = vmatpush1.msra.mxu0 0.0
    %1977 = vmatprep.subr.mxu0 0.0
    %1978 = vmatpush1.msra.mxu0 0.0
    %1979 = vmatprep.subr.mxu0 0.0
    %1980 = vmatpush1.msra.mxu0 0.0
    %1981 = vmatprep.subr.mxu0 0.0
    %1982 = vmatpush1.msra.mxu0 0.0
    %1983 = vmatprep.subr.mxu0 0.0
    %1984 = vmatpush1.msra.mxu0 0.0
    %1985 = vmatprep.subr.mxu0 0.0
    %1986 = vmatpush1.msra.mxu0 0.0
    %1987 = vmatprep.subr.mxu0 0.0
    %1988 = vmatpush1.msra.mxu0 %v395
    %1989 = vmatprep.subr.mxu0 0.0
    %1990 = vmatpush1.msra.mxu0 %v394
    %1991 = vmatprep.subr.mxu0 0.0
    %1992 = vmatpush1.msra.mxu0 %v393
    %1993 = vmatprep.subr.mxu0 0.0
    %1994 = vmatpush1.msra.mxu0 %v392
    %1995 = vmatprep.subr.mxu0 0.0
    %1996 = vmatpush2.msra.mxu0 0.0
    %1997 = vmatprep.subr.mxu0 0.0
    %1998 = vmatpush2.msra.mxu0 0.0
    %1999 = vmatprep.subr.mxu0 0.0
    %2000 = vmatpush2.msra.mxu0 0.0
    %2001 = vmatprep.subr.mxu0 0.0
    %2002 = vmatpush2.msra.mxu0 0.0
    %2003 = vmatprep.subr.mxu0 0.0
    %2004 = vmatpush2.msra.mxu0 0.0
    %2005 = vmatprep.subr.mxu0 0.0
    %2006 = vmatpush2.msra.mxu0 0.0
    %2007 = vmatprep.subr.mxu0 0.0
    %2008 = vmatpush2.msra.mxu0 0.0
    %2009 = vmatprep.subr.mxu0 0.0
    %2010 = vmatpush2.msra.mxu0 0.0
    %2011 = vmatprep.subr.mxu0 0.0
    %2012 = vmatpush2.msra.mxu0 0.0
    %2013 = vmatprep.subr.mxu0 0.0
    %2014 = vmatpush2.msra.mxu0 0.0
    %2015 = vmatprep.subr.mxu0 0.0
    %2016 = vmatpush2.msra.mxu0 0.0
    %2017 = vmatprep.subr.mxu0 0.0
    %2018 = vmatpush2.msra.mxu0 0.0
    %2019 = vmatprep.subr.mxu0 0.0
    %2020 = vmatpush2.msra.mxu0 0.0
    %2021 = vmatprep.subr.mxu0 0.0
    %2022 = vmatpush2.msra.mxu0 0.0
    %2023 = vmatprep.subr.mxu0 0.0
    %2024 = vmatpush2.msra.mxu0 0.0
    %2025 = vmatprep.subr.mxu0 0.0
    %2026 = vmatpush2.msra.mxu0 0.0
    %2027 = vmatprep.mubr.f32.mxu0 0.0
    %2028 = vmatmul.mubr.f32.gmra.mxu0 %v1821
    %v2029 = vpop.f32.mrf.mxu0
    %v2030 = vadd.f32 %v401, %v2029
    %v2031 = vpop.f32.mrf.mxu0
    %2032 = vdwg.mxu0
    %v2034 = vrot.slane %v1890, 3
    %v2035 = vrot.slane %v1890, 4
    %v2038 = vadd.f32 %v210, %v2034
    %v2039 = vadd.f32 %v215, %v2035
    %v2040 = vxor.u32 %v2038, 2147483648
    %v2041 = vxor.u32 %v2039, 2147483648
    %v2042 = vmul.f32 %v2040, 1.442695
    %v2043 = vpow.pop %v2042
    %v2044 = vmul.f32 %v2041, 1.442695
    %v2045 = vpow.pop %v2044
    %v2046 = vadd.f32 %v2043, 1.0
    %v2047 = vadd.f32 %v2045, 1.0
    %v2048 = vrcp.pop %v2046
    %v2049 = vmul.f32 1.0, %v2048
    %v2050 = vrcp.pop %v2047
    %v2051 = vmul.f32 1.0, %v2050
    %v2053 = vrot.slane %v1960, 3
    %v2054 = vrot.slane %v1960, 4
    %v2057 = vadd.f32 %v293, %v2053
    %v2058 = vadd.f32 %v298, %v2054
    %v2059 = vxor.u32 %v2057, 2147483648
    %v2060 = vxor.u32 %v2058, 2147483648
    %v2061 = vmul.f32 %v2059, 1.442695
    %v2062 = vpow.pop %v2061
    %v2063 = vmul.f32 %v2060, 1.442695
    %v2064 = vpow.pop %v2063
    %v2065 = vadd.f32 %v2062, 1.0
    %v2066 = vadd.f32 %v2064, 1.0
    %v2067 = vrcp.pop %v2065
    %v2068 = vmul.f32 1.0, %v2067
    %v2069 = vrcp.pop %v2066
    %v2070 = vmul.f32 1.0, %v2069
    %v2072 = vrot.slane %v2030, 3
    %v2073 = vrot.slane %v2030, 4
    %v2076 = vmul.f32 %v2049, %v2072
    %v2077 = vmul.f32 %v2051, %v2073
    %v2078 = vadd.f32 %v376, %v2076
    %v2079 = vadd.f32 %v381, %v2077
    %v2080 = vtanh.pop %v2078
    %v2081 = vtanh.pop %v2079
    %v2084 = vrot.slane %v2080, 1
    %v2085 = vrot.slane %v2081, 1
    %v2088 = vsub.f32 %v1811, %v2084
    %v2089 = vsub.f32 %v1812, %v2085
    %v2092 = vrot.slane %v2088, 7
    %v2093 = vrot.slane %v2089, 7
    %v2096 = vmul.f32 %v2068, %v2092
    %v2097 = vmul.f32 %v2070, %v2093
    %v2098 = vadd.f32 %v2080, %v2096
    %v2099 = vadd.f32 %v2081, %v2097
    %vm2100 = vcmask 259077
    %2101 = vst.msk [vmem:[#allocation2] sm:$0x20] %vm2100, %v2098
    %2102 = vst.msk [vmem:[#allocation2 + $0x8] sm:$0x20] %vm2100, %v2099
    %v2105 = vrot.slane %v2098, 5
    %v2106 = vrot.slane %v2099, 4
    %v2107 = vsel %vm675, %v2106, %v2105
    %v2108 = vsel %vm403, %v2107, 0
    %2110 = vmatprep.subr.mxu0 0.0
    %2111 = vmatpush1.msra.mxu0 0.0
    %2112 = vmatprep.subr.mxu0 0.0
    %2113 = vmatpush1.msra.mxu0 0.0
    %2114 = vmatprep.subr.mxu0 0.0
    %2115 = vmatpush1.msra.mxu0 0.0
    %2116 = vmatprep.subr.mxu0 0.0
    %2117 = vmatpush1.msra.mxu0 0.0
    %2118 = vmatprep.subr.mxu0 0.0
    %2119 = vmatpush1.msra.mxu0 0.0
    %2120 = vmatprep.subr.mxu0 0.0
    %2121 = vmatpush1.msra.mxu0 0.0
    %2122 = vmatprep.subr.mxu0 0.0
    %2123 = vmatpush1.msra.mxu0 0.0
    %2124 = vmatprep.subr.mxu0 0.0
    %2125 = vmatpush1.msra.mxu0 0.0
    %2126 = vmatprep.subr.mxu0 0.0
    %2127 = vmatpush1.msra.mxu0 0.0
    %2128 = vmatprep.subr.mxu0 0.0
    %2129 = vmatpush1.msra.mxu0 0.0
    %2130 = vmatprep.subr.mxu0 0.0
    %2131 = vmatpush1.msra.mxu0 0.0
    %2132 = vmatprep.subr.mxu0 0.0
    %2133 = vmatpush1.msra.mxu0 0.0
    %2134 = vmatprep.subr.mxu0 0.0
    %2135 = vmatpush1.msra.mxu0 %v387
    %2136 = vmatprep.subr.mxu0 0.0
    %2137 = vmatpush1.msra.mxu0 %v386
    %2138 = vmatprep.subr.mxu0 0.0
    %2139 = vmatpush1.msra.mxu0 %v385
    %2140 = vmatprep.subr.mxu0 0.0
    %2141 = vmatpush1.msra.mxu0 %v384
    %2142 = vmatprep.subr.mxu0 0.0
    %2143 = vmatpush2.msra.mxu0 0.0
    %2144 = vmatprep.subr.mxu0 0.0
    %2145 = vmatpush2.msra.mxu0 0.0
    %2146 = vmatprep.subr.mxu0 0.0
    %2147 = vmatpush2.msra.mxu0 0.0
    %2148 = vmatprep.subr.mxu0 0.0
    %2149 = vmatpush2.msra.mxu0 0.0
    %2150 = vmatprep.subr.mxu0 0.0
    %2151 = vmatpush2.msra.mxu0 0.0
    %2152 = vmatprep.subr.mxu0 0.0
    %2153 = vmatpush2.msra.mxu0 0.0
    %2154 = vmatprep.subr.mxu0 0.0
    %2155 = vmatpush2.msra.mxu0 0.0
    %2156 = vmatprep.subr.mxu0 0.0
    %2157 = vmatpush2.msra.mxu0 0.0
    %2158 = vmatprep.subr.mxu0 0.0
    %2159 = vmatpush2.msra.mxu0 0.0
    %2160 = vmatprep.subr.mxu0 0.0
    %2161 = vmatpush2.msra.mxu0 0.0
    %2162 = vmatprep.subr.mxu0 0.0
    %2163 = vmatpush2.msra.mxu0 0.0
    %2164 = vmatprep.subr.mxu0 0.0
    %2165 = vmatpush2.msra.mxu0 0.0
    %2166 = vmatprep.subr.mxu0 0.0
    %2167 = vmatpush2.msra.mxu0 0.0
    %2168 = vmatprep.subr.mxu0 0.0
    %2169 = vmatpush2.msra.mxu0 0.0
    %2170 = vmatprep.subr.mxu0 0.0
    %2171 = vmatpush2.msra.mxu0 0.0
    %2172 = vmatprep.subr.mxu0 0.0
    %2173 = vmatpush2.msra.mxu0 0.0
    %2174 = vmatprep.mubr.f32.mxu0 0.0
    %2175 = vmatmul.mubr.f32.gmra.mxu0 %v2108
    %v2176 = vpop.f32.mrf.mxu0
    %v2177 = vadd.f32 0.0, %v2176
    %v2178 = vpop.f32.mrf.mxu0
    %2179 = vdwg.mxu0
    %2180 = vmatprep.subr.mxu0 0.0
    %2181 = vmatpush1.msra.mxu0 0.0
    %2182 = vmatprep.subr.mxu0 0.0
    %2183 = vmatpush1.msra.mxu0 0.0
    %2184 = vmatprep.subr.mxu0 0.0
    %2185 = vmatpush1.msra.mxu0 0.0
    %2186 = vmatprep.subr.mxu0 0.0
    %2187 = vmatpush1.msra.mxu0 0.0
    %2188 = vmatprep.subr.mxu0 0.0
    %2189 = vmatpush1.msra.mxu0 0.0
    %2190 = vmatprep.subr.mxu0 0.0
    %2191 = vmatpush1.msra.mxu0 0.0
    %2192 = vmatprep.subr.mxu0 0.0
    %2193 = vmatpush1.msra.mxu0 0.0
    %2194 = vmatprep.subr.mxu0 0.0
    %2195 = vmatpush1.msra.mxu0 0.0
    %2196 = vmatprep.subr.mxu0 0.0
    %2197 = vmatpush1.msra.mxu0 0.0
    %2198 = vmatprep.subr.mxu0 0.0
    %2199 = vmatpush1.msra.mxu0 0.0
    %2200 = vmatprep.subr.mxu0 0.0
    %2201 = vmatpush1.msra.mxu0 0.0
    %2202 = vmatprep.subr.mxu0 0.0
    %2203 = vmatpush1.msra.mxu0 0.0
    %2204 = vmatprep.subr.mxu0 0.0
    %2205 = vmatpush1.msra.mxu0 %v391
    %2206 = vmatprep.subr.mxu0 0.0
    %2207 = vmatpush1.msra.mxu0 %v390
    %2208 = vmatprep.subr.mxu0 0.0
    %2209 = vmatpush1.msra.mxu0 %v389
    %2210 = vmatprep.subr.mxu0 0.0
    %2211 = vmatpush1.msra.mxu0 %v388
    %2212 = vmatprep.subr.mxu0 0.0
    %2213 = vmatpush2.msra.mxu0 0.0
    %2214 = vmatprep.subr.mxu0 0.0
    %2215 = vmatpush2.msra.mxu0 0.0
    %2216 = vmatprep.subr.mxu0 0.0
    %2217 = vmatpush2.msra.mxu0 0.0
    %2218 = vmatprep.subr.mxu0 0.0
    %2219 = vmatpush2.msra.mxu0 0.0
    %2220 = vmatprep.subr.mxu0 0.0
    %2221 = vmatpush2.msra.mxu0 0.0
    %2222 = vmatprep.subr.mxu0 0.0
    %2223 = vmatpush2.msra.mxu0 0.0
    %2224 = vmatprep.subr.mxu0 0.0
    %2225 = vmatpush2.msra.mxu0 0.0
    %2226 = vmatprep.subr.mxu0 0.0
    %2227 = vmatpush2.msra.mxu0 0.0
    %2228 = vmatprep.subr.mxu0 0.0
    %2229 = vmatpush2.msra.mxu0 0.0
    %2230 = vmatprep.subr.mxu0 0.0
    %2231 = vmatpush2.msra.mxu0 0.0
    %2232 = vmatprep.subr.mxu0 0.0
    %2233 = vmatpush2.msra.mxu0 0.0
    %2234 = vmatprep.subr.mxu0 0.0
    %2235 = vmatpush2.msra.mxu0 0.0
    %2236 = vmatprep.subr.mxu0 0.0
    %2237 = vmatpush2.msra.mxu0 0.0
    %2238 = vmatprep.subr.mxu0 0.0
    %2239 = vmatpush2.msra.mxu0 0.0
    %2240 = vmatprep.subr.mxu0 0.0
    %2241 = vmatpush2.msra.mxu0 0.0
    %2242 = vmatprep.subr.mxu0 0.0
    %2243 = vmatpush2.msra.mxu0 0.0
    %2244 = vmatprep.mubr.f32.mxu0 0.0
    %2245 = vmatmul.mubr.f32.gmra.mxu0 %v2108
    %v2246 = vpop.f32.mrf.mxu0
    %v2247 = vadd.f32 0.0, %v2246
    %v2248 = vpop.f32.mrf.mxu0
    %2249 = vdwg.mxu0
    %2250 = vmatprep.subr.mxu0 0.0
    %2251 = vmatpush1.msra.mxu0 0.0
    %2252 = vmatprep.subr.mxu0 0.0
    %2253 = vmatpush1.msra.mxu0 0.0
    %2254 = vmatprep.subr.mxu0 0.0
    %2255 = vmatpush1.msra.mxu0 0.0
    %2256 = vmatprep.subr.mxu0 0.0
    %2257 = vmatpush1.msra.mxu0 0.0
    %2258 = vmatprep.subr.mxu0 0.0
    %2259 = vmatpush1.msra.mxu0 0.0
    %2260 = vmatprep.subr.mxu0 0.0
    %2261 = vmatpush1.msra.mxu0 0.0
    %2262 = vmatprep.subr.mxu0 0.0
    %2263 = vmatpush1.msra.mxu0 0.0
    %2264 = vmatprep.subr.mxu0 0.0
    %2265 = vmatpush1.msra.mxu0 0.0
    %2266 = vmatprep.subr.mxu0 0.0
    %2267 = vmatpush1.msra.mxu0 0.0
    %2268 = vmatprep.subr.mxu0 0.0
    %2269 = vmatpush1.msra.mxu0 0.0
    %2270 = vmatprep.subr.mxu0 0.0
    %2271 = vmatpush1.msra.mxu0 0.0
    %2272 = vmatprep.subr.mxu0 0.0
    %2273 = vmatpush1.msra.mxu0 0.0
    %2274 = vmatprep.subr.mxu0 0.0
    %2275 = vmatpush1.msra.mxu0 %v395
    %2276 = vmatprep.subr.mxu0 0.0
    %2277 = vmatpush1.msra.mxu0 %v394
    %2278 = vmatprep.subr.mxu0 0.0
    %2279 = vmatpush1.msra.mxu0 %v393
    %2280 = vmatprep.subr.mxu0 0.0
    %2281 = vmatpush1.msra.mxu0 %v392
    %2282 = vmatprep.subr.mxu0 0.0
    %2283 = vmatpush2.msra.mxu0 0.0
    %2284 = vmatprep.subr.mxu0 0.0
    %2285 = vmatpush2.msra.mxu0 0.0
    %2286 = vmatprep.subr.mxu0 0.0
    %2287 = vmatpush2.msra.mxu0 0.0
    %2288 = vmatprep.subr.mxu0 0.0
    %2289 = vmatpush2.msra.mxu0 0.0
    %2290 = vmatprep.subr.mxu0 0.0
    %2291 = vmatpush2.msra.mxu0 0.0
    %2292 = vmatprep.subr.mxu0 0.0
    %2293 = vmatpush2.msra.mxu0 0.0
    %2294 = vmatprep.subr.mxu0 0.0
    %2295 = vmatpush2.msra.mxu0 0.0
    %2296 = vmatprep.subr.mxu0 0.0
    %2297 = vmatpush2.msra.mxu0 0.0
    %2298 = vmatprep.subr.mxu0 0.0
    %2299 = vmatpush2.msra.mxu0 0.0
    %2300 = vmatprep.subr.mxu0 0.0
    %2301 = vmatpush2.msra.mxu0 0.0
    %2302 = vmatprep.subr.mxu0 0.0
    %2303 = vmatpush2.msra.mxu0 0.0
    %2304 = vmatprep.subr.mxu0 0.0
    %2305 = vmatpush2.msra.mxu0 0.0
    %2306 = vmatprep.subr.mxu0 0.0
    %2307 = vmatpush2.msra.mxu0 0.0
    %2308 = vmatprep.subr.mxu0 0.0
    %2309 = vmatpush2.msra.mxu0 0.0
    %2310 = vmatprep.subr.mxu0 0.0
    %2311 = vmatpush2.msra.mxu0 0.0
    %2312 = vmatprep.subr.mxu0 0.0
    %2313 = vmatpush2.msra.mxu0 0.0
    %2314 = vmatprep.mubr.f32.mxu0 0.0
    %2315 = vmatmul.mubr.f32.gmra.mxu0 %v2108
    %v2316 = vpop.f32.mrf.mxu0
    %v2317 = vadd.f32 %v401, %v2316
    %v2318 = vpop.f32.mrf.mxu0
    %2319 = vdwg.mxu0
    %v2321 = vrot.slane %v2177, 2
    %v2322 = vrot.slane %v2177, 3
    %v2325 = vadd.f32 %v210, %v2321
    %v2326 = vadd.f32 %v215, %v2322
    %v2327 = vxor.u32 %v2325, 2147483648
    %v2328 = vxor.u32 %v2326, 2147483648
    %v2329 = vmul.f32 %v2327, 1.442695
    %v2330 = vpow.pop %v2329
    %v2331 = vmul.f32 %v2328, 1.442695
    %v2332 = vpow.pop %v2331
    %v2333 = vadd.f32 %v2330, 1.0
    %v2334 = vadd.f32 %v2332, 1.0
    %v2335 = vrcp.pop %v2333
    %v2336 = vmul.f32 1.0, %v2335
    %v2337 = vrcp.pop %v2334
    %v2338 = vmul.f32 1.0, %v2337
    %v2340 = vrot.slane %v2247, 2
    %v2341 = vrot.slane %v2247, 3
    %v2344 = vadd.f32 %v293, %v2340
    %v2345 = vadd.f32 %v298, %v2341
    %v2346 = vxor.u32 %v2344, 2147483648
    %v2347 = vxor.u32 %v2345, 2147483648
    %v2348 = vmul.f32 %v2346, 1.442695
    %v2349 = vpow.pop %v2348
    %v2350 = vmul.f32 %v2347, 1.442695
    %v2351 = vpow.pop %v2350
    %v2352 = vadd.f32 %v2349, 1.0
    %v2353 = vadd.f32 %v2351, 1.0
    %v2354 = vrcp.pop %v2352
    %v2355 = vmul.f32 1.0, %v2354
    %v2356 = vrcp.pop %v2353
    %v2357 = vmul.f32 1.0, %v2356
    %v2359 = vrot.slane %v2317, 2
    %v2360 = vrot.slane %v2317, 3
    %v2363 = vmul.f32 %v2336, %v2359
    %v2364 = vmul.f32 %v2338, %v2360
    %v2365 = vadd.f32 %v376, %v2363
    %v2366 = vadd.f32 %v381, %v2364
    %v2367 = vtanh.pop %v2365
    %v2368 = vtanh.pop %v2366
    %v2371 = vrot.slane %v2367, 1
    %v2372 = vrot.slane %v2368, 1
    %v2375 = vsub.f32 %v2098, %v2371
    %v2376 = vsub.f32 %v2099, %v2372
    %v2379 = vrot.slane %v2375, 7
    %v2380 = vrot.slane %v2376, 7
    %v2383 = vmul.f32 %v2355, %v2379
    %v2384 = vmul.f32 %v2357, %v2380
    %v2385 = vadd.f32 %v2367, %v2383
    %v2386 = vadd.f32 %v2368, %v2384
    %vm2387 = vcmask 260102
    %2388 = vst.msk [vmem:[#allocation2] sm:$0x40] %vm2387, %v2385
    %2389 = vst.msk [vmem:[#allocation2 + $0x8] sm:$0x40] %vm2387, %v2386
    %v2392 = vrot.slane %v2385, 6
    %v2393 = vrot.slane %v2386, 5
    %v2394 = vsel %vm675, %v2393, %v2392
    %v2395 = vsel %vm403, %v2394, 0
    %2397 = vmatprep.subr.mxu0 0.0
    %2398 = vmatpush1.msra.mxu0 0.0
    %2399 = vmatprep.subr.mxu0 0.0
    %2400 = vmatpush1.msra.mxu0 0.0
    %2401 = vmatprep.subr.mxu0 0.0
    %2402 = vmatpush1.msra.mxu0 0.0
    %2403 = vmatprep.subr.mxu0 0.0
    %2404 = vmatpush1.msra.mxu0 0.0
    %2405 = vmatprep.subr.mxu0 0.0
    %2406 = vmatpush1.msra.mxu0 0.0
    %2407 = vmatprep.subr.mxu0 0.0
    %2408 = vmatpush1.msra.mxu0 0.0
    %2409 = vmatprep.subr.mxu0 0.0
    %2410 = vmatpush1.msra.mxu0 0.0
    %2411 = vmatprep.subr.mxu0 0.0
    %2412 = vmatpush1.msra.mxu0 0.0
    %2413 = vmatprep.subr.mxu0 0.0
    %2414 = vmatpush1.msra.mxu0 0.0
    %2415 = vmatprep.subr.mxu0 0.0
    %2416 = vmatpush1.msra.mxu0 0.0
    %2417 = vmatprep.subr.mxu0 0.0
    %2418 = vmatpush1.msra.mxu0 0.0
    %2419 = vmatprep.subr.mxu0 0.0
    %2420 = vmatpush1.msra.mxu0 0.0
    %2421 = vmatprep.subr.mxu0 0.0
    %2422 = vmatpush1.msra.mxu0 %v387
    %2423 = vmatprep.subr.mxu0 0.0
    %2424 = vmatpush1.msra.mxu0 %v386
    %2425 = vmatprep.subr.mxu0 0.0
    %2426 = vmatpush1.msra.mxu0 %v385
    %2427 = vmatprep.subr.mxu0 0.0
    %2428 = vmatpush1.msra.mxu0 %v384
    %2429 = vmatprep.subr.mxu0 0.0
    %2430 = vmatpush2.msra.mxu0 0.0
    %2431 = vmatprep.subr.mxu0 0.0
    %2432 = vmatpush2.msra.mxu0 0.0
    %2433 = vmatprep.subr.mxu0 0.0
    %2434 = vmatpush2.msra.mxu0 0.0
    %2435 = vmatprep.subr.mxu0 0.0
    %2436 = vmatpush2.msra.mxu0 0.0
    %2437 = vmatprep.subr.mxu0 0.0
    %2438 = vmatpush2.msra.mxu0 0.0
    %2439 = vmatprep.subr.mxu0 0.0
    %2440 = vmatpush2.msra.mxu0 0.0
    %2441 = vmatprep.subr.mxu0 0.0
    %2442 = vmatpush2.msra.mxu0 0.0
    %2443 = vmatprep.subr.mxu0 0.0
    %2444 = vmatpush2.msra.mxu0 0.0
    %2445 = vmatprep.subr.mxu0 0.0
    %2446 = vmatpush2.msra.mxu0 0.0
    %2447 = vmatprep.subr.mxu0 0.0
    %2448 = vmatpush2.msra.mxu0 0.0
    %2449 = vmatprep.subr.mxu0 0.0
    %2450 = vmatpush2.msra.mxu0 0.0
    %2451 = vmatprep.subr.mxu0 0.0
    %2452 = vmatpush2.msra.mxu0 0.0
    %2453 = vmatprep.subr.mxu0 0.0
    %2454 = vmatpush2.msra.mxu0 0.0
    %2455 = vmatprep.subr.mxu0 0.0
    %2456 = vmatpush2.msra.mxu0 0.0
    %2457 = vmatprep.subr.mxu0 0.0
    %2458 = vmatpush2.msra.mxu0 0.0
    %2459 = vmatprep.subr.mxu0 0.0
    %2460 = vmatpush2.msra.mxu0 0.0
    %2461 = vmatprep.mubr.f32.mxu0 0.0
    %2462 = vmatmul.mubr.f32.gmra.mxu0 %v2395
    %v2463 = vpop.f32.mrf.mxu0
    %v2464 = vadd.f32 0.0, %v2463
    %v2465 = vpop.f32.mrf.mxu0
    %2466 = vdwg.mxu0
    %2467 = vmatprep.subr.mxu0 0.0
    %2468 = vmatpush1.msra.mxu0 0.0
    %2469 = vmatprep.subr.mxu0 0.0
    %2470 = vmatpush1.msra.mxu0 0.0
    %2471 = vmatprep.subr.mxu0 0.0
    %2472 = vmatpush1.msra.mxu0 0.0
    %2473 = vmatprep.subr.mxu0 0.0
    %2474 = vmatpush1.msra.mxu0 0.0
    %2475 = vmatprep.subr.mxu0 0.0
    %2476 = vmatpush1.msra.mxu0 0.0
    %2477 = vmatprep.subr.mxu0 0.0
    %2478 = vmatpush1.msra.mxu0 0.0
    %2479 = vmatprep.subr.mxu0 0.0
    %2480 = vmatpush1.msra.mxu0 0.0
    %2481 = vmatprep.subr.mxu0 0.0
    %2482 = vmatpush1.msra.mxu0 0.0
    %2483 = vmatprep.subr.mxu0 0.0
    %2484 = vmatpush1.msra.mxu0 0.0
    %2485 = vmatprep.subr.mxu0 0.0
    %2486 = vmatpush1.msra.mxu0 0.0
    %2487 = vmatprep.subr.mxu0 0.0
    %2488 = vmatpush1.msra.mxu0 0.0
    %2489 = vmatprep.subr.mxu0 0.0
    %2490 = vmatpush1.msra.mxu0 0.0
    %2491 = vmatprep.subr.mxu0 0.0
    %2492 = vmatpush1.msra.mxu0 %v391
    %2493 = vmatprep.subr.mxu0 0.0
    %2494 = vmatpush1.msra.mxu0 %v390
    %2495 = vmatprep.subr.mxu0 0.0
    %2496 = vmatpush1.msra.mxu0 %v389
    %2497 = vmatprep.subr.mxu0 0.0
    %2498 = vmatpush1.msra.mxu0 %v388
    %2499 = vmatprep.subr.mxu0 0.0
    %2500 = vmatpush2.msra.mxu0 0.0
    %2501 = vmatprep.subr.mxu0 0.0
    %2502 = vmatpush2.msra.mxu0 0.0
    %2503 = vmatprep.subr.mxu0 0.0
    %2504 = vmatpush2.msra.mxu0 0.0
    %2505 = vmatprep.subr.mxu0 0.0
    %2506 = vmatpush2.msra.mxu0 0.0
    %2507 = vmatprep.subr.mxu0 0.0
    %2508 = vmatpush2.msra.mxu0 0.0
    %2509 = vmatprep.subr.mxu0 0.0
    %2510 = vmatpush2.msra.mxu0 0.0
    %2511 = vmatprep.subr.mxu0 0.0
    %2512 = vmatpush2.msra.mxu0 0.0
    %2513 = vmatprep.subr.mxu0 0.0
    %2514 = vmatpush2.msra.mxu0 0.0
    %2515 = vmatprep.subr.mxu0 0.0
    %2516 = vmatpush2.msra.mxu0 0.0
    %2517 = vmatprep.subr.mxu0 0.0
    %2518 = vmatpush2.msra.mxu0 0.0
    %2519 = vmatprep.subr.mxu0 0.0
    %2520 = vmatpush2.msra.mxu0 0.0
    %2521 = vmatprep.subr.mxu0 0.0
    %2522 = vmatpush2.msra.mxu0 0.0
    %2523 = vmatprep.subr.mxu0 0.0
    %2524 = vmatpush2.msra.mxu0 0.0
    %2525 = vmatprep.subr.mxu0 0.0
    %2526 = vmatpush2.msra.mxu0 0.0
    %2527 = vmatprep.subr.mxu0 0.0
    %2528 = vmatpush2.msra.mxu0 0.0
    %2529 = vmatprep.subr.mxu0 0.0
    %2530 = vmatpush2.msra.mxu0 0.0
    %2531 = vmatprep.mubr.f32.mxu0 0.0
    %2532 = vmatmul.mubr.f32.gmra.mxu0 %v2395
    %v2533 = vpop.f32.mrf.mxu0
    %v2534 = vadd.f32 0.0, %v2533
    %v2535 = vpop.f32.mrf.mxu0
    %2536 = vdwg.mxu0
    %2537 = vmatprep.subr.mxu0 0.0
    %2538 = vmatpush1.msra.mxu0 0.0
    %2539 = vmatprep.subr.mxu0 0.0
    %2540 = vmatpush1.msra.mxu0 0.0
    %2541 = vmatprep.subr.mxu0 0.0
    %2542 = vmatpush1.msra.mxu0 0.0
    %2543 = vmatprep.subr.mxu0 0.0
    %2544 = vmatpush1.msra.mxu0 0.0
    %2545 = vmatprep.subr.mxu0 0.0
    %2546 = vmatpush1.msra.mxu0 0.0
    %2547 = vmatprep.subr.mxu0 0.0
    %2548 = vmatpush1.msra.mxu0 0.0
    %2549 = vmatprep.subr.mxu0 0.0
    %2550 = vmatpush1.msra.mxu0 0.0
    %2551 = vmatprep.subr.mxu0 0.0
    %2552 = vmatpush1.msra.mxu0 0.0
    %2553 = vmatprep.subr.mxu0 0.0
    %2554 = vmatpush1.msra.mxu0 0.0
    %2555 = vmatprep.subr.mxu0 0.0
    %2556 = vmatpush1.msra.mxu0 0.0
    %2557 = vmatprep.subr.mxu0 0.0
    %2558 = vmatpush1.msra.mxu0 0.0
    %2559 = vmatprep.subr.mxu0 0.0
    %2560 = vmatpush1.msra.mxu0 0.0
    %2561 = vmatprep.subr.mxu0 0.0
    %2562 = vmatpush1.msra.mxu0 %v395
    %2563 = vmatprep.subr.mxu0 0.0
    %2564 = vmatpush1.msra.mxu0 %v394
    %2565 = vmatprep.subr.mxu0 0.0
    %2566 = vmatpush1.msra.mxu0 %v393
    %2567 = vmatprep.subr.mxu0 0.0
    %2568 = vmatpush1.msra.mxu0 %v392
    %2569 = vmatprep.subr.mxu0 0.0
    %2570 = vmatpush2.msra.mxu0 0.0
    %2571 = vmatprep.subr.mxu0 0.0
    %2572 = vmatpush2.msra.mxu0 0.0
    %2573 = vmatprep.subr.mxu0 0.0
    %2574 = vmatpush2.msra.mxu0 0.0
    %2575 = vmatprep.subr.mxu0 0.0
    %2576 = vmatpush2.msra.mxu0 0.0
    %2577 = vmatprep.subr.mxu0 0.0
    %2578 = vmatpush2.msra.mxu0 0.0
    %2579 = vmatprep.subr.mxu0 0.0
    %2580 = vmatpush2.msra.mxu0 0.0
    %2581 = vmatprep.subr.mxu0 0.0
    %2582 = vmatpush2.msra.mxu0 0.0
    %2583 = vmatprep.subr.mxu0 0.0
    %2584 = vmatpush2.msra.mxu0 0.0
    %2585 = vmatprep.subr.mxu0 0.0
    %2586 = vmatpush2.msra.mxu0 0.0
    %2587 = vmatprep.subr.mxu0 0.0
    %2588 = vmatpush2.msra.mxu0 0.0
    %2589 = vmatprep.subr.mxu0 0.0
    %2590 = vmatpush2.msra.mxu0 0.0
    %2591 = vmatprep.subr.mxu0 0.0
    %2592 = vmatpush2.msra.mxu0 0.0
    %2593 = vmatprep.subr.mxu0 0.0
    %2594 = vmatpush2.msra.mxu0 0.0
    %2595 = vmatprep.subr.mxu0 0.0
    %2596 = vmatpush2.msra.mxu0 0.0
    %2597 = vmatprep.subr.mxu0 0.0
    %2598 = vmatpush2.msra.mxu0 0.0
    %2599 = vmatprep.subr.mxu0 0.0
    %2600 = vmatpush2.msra.mxu0 0.0
    %2601 = vmatprep.mubr.f32.mxu0 0.0
    %2602 = vmatmul.mubr.f32.gmra.mxu0 %v2395
    %v2603 = vpop.f32.mrf.mxu0
    %v2604 = vadd.f32 %v401, %v2603
    %v2605 = vpop.f32.mrf.mxu0
    %2606 = vdwg.mxu0
    %v2608 = vrot.slane %v2464, 1
    %v2609 = vrot.slane %v2464, 2
    %v2612 = vadd.f32 %v210, %v2608
    %v2613 = vadd.f32 %v215, %v2609
    %v2614 = vxor.u32 %v2612, 2147483648
    %v2615 = vxor.u32 %v2613, 2147483648
    %v2616 = vmul.f32 %v2614, 1.442695
    %v2617 = vpow.pop %v2616
    %v2618 = vmul.f32 %v2615, 1.442695
    %v2619 = vpow.pop %v2618
    %v2620 = vadd.f32 %v2617, 1.0
    %v2621 = vadd.f32 %v2619, 1.0
    %v2622 = vrcp.pop %v2620
    %v2623 = vmul.f32 1.0, %v2622
    %v2624 = vrcp.pop %v2621
    %v2625 = vmul.f32 1.0, %v2624
    %v2627 = vrot.slane %v2534, 1
    %v2628 = vrot.slane %v2534, 2
    %v2631 = vadd.f32 %v293, %v2627
    %v2632 = vadd.f32 %v298, %v2628
    %v2633 = vxor.u32 %v2631, 2147483648
    %v2634 = vxor.u32 %v2632, 2147483648
    %v2635 = vmul.f32 %v2633, 1.442695
    %v2636 = vpow.pop %v2635
    %v2637 = vmul.f32 %v2634, 1.442695
    %v2638 = vpow.pop %v2637
    %v2639 = vadd.f32 %v2636, 1.0
    %v2640 = vadd.f32 %v2638, 1.0
    %v2641 = vrcp.pop %v2639
    %v2642 = vmul.f32 1.0, %v2641
    %v2643 = vrcp.pop %v2640
    %v2644 = vmul.f32 1.0, %v2643
    %v2646 = vrot.slane %v2604, 1
    %v2647 = vrot.slane %v2604, 2
    %v2650 = vmul.f32 %v2623, %v2646
    %v2651 = vmul.f32 %v2625, %v2647
    %v2652 = vadd.f32 %v376, %v2650
    %v2653 = vadd.f32 %v381, %v2651
    %v2654 = vtanh.pop %v2652
    %v2655 = vtanh.pop %v2653
    %v2658 = vrot.slane %v2654, 1
    %v2659 = vrot.slane %v2655, 1
    %v2662 = vsub.f32 %v2385, %v2658
    %v2663 = vsub.f32 %v2386, %v2659
    %v2666 = vrot.slane %v2662, 7
    %v2667 = vrot.slane %v2663, 7
    %v2670 = vmul.f32 %v2642, %v2666
    %v2671 = vmul.f32 %v2644, %v2667
    %v2672 = vadd.f32 %v2654, %v2670
    %v2673 = vadd.f32 %v2655, %v2671
    %vm2674 = vcmask 261127
    %2675 = vst.msk [vmem:[#allocation2] sm:$0x80] %vm2674, %v2672
    %2676 = vst.msk [vmem:[#allocation2 + $0x8] sm:$0x80] %vm2674, %v2673
    %v2677 = vld [vmem:[#allocation2] sm:$0xff]
    %v2678 = vld [vmem:[#allocation2 + $0x8] sm:$0xff]
    %v2679 = vld [vmem:[%s11] sm:$0xff]
    %v2680 = vld [vmem:[%s11 + $0x8] sm:$0xff]
    %v2681 = vld [vmem:[%s11 + $0x10] sm:$0xff]
    %v2682 = vld [vmem:[%s11 + $0x18] sm:$0xff]
    %v2683 = vld [vmem:[%s12] sm:$0x1]
    %v2685 = vlaneseq
    %v2686 = vshrl.u32 %v2685, 7
    %v2687 = vsub.s32 0, %v2686
    %v2688 = vrot.slane %v2683, %v2687
    %v2691 = vsel %vm403, %v2677, 0
    %v2694 = vsel %vm403, %v2678, 0
    %2696 = vmatprep.subr.mxu0 0.0
    %2697 = vmatpush1.msra.mxu0 0.0
    %2698 = vmatprep.subr.mxu0 0.0
    %2699 = vmatpush1.msra.mxu0 0.0
    %2700 = vmatprep.subr.mxu0 0.0
    %2701 = vmatpush1.msra.mxu0 0.0
    %2702 = vmatprep.subr.mxu0 0.0
    %2703 = vmatpush1.msra.mxu0 0.0
    %2704 = vmatprep.subr.mxu0 0.0
    %2705 = vmatpush1.msra.mxu0 0.0
    %2706 = vmatprep.subr.mxu0 0.0
    %2707 = vmatpush1.msra.mxu0 0.0
    %2708 = vmatprep.subr.mxu0 0.0
    %2709 = vmatpush1.msra.mxu0 0.0
    %2710 = vmatprep.subr.mxu0 0.0
    %2711 = vmatpush1.msra.mxu0 0.0
    %2712 = vmatprep.subr.mxu0 0.0
    %2713 = vmatpush1.msra.mxu0 0.0
    %2714 = vmatprep.subr.mxu0 0.0
    %2715 = vmatpush1.msra.mxu0 0.0
    %2716 = vmatprep.subr.mxu0 0.0
    %2717 = vmatpush1.msra.mxu0 0.0
    %2718 = vmatprep.subr.mxu0 0.0
    %2719 = vmatpush1.msra.mxu0 0.0
    %2720 = vmatprep.subr.mxu0 0.0
    %2721 = vmatpush1.msra.mxu0 %v2682
    %2722 = vmatprep.subr.mxu0 0.0
    %2723 = vmatpush1.msra.mxu0 %v2681
    %2724 = vmatprep.subr.mxu0 0.0
    %2725 = vmatpush1.msra.mxu0 %v2680
    %2726 = vmatprep.subr.mxu0 0.0
    %2727 = vmatpush1.msra.mxu0 %v2679
    %2728 = vmatprep.subr.mxu0 0.0
    %2729 = vmatpush2.msra.mxu0 0.0
    %2730 = vmatprep.subr.mxu0 0.0
    %2731 = vmatpush2.msra.mxu0 0.0
    %2732 = vmatprep.subr.mxu0 0.0
    %2733 = vmatpush2.msra.mxu0 0.0
    %2734 = vmatprep.subr.mxu0 0.0
    %2735 = vmatpush2.msra.mxu0 0.0
    %2736 = vmatprep.subr.mxu0 0.0
    %2737 = vmatpush2.msra.mxu0 0.0
    %2738 = vmatprep.subr.mxu0 0.0
    %2739 = vmatpush2.msra.mxu0 0.0
    %2740 = vmatprep.subr.mxu0 0.0
    %2741 = vmatpush2.msra.mxu0 0.0
    %2742 = vmatprep.subr.mxu0 0.0
    %2743 = vmatpush2.msra.mxu0 0.0
    %2744 = vmatprep.subr.mxu0 0.0
    %2745 = vmatpush2.msra.mxu0 0.0
    %2746 = vmatprep.subr.mxu0 0.0
    %2747 = vmatpush2.msra.mxu0 0.0
    %2748 = vmatprep.subr.mxu0 0.0
    %2749 = vmatpush2.msra.mxu0 0.0
    %2750 = vmatprep.subr.mxu0 0.0
    %2751 = vmatpush2.msra.mxu0 0.0
    %2752 = vmatprep.subr.mxu0 0.0
    %2753 = vmatpush2.msra.mxu0 0.0
    %2754 = vmatprep.subr.mxu0 0.0
    %2755 = vmatpush2.msra.mxu0 0.0
    %2756 = vmatprep.subr.mxu0 0.0
    %2757 = vmatpush2.msra.mxu0 0.0
    %2758 = vmatprep.subr.mxu0 0.0
    %2759 = vmatpush2.msra.mxu0 0.0
    %2760 = vmatprep.mubr.f32.mxu0 0.0
    %2761 = vmatmul.mubr.f32.gmra.mxu0 %v2691
    %v2762 = vpop.f32.mrf.mxu0
    %v2763 = vadd.f32 %v2688, %v2762
    %v2764 = vpop.f32.mrf.mxu0
    %2765 = vmatprep.mubr.f32.mxu0 0.0
    %2766 = vmatmul.mubr.f32.gmra.mxu0 %v2694
    %v2767 = vpop.f32.mrf.mxu0
    %v2768 = vadd.f32 %v2688, %v2767
    %v2769 = vpop.f32.mrf.mxu0
    %2770 = vdwg.mxu0
    %v2771 = vmax.f32 %v2763, 0.0
    %v2772 = vmax.f32 %v2768, 0.0
    %v2773 = vld [vmem:[%s13] sm:$0xff]
    %v2774 = vld [vmem:[%s13 + $0x8] sm:$0xff]
    %v2775 = vld [vmem:[#allocation3] sm:$0x1]
    %v2777 = vlaneseq
    %v2778 = vshrl.u32 %v2777, 7
    %v2779 = vsub.s32 0, %v2778
    %v2780 = vrot.slane %v2775, %v2779
    %vm2782 = vcmask 130048
    %v2784 = vsel %vm2782, %v2771, 0
    %v2787 = vsel %vm2782, %v2772, 0
    %2789 = vmatprep.subr.mxu0 0.0
    %2790 = vmatpush1.msra.mxu0 0.0
    %2791 = vmatprep.subr.mxu0 0.0
    %2792 = vmatpush1.msra.mxu0 0.0
    %2793 = vmatprep.subr.mxu0 0.0
    %2794 = vmatpush1.msra.mxu0 0.0
    %2795 = vmatprep.subr.mxu0 0.0
    %2796 = vmatpush1.msra.mxu0 0.0
    %2797 = vmatprep.subr.mxu0 0.0
    %2798 = vmatpush1.msra.mxu0 0.0
    %2799 = vmatprep.subr.mxu0 0.0
    %2800 = vmatpush1.msra.mxu0 0.0
    %2801 = vmatprep.subr.mxu0 0.0
    %2802 = vmatpush1.msra.mxu0 0.0
    %2803 = vmatprep.subr.mxu0 0.0
    %2804 = vmatpush1.msra.mxu0 0.0
    %2805 = vmatprep.subr.mxu0 0.0
    %2806 = vmatpush1.msra.mxu0 0.0
    %2807 = vmatprep.subr.mxu0 0.0
    %2808 = vmatpush1.msra.mxu0 0.0
    %2809 = vmatprep.subr.mxu0 0.0
    %2810 = vmatpush1.msra.mxu0 0.0
    %2811 = vmatprep.subr.mxu0 0.0
    %2812 = vmatpush1.msra.mxu0 0.0
    %2813 = vmatprep.subr.mxu0 0.0
    %2814 = vmatpush1.msra.mxu0 0.0
    %2815 = vmatprep.subr.mxu0 0.0
    %2816 = vmatpush1.msra.mxu0 0.0
    %2817 = vmatprep.subr.mxu0 0.0
    %2818 = vmatpush1.msra.mxu0 %v2774
    %2819 = vmatprep.subr.mxu0 0.0
    %2820 = vmatpush1.msra.mxu0 %v2773
    %2821 = vmatprep.subr.mxu0 0.0
    %2822 = vmatpush2.msra.mxu0 0.0
    %2823 = vmatprep.subr.mxu0 0.0
    %2824 = vmatpush2.msra.mxu0 0.0
    %2825 = vmatprep.subr.mxu0 0.0
    %2826 = vmatpush2.msra.mxu0 0.0
    %2827 = vmatprep.subr.mxu0 0.0
    %2828 = vmatpush2.msra.mxu0 0.0
    %2829 = vmatprep.subr.mxu0 0.0
    %2830 = vmatpush2.msra.mxu0 0.0
    %2831 = vmatprep.subr.mxu0 0.0
    %2832 = vmatpush2.msra.mxu0 0.0
    %2833 = vmatprep.subr.mxu0 0.0
    %2834 = vmatpush2.msra.mxu0 0.0
    %2835 = vmatprep.subr.mxu0 0.0
    %2836 = vmatpush2.msra.mxu0 0.0
    %2837 = vmatprep.subr.mxu0 0.0
    %2838 = vmatpush2.msra.mxu0 0.0
    %2839 = vmatprep.subr.mxu0 0.0
    %2840 = vmatpush2.msra.mxu0 0.0
    %2841 = vmatprep.subr.mxu0 0.0
    %2842 = vmatpush2.msra.mxu0 0.0
    %2843 = vmatprep.subr.mxu0 0.0
    %2844 = vmatpush2.msra.mxu0 0.0
    %2845 = vmatprep.subr.mxu0 0.0
    %2846 = vmatpush2.msra.mxu0 0.0
    %2847 = vmatprep.subr.mxu0 0.0
    %2848 = vmatpush2.msra.mxu0 0.0
    %2849 = vmatprep.subr.mxu0 0.0
    %2850 = vmatpush2.msra.mxu0 0.0
    %2851 = vmatprep.subr.mxu0 0.0
    %2852 = vmatpush2.msra.mxu0 0.0
    %2853 = vmatprep.mubr.f32.mxu0 0.0
    %2854 = vmatmul.mubr.f32.gmra.mxu0 %v2784
    %v2855 = vpop.f32.mrf.mxu0
    %v2856 = vadd.f32 %v2780, %v2855
    %v2857 = vpop.f32.mrf.mxu0
    %2858 = vmatprep.mubr.f32.mxu0 0.0
    %2859 = vmatmul.mubr.f32.gmra.mxu0 %v2787
    %v2860 = vpop.f32.mrf.mxu0
    %v2861 = vadd.f32 %v2780, %v2860
    %v2862 = vpop.f32.mrf.mxu0
    %2863 = vdwg.mxu0
    %v2864 = vtanh.pop %v2856
    %v2865 = vtanh.pop %v2861
    %vm2866 = vcmask 7168
    %2867 = vst.msk [vmem:[%s15] sm:$0xff] %vm2866, %v2864
    %2868 = vst.msk [vmem:[%s15 + $0x8] sm:$0xff] %vm2866, %v2865
    // Predicated region
    $region86: #{tpu_custom_call.1} parent=1 // pred_check
      _
    $region87: #{tpu_custom_call.1} parent=1 // pred_check_branch
      %2870 = sbr.rel (0) target = $region89
    $region88: #{tpu_custom_call.1} parent=1 // pred_region
      _
    $region89: #{tpu_custom_call.1} parent=1 // pred_fallthru
      _
    // Predicated region
    $region90: #{tpu_custom_call.1} parent=1 // pred_check
      _
    $region91: #{tpu_custom_call.1} parent=1 // pred_check_branch
      %2872 = sbr.rel (0) target = $region93
    $region92: #{tpu_custom_call.1} parent=1 // pred_region
      _
    $region93: #{tpu_custom_call.1} parent=1 // pred_fallthru
      _
    %2873 = vsyncpa [#allocation5], 1
    %2874 = vsyncpa [#allocation7], 1
    %2875 = vsyncpa [#allocation10], 1
    %2876 = vsyncpa [#allocation13], 1

</llo_original>
